<compile_context>
chip_gen: v5e
topology: v5e:2x2
jax: 0.10.0
libtpu: 0.0.40
codegen_flags: <defaults>
</compile_context>

<pallas_src>
import functools

import numpy as np
import jax
import jax.numpy as jnp
from jax import lax
from jax.experimental import pallas as pl
from jax.experimental.pallas import tpu as pltpu


_ROW_TILE = 128  # output rows per grid step (MXU M dim on v5e; >=128 everywhere)


def _fspecial_gauss_1d(size, sigma):
    """Deterministic 1-D Gaussian window (same as the PyTorch helper)."""
    coords = np.arange(size, dtype=np.float64)
    coords -= size // 2
    g = np.exp(-(coords ** 2) / (2.0 * sigma ** 2))
    g /= g.sum()
    return tuple(float(v) for v in g)


def _round_up(x, m):
    return (x + m - 1) // m * m


def _pad_tile_bytes(rows, cols):
    return _round_up(rows, 8) * _round_up(cols, 128) * 4


def _vmem_capacity_bytes():
    """Chip VMEM capacity (v5e/v6e: 128 MiB, v7x: 64 MiB); safe fallback."""
    try:
        cap = getattr(pltpu.get_tpu_info(), "vmem_capacity_bytes", None)
        if cap:
            return int(cap)
    except Exception:
        pass
    return 64 << 20


def _geometry(H, W, ws):
    oH = H - ws + 1
    oW = W - ws + 1
    TH = min(_ROW_TILE, oH)             # output rows per tile
    T = -(-oH // TH)                    # number of row tiles
    R_in = TH + ws - 1                  # input rows needed per tile
    oW_pad = _round_up(oW, 128)         # lane-dense output width
    W_pad = oW_pad + ws - 1             # input width needed for padded taps
    H_pad = T * TH + ws - 1             # input height so last tile stays in bounds
    return oH, oW, TH, T, R_in, oW_pad, W_pad, H_pad


@functools.lru_cache(maxsize=None)
def _make_ssim_call(N, C, H, W, win, C1, C2, center):
    """Build a pallas_call computing per-(n, c) mean SSIM for centered inputs."""
    ws = len(win)
    oH, oW, TH, T, R_in, oW_pad, W_pad, H_pad = _geometry(H, W, ws)
    exact_rows = (oH % TH) == 0
    need_col_mask = oW_pad != oW
    last_rows = oH - (T - 1) * TH
    inv_count = 1.0 / float(oH * oW)

    def kernel(x_ref, y_ref, bh_ref, out_ref,
               prod_ref, accw_ref, g1_ref, g2_ref, g3_ref, g4_ref):
        t = pl.program_id(2)
        if T == 1:
            rows = pl.ds(0, R_in)
        else:
            # TH == _ROW_TILE (multiple of 8) whenever T > 1.
            rows = pl.ds(pl.multiple_of(t * TH, 8), R_in)

        @pl.when(t == 0)
        def _():
            out_ref[...] = jnp.zeros((1, 128), jnp.float32)

        bh = bh_ref[...]  # (TH, R_in) banded Gaussian for the H (sublane) pass

        def w_taps(src_ref, row_slice):
            # Fused W-direction (lane) Gaussian: single expression, caller does
            # exactly one lane-dense store of the result.
            acc = win[0] * src_ref[row_slice, pl.ds(0, oW_pad)]
            for k in range(1, ws):
                acc = acc + win[k] * src_ref[row_slice, pl.ds(k, oW_pad)]
            return acc

        def h_pass(wvals):
            # H-direction Gaussian as a banded matmul on the MXU, f32 accumulate.
            return jnp.dot(bh, wvals, preferred_element_type=jnp.float32)

        # g1 = G(xc), g2 = G(yc)   (xc, yc are centered by `center` in the wrapper)
        accw_ref[...] = w_taps(x_ref, rows)
        g1_ref[...] = h_pass(accw_ref[...])
        accw_ref[...] = w_taps(y_ref, rows)
        g2_ref[...] = h_pass(accw_ref[...])
        # g3 = G(xc*xc) + G(yc*yc), g4 = G(xc*yc); products staged once in VMEM.
        xs = x_ref[rows, :]
        prod_ref[...] = xs * xs
        accw_ref[...] = w_taps(prod_ref, pl.ds(0, R_in))
        g3_ref[...] = h_pass(accw_ref[...])
        ys = y_ref[rows, :]
        prod_ref[...] = ys * ys
        accw_ref[...] = w_taps(prod_ref, pl.ds(0, R_in))
        g3_ref[...] = g3_ref[...] + h_pass(accw_ref[...])
        prod_ref[...] = x_ref[rows, :] * y_ref[rows, :]
        accw_ref[...] = w_taps(prod_ref, pl.ds(0, R_in))
        g4_ref[...] = h_pass(accw_ref[...])

        g1 = g1_ref[...]
        g2 = g2_ref[...]
        mu1 = g1 + center
        mu2 = g2 + center
        mu1_sq = mu1 * mu1
        mu2_sq = mu2 * mu2
        mu1_mu2 = mu1 * mu2
        # Var / Cov are shift invariant: use the centered moments directly so
        # E[x^2] - mu^2 never suffers catastrophic cancellation.
        sigma_sum = g3_ref[...] - g1 * g1 - g2 * g2     # sigma1_sq + sigma2_sq
        sigma12 = g4_ref[...] - g1 * g2

        def recip(d):
            r = pl.reciprocal(d, approx=True)
            return r * (2.0 - d * r)                    # one Newton step

        cs_map = (2.0 * sigma12 + C2) * recip(sigma_sum + C2)
        lum = (2.0 * mu1_mu2 + C1) * recip(mu1_sq + mu2_sq + C1)
        ssim_map = lum * cs_map

        col_ok = None
        if need_col_mask:
            col_ok = lax.broadcasted_iota(jnp.int32, (TH, oW_pad), 1) < oW

        def tile_sum(row_ok):
            mask = row_ok
            if col_ok is not None:
                mask = col_ok if mask is None else (mask & col_ok)
            if mask is None:
                return jnp.sum(ssim_map)
            return jnp.sum(jnp.where(mask, ssim_map, 0.0))

        if exact_rows:
            out_ref[...] += tile_sum(None)
        else:
            # Row mask only needed on the final, partially padded tile.
            @pl.when(t < T - 1)
            def _():
                out_ref[...] += tile_sum(None)

            @pl.when(t == T - 1)
            def _():
                row_ok = lax.broadcasted_iota(jnp.int32, (TH, oW_pad), 0) < last_rows
                out_ref[...] += tile_sum(row_ok)

        @pl.when(t == T - 1)
        def _():
            out_ref[...] *= inv_count

    in_spec = pl.BlockSpec((pl.Squeezed(), pl.Squeezed(), H_pad, W_pad),
                           lambda n, c, t: (n, c, 0, 0))
    bh_spec = pl.BlockSpec((TH, R_in), lambda n, c, t: (0, 0))
    out_spec = pl.BlockSpec((pl.Squeezed(), pl.Squeezed(), 1, 128),
                            lambda n, c, t: (n, c, 0, 0))

    scratch = [
        pltpu.VMEM((R_in, W_pad), jnp.float32),    # staged product (x*x / y*y / x*y)
        pltpu.VMEM((R_in, oW_pad), jnp.float32),   # W-pass intermediate (matmul RHS)
        pltpu.VMEM((TH, oW_pad), jnp.float32),     # G(xc)
        pltpu.VMEM((TH, oW_pad), jnp.float32),     # G(yc)
        pltpu.VMEM((TH, oW_pad), jnp.float32),     # G(xc^2) + G(yc^2)
        pltpu.VMEM((TH, oW_pad), jnp.float32),     # G(xc*yc)
    ]

    need = (2 * 2 * _pad_tile_bytes(H_pad, W_pad)      # x, y double-buffered planes
            + 2 * _pad_tile_bytes(TH, R_in)            # band matrix double-buffered
            + _pad_tile_bytes(R_in, W_pad)
            + _pad_tile_bytes(R_in, oW_pad)
            + 4 * _pad_tile_bytes(TH, oW_pad)
            + 2 * _pad_tile_bytes(1, 128)
            + (4 << 20))                               # compiler headroom
    cap = _vmem_capacity_bytes()
    # TODO(synk): planes that do not fit VMEM need the pl.ANY halo-slab DMA path.
    vmem_limit = int(max(32 << 20, min(need, int(cap * 0.9))))

    return pl.pallas_call(
        kernel,
        out_shape=jax.ShapeDtypeStruct((N, C, 1, 128), jnp.float32),
        grid_spec=pltpu.PrefetchScalarGridSpec(
            num_scalar_prefetch=0,
            grid=(N, C, T),
            in_specs=[in_spec, in_spec, bh_spec],
            out_specs=out_spec,
            scratch_shapes=scratch),
        compiler_params=pltpu.CompilerParams(
            dimension_semantics=("parallel", "parallel", "arbitrary"),
            vmem_limit_bytes=vmem_limit),
    )


def ssim_pallas(X, Y, data_range=255.0, size_average=True, win_size=11,
                win_sigma=1.5, K=(0.01, 0.03), nonnegative_ssim=False):
    if X.shape != Y.shape:
        raise ValueError("Input images should have the same dimensions.")
    # mirror the torch loop that squeezes trailing singleton dims (d >= 2)
    for d in range(X.ndim - 1, 1, -1):
        if d < X.ndim and X.shape[d] == 1:
            X = jnp.squeeze(X, axis=d)
            Y = jnp.squeeze(Y, axis=d)
    if X.ndim != 4:
        # TODO(synk): 5-D (conv3d) spatial path not implemented
        raise ValueError("Expected 4-D (N, C, H, W) inputs, got %s" % (X.shape,))
    if win_size % 2 != 1:
        raise ValueError("Window size should be odd.")

    N, C, H, W = X.shape
    # TODO(synk): "skip Gaussian smoothing if dim < win_size" branch not implemented
    assert H >= win_size and W >= win_size

    win = _fspecial_gauss_1d(win_size, win_sigma)
    K1, K2 = K
    C1 = float((K1 * data_range) ** 2)
    C2 = float((K2 * data_range) ** 2)
    center = 0.5 * float(data_range)

    oH, oW, TH, T, R_in, oW_pad, W_pad, H_pad = _geometry(H, W, win_size)

    Xc = X.astype(jnp.float32) - center
    Yc = Y.astype(jnp.float32) - center
    pad_h = H_pad - H
    pad_w = W_pad - W
    if pad_h or pad_w:
        pads = ((0, 0), (0, 0), (0, pad_h), (0, pad_w))
        Xc = jnp.pad(Xc, pads)
        Yc = jnp.pad(Yc, pads)

    # Banded H-direction Gaussian for the MXU matmul: Bh[i, i + k] = win[k].
    bh_np = np.zeros((TH, R_in), np.float32)
    wrow = np.asarray(win, np.float32)
    for i in range(TH):
        bh_np[i, i:i + win_size] = wrow
    Bh = jnp.asarray(bh_np)

    call = _make_ssim_call(N, C, H, W, win, C1, C2, center)
    out_t = call(Xc, Yc, Bh)
    ssim_per_channel = out_t[:, :, 0, 0]                 # (N, C)

    if nonnegative_ssim:
        ssim_per_channel = jax.nn.relu(ssim_per_channel)
    if size_average:
        return ssim_per_channel.mean()
    return ssim_per_channel.mean(axis=1)


class SSIM:
    """Pallas equivalent of the PyTorch SSIM module (2-D images, no mask)."""

    def __init__(self, data_range=255.0, size_average=True, win_size=11,
                 win_sigma=1.5, channel=3, spatial_dims=2, K=(0.01, 0.03),
                 nonnegative_ssim=False):
        assert spatial_dims == 2  # TODO(synk): 3-D (conv3d) path not implemented
        self.data_range = data_range
        self.size_average = size_average
        self.win_size = win_size
        self.win_sigma = win_sigma
        self.channel = channel
        self.K = K
        self.nonnegative_ssim = nonnegative_ssim

    def __call__(self, X, Y, mask=None):
        # TODO(synk): mask path (torch.masked_select mean) not implemented
        assert mask is None
        return ssim_pallas(X, Y, data_range=self.data_range,
                           size_average=self.size_average,
                           win_size=self.win_size, win_sigma=self.win_sigma,
                           K=self.K, nonnegative_ssim=self.nonnegative_ssim)


def _reference_ssim_per_channel(X, Y, data_range, win_size, win_sigma, K):
    """Pure-JAX (lax.conv, HIGHEST precision) reference for sanity checking."""
    win = jnp.asarray(_fspecial_gauss_1d(win_size, win_sigma), jnp.float32)
    C = X.shape[1]
    K1, K2 = K
    C1 = (K1 * data_range) ** 2
    C2 = (K2 * data_range) ** 2
    prec = jax.lax.Precision.HIGHEST

    def gfilter(img):
        w_col = jnp.tile(win.reshape(1, 1, win_size, 1), (C, 1, 1, 1))
        w_row = jnp.tile(win.reshape(1, 1, 1, win_size), (C, 1, 1, 1))
        out = jax.lax.conv_general_dilated(
            img, w_col, window_strides=(1, 1), padding="VALID",
            dimension_numbers=("NCHW", "OIHW", "NCHW"), feature_group_count=C,
            precision=prec)
        out = jax.lax.conv_general_dilated(
            out, w_row, window_strides=(1, 1), padding="VALID",
            dimension_numbers=("NCHW", "OIHW", "NCHW"), feature_group_count=C,
            precision=prec)
        return out

    X = X.astype(jnp.float32)
    Y = Y.astype(jnp.float32)
    mu1 = gfilter(X)
    mu2 = gfilter(Y)
    mu1_sq, mu2_sq, mu1_mu2 = mu1 * mu1, mu2 * mu2, mu1 * mu2
    sigma1_sq = gfilter(X * X) - mu1_sq
    sigma2_sq = gfilter(Y * Y) - mu2_sq
    sigma12 = gfilter(X * Y) - mu1_mu2
    cs_map = (2 * sigma12 + C2) / (sigma1_sq + sigma2_sq + C2)
    ssim_map = (2 * mu1_mu2 + C1) / (mu1_sq + mu2_sq + C1) * cs_map
    return ssim_map.reshape(X.shape[0], C, -1).mean(-1)


if __name__ == "__main__":
    k0, k1, k2, k3 = jax.random.split(jax.random.PRNGKey(0), 4)

    # Case 1: single row tile; exercises lane padding (oW = 22 -> oW_pad = 128).
    N, C, H, W = 2, 3, 32, 32
    X = jax.random.uniform(k0, (N, C, H, W), dtype=jnp.float32)
    Y = jnp.clip(X + 0.1 * jax.random.normal(k1, (N, C, H, W), dtype=jnp.float32),
                 0.0, 1.0)
    model = SSIM(data_range=1.0, size_average=True, win_size=11, win_sigma=1.5,
                 channel=C, spatial_dims=2)
    out = jax.block_until_ready(model(X, Y, None))
    assert out.shape == ()
    assert bool(jnp.isfinite(out))
    ref = float(_reference_ssim_per_channel(X, Y, 1.0, 11, 1.5, (0.01, 0.03)).mean())
    assert abs(float(out) - ref) < 1e-2, (float(out), ref)

    # Case 2: two row tiles (TH = 128) -> exercises the running accumulator
    # (pl.when init/finalize), the last-tile row mask and size_average=False.
    N2, Cc, H2, W2 = 1, 2, 200, 48
    X2 = jax.random.uniform(k2, (N2, Cc, H2, W2), dtype=jnp.float32)
    Y2 = jnp.clip(X2 + 0.05 * jax.random.normal(k3, (N2, Cc, H2, W2),
                                                dtype=jnp.float32), 0.0, 1.0)
    per_image = SSIM(data_range=1.0, size_average=False, win_size=11,
                     win_sigma=1.5, channel=Cc)(X2, Y2, None)
    per_image = jax.block_until_ready(per_image)
    assert per_image.shape == (N2,)
    ref2 = _reference_ssim_per_channel(X2, Y2, 1.0, 11, 1.5, (0.01, 0.03)).mean(axis=1)
    assert jnp.allclose(per_image, ref2, atol=1e-2), (per_image, ref2)

    print("KERNEL_OK")
</pallas_src>

<mosaic_0001>
module attributes {stable_mosaic.version = 11 : i64} {
  func.func @kernel(%arg0: i32, %arg1: i32, %arg2: i32, %arg3: memref<1x1x32x138xf32, #tpu.memory_space<vmem>>, %arg4: memref<1x1x32x138xf32, #tpu.memory_space<vmem>>, %arg5: memref<22x32xf32, #tpu.memory_space<vmem>>, %arg6: memref<1x1x1x128xf32, #tpu.memory_space<vmem>>, %arg7: memref<32x138xf32, #tpu.memory_space<vmem>>, %arg8: memref<32x128xf32, #tpu.memory_space<vmem>>, %arg9: memref<22x128xf32, #tpu.memory_space<vmem>>, %arg10: memref<22x128xf32, #tpu.memory_space<vmem>>, %arg11: memref<22x128xf32, #tpu.memory_space<vmem>>, %arg12: memref<22x128xf32, #tpu.memory_space<vmem>>) attributes {dimension_semantics = [#tpu.dimension_semantics<parallel>, #tpu.dimension_semantics<parallel>, #tpu.dimension_semantics<arbitrary>], iteration_bounds = array<i64: 2, 3, 1>, scalar_prefetch = 0 : i64, scratch_operands = 6 : i64, tpu.core_type = #tpu.core_type<tc>, window_params = [{transform_indices = @transform_0, window_bounds = array<i64: 1, 1, 32, 138>}, {transform_indices = @transform_1, window_bounds = array<i64: 1, 1, 32, 138>}, {pipeline_mode = #tpu.pipeline_mode<synchronous>, transform_indices = @transform_2, window_bounds = array<i64: 22, 32>}, {transform_indices = @transform_3, window_bounds = array<i64: 1, 1, 1, 128>}]} {
    %c0_i32 = arith.constant 0 : i32
    %0 = arith.cmpi eq, %arg2, %c0_i32 : i32
    %1 = arith.extui %0 : i1 to i32
    %c0_i32_0 = arith.constant 0 : i32
    %2 = arith.cmpi ne, %1, %c0_i32_0 : i32
    scf.if %2 {
      %cst_289 = arith.constant 0.000000e+00 : f32
      %339 = vector.broadcast %cst_289 : f32 to vector<1x128xf32>
      %c0_290 = arith.constant 0 : index
      %c0_291 = arith.constant 0 : index
      %c0_292 = arith.constant 0 : index
      %c0_293 = arith.constant 0 : index
      %340 = vector.load %arg6[%c0_290, %c0_291, %c0_292, %c0_293] : memref<1x1x1x128xf32, #tpu.memory_space<vmem>>, vector<1x1x1x128xf32>
      %341 = vector.shape_cast %340 : vector<1x1x1x128xf32> to vector<1x128xf32>
      %342 = vector.shape_cast %339 : vector<1x128xf32> to vector<1x1x1x128xf32>
      tpu.vector_store %arg6[%c0_290, %c0_291, %c0_292, %c0_293], %342 {strides = array<i32>} : memref<1x1x1x128xf32, #tpu.memory_space<vmem>>, vector<1x1x1x128xf32>,
    } else {
    }
    %c0 = arith.constant 0 : index
    %c0_1 = arith.constant 0 : index
    %3 = vector.load %arg5[%c0, %c0_1] : memref<22x32xf32, #tpu.memory_space<vmem>>, vector<22x32xf32>
    %c0_2 = arith.constant 0 : index
    %c0_3 = arith.constant 0 : index
    %c0_4 = arith.constant 0 : index
    %c0_5 = arith.constant 0 : index
    %4 = vector.load %arg3[%c0_2, %c0_3, %c0_4, %c0_5] : memref<1x1x32x138xf32, #tpu.memory_space<vmem>>, vector<1x1x32x128xf32>
    %5 = vector.shape_cast %4 : vector<1x1x32x128xf32> to vector<32x128xf32>
    %cst = arith.constant 0.00102838012 : f32
    %6 = vector.broadcast %cst : f32 to vector<32x128xf32>
    %7 = arith.mulf %6, %5 : vector<32x128xf32>
    %c0_6 = arith.constant 0 : index
    %c0_7 = arith.constant 0 : index
    %c0_8 = arith.constant 0 : index
    %c1 = arith.constant 1 : index
    %8 = vector.load %arg3[%c0_6, %c0_7, %c0_8, %c1] : memref<1x1x32x138xf32, #tpu.memory_space<vmem>>, vector<1x1x32x128xf32>
    %9 = vector.shape_cast %8 : vector<1x1x32x128xf32> to vector<32x128xf32>
    %cst_9 = arith.constant 0.00759875821 : f32
    %10 = vector.broadcast %cst_9 : f32 to vector<32x128xf32>
    %11 = arith.mulf %10, %9 : vector<32x128xf32>
    %12 = arith.addf %7, %11 : vector<32x128xf32>
    %c0_10 = arith.constant 0 : index
    %c0_11 = arith.constant 0 : index
    %c0_12 = arith.constant 0 : index
    %c2 = arith.constant 2 : index
    %13 = vector.load %arg3[%c0_10, %c0_11, %c0_12, %c2] : memref<1x1x32x138xf32, #tpu.memory_space<vmem>>, vector<1x1x32x128xf32>
    %14 = vector.shape_cast %13 : vector<1x1x32x128xf32> to vector<32x128xf32>
    %cst_13 = arith.constant 0.0360007733 : f32
    %15 = vector.broadcast %cst_13 : f32 to vector<32x128xf32>
    %16 = arith.mulf %15, %14 : vector<32x128xf32>
    %17 = arith.addf %12, %16 : vector<32x128xf32>
    %c0_14 = arith.constant 0 : index
    %c0_15 = arith.constant 0 : index
    %c0_16 = arith.constant 0 : index
    %c3 = arith.constant 3 : index
    %18 = vector.load %arg3[%c0_14, %c0_15, %c0_16, %c3] : memref<1x1x32x138xf32, #tpu.memory_space<vmem>>, vector<1x1x32x128xf32>
    %19 = vector.shape_cast %18 : vector<1x1x32x128xf32> to vector<32x128xf32>
    %cst_17 = arith.constant 0.109360687 : f32
    %20 = vector.broadcast %cst_17 : f32 to vector<32x128xf32>
    %21 = arith.mulf %20, %19 : vector<32x128xf32>
    %22 = arith.addf %17, %21 : vector<32x128xf32>
    %c0_18 = arith.constant 0 : index
    %c0_19 = arith.constant 0 : index
    %c0_20 = arith.constant 0 : index
    %c4 = arith.constant 4 : index
    %23 = vector.load %arg3[%c0_18, %c0_19, %c0_20, %c4] : memref<1x1x32x138xf32, #tpu.memory_space<vmem>>, vector<1x1x32x128xf32>
    %24 = vector.shape_cast %23 : vector<1x1x32x128xf32> to vector<32x128xf32>
    %cst_21 = arith.constant 0.213005543 : f32
    %25 = vector.broadcast %cst_21 : f32 to vector<32x128xf32>
    %26 = arith.mulf %25, %24 : vector<32x128xf32>
    %27 = arith.addf %22, %26 : vector<32x128xf32>
    %c0_22 = arith.constant 0 : index
    %c0_23 = arith.constant 0 : index
    %c0_24 = arith.constant 0 : index
    %c5 = arith.constant 5 : index
    %28 = vector.load %arg3[%c0_22, %c0_23, %c0_24, %c5] : memref<1x1x32x138xf32, #tpu.memory_space<vmem>>, vector<1x1x32x128xf32>
    %29 = vector.shape_cast %28 : vector<1x1x32x128xf32> to vector<32x128xf32>
    %cst_25 = arith.constant 0.266011715 : f32
    %30 = vector.broadcast %cst_25 : f32 to vector<32x128xf32>
    %31 = arith.mulf %30, %29 : vector<32x128xf32>
    %32 = arith.addf %27, %31 : vector<32x128xf32>
    %c0_26 = arith.constant 0 : index
    %c0_27 = arith.constant 0 : index
    %c0_28 = arith.constant 0 : index
    %c6 = arith.constant 6 : index
    %33 = vector.load %arg3[%c0_26, %c0_27, %c0_28, %c6] : memref<1x1x32x138xf32, #tpu.memory_space<vmem>>, vector<1x1x32x128xf32>
    %34 = vector.shape_cast %33 : vector<1x1x32x128xf32> to vector<32x128xf32>
    %cst_29 = arith.constant 0.213005543 : f32
    %35 = vector.broadcast %cst_29 : f32 to vector<32x128xf32>
    %36 = arith.mulf %35, %34 : vector<32x128xf32>
    %37 = arith.addf %32, %36 : vector<32x128xf32>
    %c0_30 = arith.constant 0 : index
    %c0_31 = arith.constant 0 : index
    %c0_32 = arith.constant 0 : index
    %c7 = arith.constant 7 : index
    %38 = vector.load %arg3[%c0_30, %c0_31, %c0_32, %c7] : memref<1x1x32x138xf32, #tpu.memory_space<vmem>>, vector<1x1x32x128xf32>
    %39 = vector.shape_cast %38 : vector<1x1x32x128xf32> to vector<32x128xf32>
    %cst_33 = arith.constant 0.109360687 : f32
    %40 = vector.broadcast %cst_33 : f32 to vector<32x128xf32>
    %41 = arith.mulf %40, %39 : vector<32x128xf32>
    %42 = arith.addf %37, %41 : vector<32x128xf32>
    %c0_34 = arith.constant 0 : index
    %c0_35 = arith.constant 0 : index
    %c0_36 = arith.constant 0 : index
    %c8 = arith.constant 8 : index
    %43 = vector.load %arg3[%c0_34, %c0_35, %c0_36, %c8] : memref<1x1x32x138xf32, #tpu.memory_space<vmem>>, vector<1x1x32x128xf32>
    %44 = vector.shape_cast %43 : vector<1x1x32x128xf32> to vector<32x128xf32>
    %cst_37 = arith.constant 0.0360007733 : f32
    %45 = vector.broadcast %cst_37 : f32 to vector<32x128xf32>
    %46 = arith.mulf %45, %44 : vector<32x128xf32>
    %47 = arith.addf %42, %46 : vector<32x128xf32>
    %c0_38 = arith.constant 0 : index
    %c0_39 = arith.constant 0 : index
    %c0_40 = arith.constant 0 : index
    %c9 = arith.constant 9 : index
    %48 = vector.load %arg3[%c0_38, %c0_39, %c0_40, %c9] : memref<1x1x32x138xf32, #tpu.memory_space<vmem>>, vector<1x1x32x128xf32>
    %49 = vector.shape_cast %48 : vector<1x1x32x128xf32> to vector<32x128xf32>
    %cst_41 = arith.constant 0.00759875821 : f32
    %50 = vector.broadcast %cst_41 : f32 to vector<32x128xf32>
    %51 = arith.mulf %50, %49 : vector<32x128xf32>
    %52 = arith.addf %47, %51 : vector<32x128xf32>
    %c0_42 = arith.constant 0 : index
    %c0_43 = arith.constant 0 : index
    %c0_44 = arith.constant 0 : index
    %c10 = arith.constant 10 : index
    %53 = vector.load %arg3[%c0_42, %c0_43, %c0_44, %c10] : memref<1x1x32x138xf32, #tpu.memory_space<vmem>>, vector<1x1x32x128xf32>
    %54 = vector.shape_cast %53 : vector<1x1x32x128xf32> to vector<32x128xf32>
    %cst_45 = arith.constant 0.00102838012 : f32
    %55 = vector.broadcast %cst_45 : f32 to vector<32x128xf32>
    %56 = arith.mulf %55, %54 : vector<32x128xf32>
    %57 = arith.addf %52, %56 : vector<32x128xf32>
    %c0_46 = arith.constant 0 : index
    %c0_47 = arith.constant 0 : index
    %58 = vector.load %arg8[%c0_46, %c0_47] : memref<32x128xf32, #tpu.memory_space<vmem>>, vector<32x128xf32>
    tpu.vector_store %arg8[%c0_46, %c0_47], %57 {strides = array<i32>} : memref<32x128xf32, #tpu.memory_space<vmem>>, vector<32x128xf32>,
    %c0_48 = arith.constant 0 : index
    %c0_49 = arith.constant 0 : index
    %59 = vector.load %arg8[%c0_48, %c0_49] : memref<32x128xf32, #tpu.memory_space<vmem>>, vector<32x128xf32>
    %cst_50 = arith.constant dense<0.000000e+00> : vector<22x128xf32>
    %60 = tpu.matmul %3, %59, %cst_50 {dimension_numbers = #tpu.dot_dimension_numbers<[1], [0], [0], [1], [0, 0, 1, 1], [], []>} : vector<22x32xf32>, vector<32x128xf32>, vector<22x128xf32> -> vector<22x128xf32>
    %c0_51 = arith.constant 0 : index
    %c0_52 = arith.constant 0 : index
    %61 = vector.load %arg9[%c0_51, %c0_52] : memref<22x128xf32, #tpu.memory_space<vmem>>, vector<22x128xf32>
    tpu.vector_store %arg9[%c0_51, %c0_52], %60 {strides = array<i32>} : memref<22x128xf32, #tpu.memory_space<vmem>>, vector<22x128xf32>,
    %c0_53 = arith.constant 0 : index
    %c0_54 = arith.constant 0 : index
    %c0_55 = arith.constant 0 : index
    %c0_56 = arith.constant 0 : index
    %62 = vector.load %arg4[%c0_53, %c0_54, %c0_55, %c0_56] : memref<1x1x32x138xf32, #tpu.memory_space<vmem>>, vector<1x1x32x128xf32>
    %63 = vector.shape_cast %62 : vector<1x1x32x128xf32> to vector<32x128xf32>
    %cst_57 = arith.constant 0.00102838012 : f32
    %64 = vector.broadcast %cst_57 : f32 to vector<32x128xf32>
    %65 = arith.mulf %64, %63 : vector<32x128xf32>
    %c0_58 = arith.constant 0 : index
    %c0_59 = arith.constant 0 : index
    %c0_60 = arith.constant 0 : index
    %c1_61 = arith.constant 1 : index
    %66 = vector.load %arg4[%c0_58, %c0_59, %c0_60, %c1_61] : memref<1x1x32x138xf32, #tpu.memory_space<vmem>>, vector<1x1x32x128xf32>
    %67 = vector.shape_cast %66 : vector<1x1x32x128xf32> to vector<32x128xf32>
    %cst_62 = arith.constant 0.00759875821 : f32
    %68 = vector.broadcast %cst_62 : f32 to vector<32x128xf32>
    %69 = arith.mulf %68, %67 : vector<32x128xf32>
    %70 = arith.addf %65, %69 : vector<32x128xf32>
    %c0_63 = arith.constant 0 : index
    %c0_64 = arith.constant 0 : index
    %c0_65 = arith.constant 0 : index
    %c2_66 = arith.constant 2 : index
    %71 = vector.load %arg4[%c0_63, %c0_64, %c0_65, %c2_66] : memref<1x1x32x138xf32, #tpu.memory_space<vmem>>, vector<1x1x32x128xf32>
    %72 = vector.shape_cast %71 : vector<1x1x32x128xf32> to vector<32x128xf32>
    %cst_67 = arith.constant 0.0360007733 : f32
    %73 = vector.broadcast %cst_67 : f32 to vector<32x128xf32>
    %74 = arith.mulf %73, %72 : vector<32x128xf32>
    %75 = arith.addf %70, %74 : vector<32x128xf32>
    %c0_68 = arith.constant 0 : index
    %c0_69 = arith.constant 0 : index
    %c0_70 = arith.constant 0 : index
    %c3_71 = arith.constant 3 : index
    %76 = vector.load %arg4[%c0_68, %c0_69, %c0_70, %c3_71] : memref<1x1x32x138xf32, #tpu.memory_space<vmem>>, vector<1x1x32x128xf32>
    %77 = vector.shape_cast %76 : vector<1x1x32x128xf32> to vector<32x128xf32>
    %cst_72 = arith.constant 0.109360687 : f32
    %78 = vector.broadcast %cst_72 : f32 to vector<32x128xf32>
    %79 = arith.mulf %78, %77 : vector<32x128xf32>
    %80 = arith.addf %75, %79 : vector<32x128xf32>
    %c0_73 = arith.constant 0 : index
    %c0_74 = arith.constant 0 : index
    %c0_75 = arith.constant 0 : index
    %c4_76 = arith.constant 4 : index
    %81 = vector.load %arg4[%c0_73, %c0_74, %c0_75, %c4_76] : memref<1x1x32x138xf32, #tpu.memory_space<vmem>>, vector<1x1x32x128xf32>
    %82 = vector.shape_cast %81 : vector<1x1x32x128xf32> to vector<32x128xf32>
    %cst_77 = arith.constant 0.213005543 : f32
    %83 = vector.broadcast %cst_77 : f32 to vector<32x128xf32>
    %84 = arith.mulf %83, %82 : vector<32x128xf32>
    %85 = arith.addf %80, %84 : vector<32x128xf32>
    %c0_78 = arith.constant 0 : index
    %c0_79 = arith.constant 0 : index
    %c0_80 = arith.constant 0 : index
    %c5_81 = arith.constant 5 : index
    %86 = vector.load %arg4[%c0_78, %c0_79, %c0_80, %c5_81] : memref<1x1x32x138xf32, #tpu.memory_space<vmem>>, vector<1x1x32x128xf32>
    %87 = vector.shape_cast %86 : vector<1x1x32x128xf32> to vector<32x128xf32>
    %cst_82 = arith.constant 0.266011715 : f32
    %88 = vector.broadcast %cst_82 : f32 to vector<32x128xf32>
    %89 = arith.mulf %88, %87 : vector<32x128xf32>
    %90 = arith.addf %85, %89 : vector<32x128xf32>
    %c0_83 = arith.constant 0 : index
    %c0_84 = arith.constant 0 : index
    %c0_85 = arith.constant 0 : index
    %c6_86 = arith.constant 6 : index
    %91 = vector.load %arg4[%c0_83, %c0_84, %c0_85, %c6_86] : memref<1x1x32x138xf32, #tpu.memory_space<vmem>>, vector<1x1x32x128xf32>
    %92 = vector.shape_cast %91 : vector<1x1x32x128xf32> to vector<32x128xf32>
    %cst_87 = arith.constant 0.213005543 : f32
    %93 = vector.broadcast %cst_87 : f32 to vector<32x128xf32>
    %94 = arith.mulf %93, %92 : vector<32x128xf32>
    %95 = arith.addf %90, %94 : vector<32x128xf32>
    %c0_88 = arith.constant 0 : index
    %c0_89 = arith.constant 0 : index
    %c0_90 = arith.constant 0 : index
    %c7_91 = arith.constant 7 : index
    %96 = vector.load %arg4[%c0_88, %c0_89, %c0_90, %c7_91] : memref<1x1x32x138xf32, #tpu.memory_space<vmem>>, vector<1x1x32x128xf32>
    %97 = vector.shape_cast %96 : vector<1x1x32x128xf32> to vector<32x128xf32>
    %cst_92 = arith.constant 0.109360687 : f32
    %98 = vector.broadcast %cst_92 : f32 to vector<32x128xf32>
    %99 = arith.mulf %98, %97 : vector<32x128xf32>
    %100 = arith.addf %95, %99 : vector<32x128xf32>
    %c0_93 = arith.constant 0 : index
    %c0_94 = arith.constant 0 : index
    %c0_95 = arith.constant 0 : index
    %c8_96 = arith.constant 8 : index
    %101 = vector.load %arg4[%c0_93, %c0_94, %c0_95, %c8_96] : memref<1x1x32x138xf32, #tpu.memory_space<vmem>>, vector<1x1x32x128xf32>
    %102 = vector.shape_cast %101 : vector<1x1x32x128xf32> to vector<32x128xf32>
    %cst_97 = arith.constant 0.0360007733 : f32
    %103 = vector.broadcast %cst_97 : f32 to vector<32x128xf32>
    %104 = arith.mulf %103, %102 : vector<32x128xf32>
    %105 = arith.addf %100, %104 : vector<32x128xf32>
    %c0_98 = arith.constant 0 : index
    %c0_99 = arith.constant 0 : index
    %c0_100 = arith.constant 0 : index
    %c9_101 = arith.constant 9 : index
    %106 = vector.load %arg4[%c0_98, %c0_99, %c0_100, %c9_101] : memref<1x1x32x138xf32, #tpu.memory_space<vmem>>, vector<1x1x32x128xf32>
    %107 = vector.shape_cast %106 : vector<1x1x32x128xf32> to vector<32x128xf32>
    %cst_102 = arith.constant 0.00759875821 : f32
    %108 = vector.broadcast %cst_102 : f32 to vector<32x128xf32>
    %109 = arith.mulf %108, %107 : vector<32x128xf32>
    %110 = arith.addf %105, %109 : vector<32x128xf32>
    %c0_103 = arith.constant 0 : index
    %c0_104 = arith.constant 0 : index
    %c0_105 = arith.constant 0 : index
    %c10_106 = arith.constant 10 : index
    %111 = vector.load %arg4[%c0_103, %c0_104, %c0_105, %c10_106] : memref<1x1x32x138xf32, #tpu.memory_space<vmem>>, vector<1x1x32x128xf32>
    %112 = vector.shape_cast %111 : vector<1x1x32x128xf32> to vector<32x128xf32>
    %cst_107 = arith.constant 0.00102838012 : f32
    %113 = vector.broadcast %cst_107 : f32 to vector<32x128xf32>
    %114 = arith.mulf %113, %112 : vector<32x128xf32>
    %115 = arith.addf %110, %114 : vector<32x128xf32>
    %c0_108 = arith.constant 0 : index
    %c0_109 = arith.constant 0 : index
    %116 = vector.load %arg8[%c0_108, %c0_109] : memref<32x128xf32, #tpu.memory_space<vmem>>, vector<32x128xf32>
    tpu.vector_store %arg8[%c0_108, %c0_109], %115 {strides = array<i32>} : memref<32x128xf32, #tpu.memory_space<vmem>>, vector<32x128xf32>,
    %c0_110 = arith.constant 0 : index
    %c0_111 = arith.constant 0 : index
    %117 = vector.load %arg8[%c0_110, %c0_111] : memref<32x128xf32, #tpu.memory_space<vmem>>, vector<32x128xf32>
    %cst_112 = arith.constant dense<0.000000e+00> : vector<22x128xf32>
    %118 = tpu.matmul %3, %117, %cst_112 {dimension_numbers = #tpu.dot_dimension_numbers<[1], [0], [0], [1], [0, 0, 1, 1], [], []>} : vector<22x32xf32>, vector<32x128xf32>, vector<22x128xf32> -> vector<22x128xf32>
    %c0_113 = arith.constant 0 : index
    %c0_114 = arith.constant 0 : index
    %119 = vector.load %arg10[%c0_113, %c0_114] : memref<22x128xf32, #tpu.memory_space<vmem>>, vector<22x128xf32>
    tpu.vector_store %arg10[%c0_113, %c0_114], %118 {strides = array<i32>} : memref<22x128xf32, #tpu.memory_space<vmem>>, vector<22x128xf32>,
    %c0_115 = arith.constant 0 : index
    %c0_116 = arith.constant 0 : index
    %c0_117 = arith.constant 0 : index
    %c0_118 = arith.constant 0 : index
    %120 = vector.load %arg3[%c0_115, %c0_116, %c0_117, %c0_118] : memref<1x1x32x138xf32, #tpu.memory_space<vmem>>, vector<1x1x32x138xf32>
    %121 = vector.shape_cast %120 : vector<1x1x32x138xf32> to vector<32x138xf32>
    %122 = arith.mulf %121, %121 : vector<32x138xf32>
    %c0_119 = arith.constant 0 : index
    %c0_120 = arith.constant 0 : index
    %123 = vector.load %arg7[%c0_119, %c0_120] : memref<32x138xf32, #tpu.memory_space<vmem>>, vector<32x138xf32>
    tpu.vector_store %arg7[%c0_119, %c0_120], %122 {strides = array<i32>} : memref<32x138xf32, #tpu.memory_space<vmem>>, vector<32x138xf32>,
    %c0_121 = arith.constant 0 : index
    %c0_122 = arith.constant 0 : index
    %124 = vector.load %arg7[%c0_121, %c0_122] : memref<32x138xf32, #tpu.memory_space<vmem>>, vector<32x128xf32>
    %cst_123 = arith.constant 0.00102838012 : f32
    %125 = vector.broadcast %cst_123 : f32 to vector<32x128xf32>
    %126 = arith.mulf %125, %124 : vector<32x128xf32>
    %c0_124 = arith.constant 0 : index
    %c1_125 = arith.constant 1 : index
    %127 = vector.load %arg7[%c0_124, %c1_125] : memref<32x138xf32, #tpu.memory_space<vmem>>, vector<32x128xf32>
    %cst_126 = arith.constant 0.00759875821 : f32
    %128 = vector.broadcast %cst_126 : f32 to vector<32x128xf32>
    %129 = arith.mulf %128, %127 : vector<32x128xf32>
    %130 = arith.addf %126, %129 : vector<32x128xf32>
    %c0_127 = arith.constant 0 : index
    %c2_128 = arith.constant 2 : index
    %131 = vector.load %arg7[%c0_127, %c2_128] : memref<32x138xf32, #tpu.memory_space<vmem>>, vector<32x128xf32>
    %cst_129 = arith.constant 0.0360007733 : f32
    %132 = vector.broadcast %cst_129 : f32 to vector<32x128xf32>
    %133 = arith.mulf %132, %131 : vector<32x128xf32>
    %134 = arith.addf %130, %133 : vector<32x128xf32>
    %c0_130 = arith.constant 0 : index
    %c3_131 = arith.constant 3 : index
    %135 = vector.load %arg7[%c0_130, %c3_131] : memref<32x138xf32, #tpu.memory_space<vmem>>, vector<32x128xf32>
    %cst_132 = arith.constant 0.109360687 : f32
    %136 = vector.broadcast %cst_132 : f32 to vector<32x128xf32>
    %137 = arith.mulf %136, %135 : vector<32x128xf32>
    %138 = arith.addf %134, %137 : vector<32x128xf32>
    %c0_133 = arith.constant 0 : index
    %c4_134 = arith.constant 4 : index
    %139 = vector.load %arg7[%c0_133, %c4_134] : memref<32x138xf32, #tpu.memory_space<vmem>>, vector<32x128xf32>
    %cst_135 = arith.constant 0.213005543 : f32
    %140 = vector.broadcast %cst_135 : f32 to vector<32x128xf32>
    %141 = arith.mulf %140, %139 : vector<32x128xf32>
    %142 = arith.addf %138, %141 : vector<32x128xf32>
    %c0_136 = arith.constant 0 : index
    %c5_137 = arith.constant 5 : index
    %143 = vector.load %arg7[%c0_136, %c5_137] : memref<32x138xf32, #tpu.memory_space<vmem>>, vector<32x128xf32>
    %cst_138 = arith.constant 0.266011715 : f32
    %144 = vector.broadcast %cst_138 : f32 to vector<32x128xf32>
    %145 = arith.mulf %144, %143 : vector<32x128xf32>
    %146 = arith.addf %142, %145 : vector<32x128xf32>
    %c0_139 = arith.constant 0 : index
    %c6_140 = arith.constant 6 : index
    %147 = vector.load %arg7[%c0_139, %c6_140] : memref<32x138xf32, #tpu.memory_space<vmem>>, vector<32x128xf32>
    %cst_141 = arith.constant 0.213005543 : f32
    %148 = vector.broadcast %cst_141 : f32 to vector<32x128xf32>
    %149 = arith.mulf %148, %147 : vector<32x128xf32>
    %150 = arith.addf %146, %149 : vector<32x128xf32>
    %c0_142 = arith.constant 0 : index
    %c7_143 = arith.constant 7 : index
    %151 = vector.load %arg7[%c0_142, %c7_143] : memref<32x138xf32, #tpu.memory_space<vmem>>, vector<32x128xf32>
    %cst_144 = arith.constant 0.109360687 : f32
    %152 = vector.broadcast %cst_144 : f32 to vector<32x128xf32>
    %153 = arith.mulf %152, %151 : vector<32x128xf32>
    %154 = arith.addf %150, %153 : vector<32x128xf32>
    %c0_145 = arith.constant 0 : index
    %c8_146 = arith.constant 8 : index
    %155 = vector.load %arg7[%c0_145, %c8_146] : memref<32x138xf32, #tpu.memory_space<vmem>>, vector<32x128xf32>
    %cst_147 = arith.constant 0.0360007733 : f32
    %156 = vector.broadcast %cst_147 : f32 to vector<32x128xf32>
    %157 = arith.mulf %156, %155 : vector<32x128xf32>
    %158 = arith.addf %154, %157 : vector<32x128xf32>
    %c0_148 = arith.constant 0 : index
    %c9_149 = arith.constant 9 : index
    %159 = vector.load %arg7[%c0_148, %c9_149] : memref<32x138xf32, #tpu.memory_space<vmem>>, vector<32x128xf32>
    %cst_150 = arith.constant 0.00759875821 : f32
    %160 = vector.broadcast %cst_150 : f32 to vector<32x128xf32>
    %161 = arith.mulf %160, %159 : vector<32x128xf32>
    %162 = arith.addf %158, %161 : vector<32x128xf32>
    %c0_151 = arith.constant 0 : index
    %c10_152 = arith.constant 10 : index
    %163 = vector.load %arg7[%c0_151, %c10_152] : memref<32x138xf32, #tpu.memory_space<vmem>>, vector<32x128xf32>
    %cst_153 = arith.constant 0.00102838012 : f32
    %164 = vector.broadcast %cst_153 : f32 to vector<32x128xf32>
    %165 = arith.mulf %164, %163 : vector<32x128xf32>
    %166 = arith.addf %162, %165 : vector<32x128xf32>
    %c0_154 = arith.constant 0 : index
    %c0_155 = arith.constant 0 : index
    %167 = vector.load %arg8[%c0_154, %c0_155] : memref<32x128xf32, #tpu.memory_space<vmem>>, vector<32x128xf32>
    tpu.vector_store %arg8[%c0_154, %c0_155], %166 {strides = array<i32>} : memref<32x128xf32, #tpu.memory_space<vmem>>, vector<32x128xf32>,
    %c0_156 = arith.constant 0 : index
    %c0_157 = arith.constant 0 : index
    %168 = vector.load %arg8[%c0_156, %c0_157] : memref<32x128xf32, #tpu.memory_space<vmem>>, vector<32x128xf32>
    %cst_158 = arith.constant dense<0.000000e+00> : vector<22x128xf32>
    %169 = tpu.matmul %3, %168, %cst_158 {dimension_numbers = #tpu.dot_dimension_numbers<[1], [0], [0], [1], [0, 0, 1, 1], [], []>} : vector<22x32xf32>, vector<32x128xf32>, vector<22x128xf32> -> vector<22x128xf32>
    %c0_159 = arith.constant 0 : index
    %c0_160 = arith.constant 0 : index
    %170 = vector.load %arg11[%c0_159, %c0_160] : memref<22x128xf32, #tpu.memory_space<vmem>>, vector<22x128xf32>
    tpu.vector_store %arg11[%c0_159, %c0_160], %169 {strides = array<i32>} : memref<22x128xf32, #tpu.memory_space<vmem>>, vector<22x128xf32>,
    %c0_161 = arith.constant 0 : index
    %c0_162 = arith.constant 0 : index
    %c0_163 = arith.constant 0 : index
    %c0_164 = arith.constant 0 : index
    %171 = vector.load %arg4[%c0_161, %c0_162, %c0_163, %c0_164] : memref<1x1x32x138xf32, #tpu.memory_space<vmem>>, vector<1x1x32x138xf32>
    %172 = vector.shape_cast %171 : vector<1x1x32x138xf32> to vector<32x138xf32>
    %173 = arith.mulf %172, %172 : vector<32x138xf32>
    %c0_165 = arith.constant 0 : index
    %c0_166 = arith.constant 0 : index
    %174 = vector.load %arg7[%c0_165, %c0_166] : memref<32x138xf32, #tpu.memory_space<vmem>>, vector<32x138xf32>
    tpu.vector_store %arg7[%c0_165, %c0_166], %173 {strides = array<i32>} : memref<32x138xf32, #tpu.memory_space<vmem>>, vector<32x138xf32>,
    %c0_167 = arith.constant 0 : index
    %c0_168 = arith.constant 0 : index
    %175 = vector.load %arg7[%c0_167, %c0_168] : memref<32x138xf32, #tpu.memory_space<vmem>>, vector<32x128xf32>
    %cst_169 = arith.constant 0.00102838012 : f32
    %176 = vector.broadcast %cst_169 : f32 to vector<32x128xf32>
    %177 = arith.mulf %176, %175 : vector<32x128xf32>
    %c0_170 = arith.constant 0 : index
    %c1_171 = arith.constant 1 : index
    %178 = vector.load %arg7[%c0_170, %c1_171] : memref<32x138xf32, #tpu.memory_space<vmem>>, vector<32x128xf32>
    %cst_172 = arith.constant 0.00759875821 : f32
    %179 = vector.broadcast %cst_172 : f32 to vector<32x128xf32>
    %180 = arith.mulf %179, %178 : vector<32x128xf32>
    %181 = arith.addf %177, %180 : vector<32x128xf32>
    %c0_173 = arith.constant 0 : index
    %c2_174 = arith.constant 2 : index
    %182 = vector.load %arg7[%c0_173, %c2_174] : memref<32x138xf32, #tpu.memory_space<vmem>>, vector<32x128xf32>
    %cst_175 = arith.constant 0.0360007733 : f32
    %183 = vector.broadcast %cst_175 : f32 to vector<32x128xf32>
    %184 = arith.mulf %183, %182 : vector<32x128xf32>
    %185 = arith.addf %181, %184 : vector<32x128xf32>
    %c0_176 = arith.constant 0 : index
    %c3_177 = arith.constant 3 : index
    %186 = vector.load %arg7[%c0_176, %c3_177] : memref<32x138xf32, #tpu.memory_space<vmem>>, vector<32x128xf32>
    %cst_178 = arith.constant 0.109360687 : f32
    %187 = vector.broadcast %cst_178 : f32 to vector<32x128xf32>
    %188 = arith.mulf %187, %186 : vector<32x128xf32>
    %189 = arith.addf %185, %188 : vector<32x128xf32>
    %c0_179 = arith.constant 0 : index
    %c4_180 = arith.constant 4 : index
    %190 = vector.load %arg7[%c0_179, %c4_180] : memref<32x138xf32, #tpu.memory_space<vmem>>, vector<32x128xf32>
    %cst_181 = arith.constant 0.213005543 : f32
    %191 = vector.broadcast %cst_181 : f32 to vector<32x128xf32>
    %192 = arith.mulf %191, %190 : vector<32x128xf32>
    %193 = arith.addf %189, %192 : vector<32x128xf32>
    %c0_182 = arith.constant 0 : index
    %c5_183 = arith.constant 5 : index
    %194 = vector.load %arg7[%c0_182, %c5_183] : memref<32x138xf32, #tpu.memory_space<vmem>>, vector<32x128xf32>
    %cst_184 = arith.constant 0.266011715 : f32
    %195 = vector.broadcast %cst_184 : f32 to vector<32x128xf32>
    %196 = arith.mulf %195, %194 : vector<32x128xf32>
    %197 = arith.addf %193, %196 : vector<32x128xf32>
    %c0_185 = arith.constant 0 : index
    %c6_186 = arith.constant 6 : index
    %198 = vector.load %arg7[%c0_185, %c6_186] : memref<32x138xf32, #tpu.memory_space<vmem>>, vector<32x128xf32>
    %cst_187 = arith.constant 0.213005543 : f32
    %199 = vector.broadcast %cst_187 : f32 to vector<32x128xf32>
    %200 = arith.mulf %199, %198 : vector<32x128xf32>
    %201 = arith.addf %197, %200 : vector<32x128xf32>
    %c0_188 = arith.constant 0 : index
    %c7_189 = arith.constant 7 : index
    %202 = vector.load %arg7[%c0_188, %c7_189] : memref<32x138xf32, #tpu.memory_space<vmem>>, vector<32x128xf32>
    %cst_190 = arith.constant 0.109360687 : f32
    %203 = vector.broadcast %cst_190 : f32 to vector<32x128xf32>
    %204 = arith.mulf %203, %202 : vector<32x128xf32>
    %205 = arith.addf %201, %204 : vector<32x128xf32>
    %c0_191 = arith.constant 0 : index
    %c8_192 = arith.constant 8 : index
    %206 = vector.load %arg7[%c0_191, %c8_192] : memref<32x138xf32, #tpu.memory_space<vmem>>, vector<32x128xf32>
    %cst_193 = arith.constant 0.0360007733 : f32
    %207 = vector.broadcast %cst_193 : f32 to vector<32x128xf32>
    %208 = arith.mulf %207, %206 : vector<32x128xf32>
    %209 = arith.addf %205, %208 : vector<32x128xf32>
    %c0_194 = arith.constant 0 : index
    %c9_195 = arith.constant 9 : index
    %210 = vector.load %arg7[%c0_194, %c9_195] : memref<32x138xf32, #tpu.memory_space<vmem>>, vector<32x128xf32>
    %cst_196 = arith.constant 0.00759875821 : f32
    %211 = vector.broadcast %cst_196 : f32 to vector<32x128xf32>
    %212 = arith.mulf %211, %210 : vector<32x128xf32>
    %213 = arith.addf %209, %212 : vector<32x128xf32>
    %c0_197 = arith.constant 0 : index
    %c10_198 = arith.constant 10 : index
    %214 = vector.load %arg7[%c0_197, %c10_198] : memref<32x138xf32, #tpu.memory_space<vmem>>, vector<32x128xf32>
    %cst_199 = arith.constant 0.00102838012 : f32
    %215 = vector.broadcast %cst_199 : f32 to vector<32x128xf32>
    %216 = arith.mulf %215, %214 : vector<32x128xf32>
    %217 = arith.addf %213, %216 : vector<32x128xf32>
    %c0_200 = arith.constant 0 : index
    %c0_201 = arith.constant 0 : index
    %218 = vector.load %arg8[%c0_200, %c0_201] : memref<32x128xf32, #tpu.memory_space<vmem>>, vector<32x128xf32>
    tpu.vector_store %arg8[%c0_200, %c0_201], %217 {strides = array<i32>} : memref<32x128xf32, #tpu.memory_space<vmem>>, vector<32x128xf32>,
    %c0_202 = arith.constant 0 : index
    %c0_203 = arith.constant 0 : index
    %219 = vector.load %arg11[%c0_202, %c0_203] : memref<22x128xf32, #tpu.memory_space<vmem>>, vector<22x128xf32>
    %c0_204 = arith.constant 0 : index
    %c0_205 = arith.constant 0 : index
    %220 = vector.load %arg8[%c0_204, %c0_205] : memref<32x128xf32, #tpu.memory_space<vmem>>, vector<32x128xf32>
    %cst_206 = arith.constant dense<0.000000e+00> : vector<22x128xf32>
    %221 = tpu.matmul %3, %220, %cst_206 {dimension_numbers = #tpu.dot_dimension_numbers<[1], [0], [0], [1], [0, 0, 1, 1], [], []>} : vector<22x32xf32>, vector<32x128xf32>, vector<22x128xf32> -> vector<22x128xf32>
    %222 = arith.addf %219, %221 : vector<22x128xf32>
    %c0_207 = arith.constant 0 : index
    %c0_208 = arith.constant 0 : index
    %223 = vector.load %arg11[%c0_207, %c0_208] : memref<22x128xf32, #tpu.memory_space<vmem>>, vector<22x128xf32>
    tpu.vector_store %arg11[%c0_207, %c0_208], %222 {strides = array<i32>} : memref<22x128xf32, #tpu.memory_space<vmem>>, vector<22x128xf32>,
    %c0_209 = arith.constant 0 : index
    %c0_210 = arith.constant 0 : index
    %c0_211 = arith.constant 0 : index
    %c0_212 = arith.constant 0 : index
    %224 = vector.load %arg3[%c0_209, %c0_210, %c0_211, %c0_212] : memref<1x1x32x138xf32, #tpu.memory_space<vmem>>, vector<1x1x32x138xf32>
    %225 = vector.shape_cast %224 : vector<1x1x32x138xf32> to vector<32x138xf32>
    %c0_213 = arith.constant 0 : index
    %c0_214 = arith.constant 0 : index
    %c0_215 = arith.constant 0 : index
    %c0_216 = arith.constant 0 : index
    %226 = vector.load %arg4[%c0_213, %c0_214, %c0_215, %c0_216] : memref<1x1x32x138xf32, #tpu.memory_space<vmem>>, vector<1x1x32x138xf32>
    %227 = vector.shape_cast %226 : vector<1x1x32x138xf32> to vector<32x138xf32>
    %228 = arith.mulf %225, %227 : vector<32x138xf32>
    %c0_217 = arith.constant 0 : index
    %c0_218 = arith.constant 0 : index
    %229 = vector.load %arg7[%c0_217, %c0_218] : memref<32x138xf32, #tpu.memory_space<vmem>>, vector<32x138xf32>
    tpu.vector_store %arg7[%c0_217, %c0_218], %228 {strides = array<i32>} : memref<32x138xf32, #tpu.memory_space<vmem>>, vector<32x138xf32>,
    %c0_219 = arith.constant 0 : index
    %c0_220 = arith.constant 0 : index
    %230 = vector.load %arg7[%c0_219, %c0_220] : memref<32x138xf32, #tpu.memory_space<vmem>>, vector<32x128xf32>
    %cst_221 = arith.constant 0.00102838012 : f32
    %231 = vector.broadcast %cst_221 : f32 to vector<32x128xf32>
    %232 = arith.mulf %231, %230 : vector<32x128xf32>
    %c0_222 = arith.constant 0 : index
    %c1_223 = arith.constant 1 : index
    %233 = vector.load %arg7[%c0_222, %c1_223] : memref<32x138xf32, #tpu.memory_space<vmem>>, vector<32x128xf32>
    %cst_224 = arith.constant 0.00759875821 : f32
    %234 = vector.broadcast %cst_224 : f32 to vector<32x128xf32>
    %235 = arith.mulf %234, %233 : vector<32x128xf32>
    %236 = arith.addf %232, %235 : vector<32x128xf32>
    %c0_225 = arith.constant 0 : index
    %c2_226 = arith.constant 2 : index
    %237 = vector.load %arg7[%c0_225, %c2_226] : memref<32x138xf32, #tpu.memory_space<vmem>>, vector<32x128xf32>
    %cst_227 = arith.constant 0.0360007733 : f32
    %238 = vector.broadcast %cst_227 : f32 to vector<32x128xf32>
    %239 = arith.mulf %238, %237 : vector<32x128xf32>
    %240 = arith.addf %236, %239 : vector<32x128xf32>
    %c0_228 = arith.constant 0 : index
    %c3_229 = arith.constant 3 : index
    %241 = vector.load %arg7[%c0_228, %c3_229] : memref<32x138xf32, #tpu.memory_space<vmem>>, vector<32x128xf32>
    %cst_230 = arith.constant 0.109360687 : f32
    %242 = vector.broadcast %cst_230 : f32 to vector<32x128xf32>
    %243 = arith.mulf %242, %241 : vector<32x128xf32>
    %244 = arith.addf %240, %243 : vector<32x128xf32>
    %c0_231 = arith.constant 0 : index
    %c4_232 = arith.constant 4 : index
    %245 = vector.load %arg7[%c0_231, %c4_232] : memref<32x138xf32, #tpu.memory_space<vmem>>, vector<32x128xf32>
    %cst_233 = arith.constant 0.213005543 : f32
    %246 = vector.broadcast %cst_233 : f32 to vector<32x128xf32>
    %247 = arith.mulf %246, %245 : vector<32x128xf32>
    %248 = arith.addf %244, %247 : vector<32x128xf32>
    %c0_234 = arith.constant 0 : index
    %c5_235 = arith.constant 5 : index
    %249 = vector.load %arg7[%c0_234, %c5_235] : memref<32x138xf32, #tpu.memory_space<vmem>>, vector<32x128xf32>
    %cst_236 = arith.constant 0.266011715 : f32
    %250 = vector.broadcast %cst_236 : f32 to vector<32x128xf32>
    %251 = arith.mulf %250, %249 : vector<32x128xf32>
    %252 = arith.addf %248, %251 : vector<32x128xf32>
    %c0_237 = arith.constant 0 : index
    %c6_238 = arith.constant 6 : index
    %253 = vector.load %arg7[%c0_237, %c6_238] : memref<32x138xf32, #tpu.memory_space<vmem>>, vector<32x128xf32>
    %cst_239 = arith.constant 0.213005543 : f32
    %254 = vector.broadcast %cst_239 : f32 to vector<32x128xf32>
    %255 = arith.mulf %254, %253 : vector<32x128xf32>
    %256 = arith.addf %252, %255 : vector<32x128xf32>
    %c0_240 = arith.constant 0 : index
    %c7_241 = arith.constant 7 : index
    %257 = vector.load %arg7[%c0_240, %c7_241] : memref<32x138xf32, #tpu.memory_space<vmem>>, vector<32x128xf32>
    %cst_242 = arith.constant 0.109360687 : f32
    %258 = vector.broadcast %cst_242 : f32 to vector<32x128xf32>
    %259 = arith.mulf %258, %257 : vector<32x128xf32>
    %260 = arith.addf %256, %259 : vector<32x128xf32>
    %c0_243 = arith.constant 0 : index
    %c8_244 = arith.constant 8 : index
    %261 = vector.load %arg7[%c0_243, %c8_244] : memref<32x138xf32, #tpu.memory_space<vmem>>, vector<32x128xf32>
    %cst_245 = arith.constant 0.0360007733 : f32
    %262 = vector.broadcast %cst_245 : f32 to vector<32x128xf32>
    %263 = arith.mulf %262, %261 : vector<32x128xf32>
    %264 = arith.addf %260, %263 : vector<32x128xf32>
    %c0_246 = arith.constant 0 : index
    %c9_247 = arith.constant 9 : index
    %265 = vector.load %arg7[%c0_246, %c9_247] : memref<32x138xf32, #tpu.memory_space<vmem>>, vector<32x128xf32>
    %cst_248 = arith.constant 0.00759875821 : f32
    %266 = vector.broadcast %cst_248 : f32 to vector<32x128xf32>
    %267 = arith.mulf %266, %265 : vector<32x128xf32>
    %268 = arith.addf %264, %267 : vector<32x128xf32>
    %c0_249 = arith.constant 0 : index
    %c10_250 = arith.constant 10 : index
    %269 = vector.load %arg7[%c0_249, %c10_250] : memref<32x138xf32, #tpu.memory_space<vmem>>, vector<32x128xf32>
    %cst_251 = arith.constant 0.00102838012 : f32
    %270 = vector.broadcast %cst_251 : f32 to vector<32x128xf32>
    %271 = arith.mulf %270, %269 : vector<32x128xf32>
    %272 = arith.addf %268, %271 : vector<32x128xf32>
    %c0_252 = arith.constant 0 : index
    %c0_253 = arith.constant 0 : index
    %273 = vector.load %arg8[%c0_252, %c0_253] : memref<32x128xf32, #tpu.memory_space<vmem>>, vector<32x128xf32>
    tpu.vector_store %arg8[%c0_252, %c0_253], %272 {strides = array<i32>} : memref<32x128xf32, #tpu.memory_space<vmem>>, vector<32x128xf32>,
    %c0_254 = arith.constant 0 : index
    %c0_255 = arith.constant 0 : index
    %274 = vector.load %arg8[%c0_254, %c0_255] : memref<32x128xf32, #tpu.memory_space<vmem>>, vector<32x128xf32>
    %cst_256 = arith.constant dense<0.000000e+00> : vector<22x128xf32>
    %275 = tpu.matmul %3, %274, %cst_256 {dimension_numbers = #tpu.dot_dimension_numbers<[1], [0], [0], [1], [0, 0, 1, 1], [], []>} : vector<22x32xf32>, vector<32x128xf32>, vector<22x128xf32> -> vector<22x128xf32>
    %c0_257 = arith.constant 0 : index
    %c0_258 = arith.constant 0 : index
    %276 = vector.load %arg12[%c0_257, %c0_258] : memref<22x128xf32, #tpu.memory_space<vmem>>, vector<22x128xf32>
    tpu.vector_store %arg12[%c0_257, %c0_258], %275 {strides = array<i32>} : memref<22x128xf32, #tpu.memory_space<vmem>>, vector<22x128xf32>,
    %c0_259 = arith.constant 0 : index
    %c0_260 = arith.constant 0 : index
    %277 = vector.load %arg9[%c0_259, %c0_260] : memref<22x128xf32, #tpu.memory_space<vmem>>, vector<22x128xf32>
    %c0_261 = arith.constant 0 : index
    %c0_262 = arith.constant 0 : index
    %278 = vector.load %arg10[%c0_261, %c0_262] : memref<22x128xf32, #tpu.memory_space<vmem>>, vector<22x128xf32>
    %cst_263 = arith.constant 5.000000e-01 : f32
    %279 = vector.broadcast %cst_263 : f32 to vector<22x128xf32>
    %280 = arith.addf %277, %279 : vector<22x128xf32>
    %cst_264 = arith.constant 5.000000e-01 : f32
    %281 = vector.broadcast %cst_264 : f32 to vector<22x128xf32>
    %282 = arith.addf %278, %281 : vector<22x128xf32>
    %283 = arith.mulf %280, %280 : vector<22x128xf32>
    %284 = arith.mulf %282, %282 : vector<22x128xf32>
    %285 = arith.mulf %280, %282 : vector<22x128xf32>
    %c0_265 = arith.constant 0 : index
    %c0_266 = arith.constant 0 : index
    %286 = vector.load %arg11[%c0_265, %c0_266] : memref<22x128xf32, #tpu.memory_space<vmem>>, vector<22x128xf32>
    %287 = arith.mulf %277, %277 : vector<22x128xf32>
    %288 = arith.subf %286, %287 : vector<22x128xf32>
    %289 = arith.mulf %278, %278 : vector<22x128xf32>
    %290 = arith.subf %288, %289 : vector<22x128xf32>
    %c0_267 = arith.constant 0 : index
    %c0_268 = arith.constant 0 : index
    %291 = vector.load %arg12[%c0_267, %c0_268] : memref<22x128xf32, #tpu.memory_space<vmem>>, vector<22x128xf32>
    %292 = arith.mulf %277, %278 : vector<22x128xf32>
    %293 = arith.subf %291, %292 : vector<22x128xf32>
    %cst_269 = arith.constant 2.000000e+00 : f32
    %294 = vector.broadcast %cst_269 : f32 to vector<22x128xf32>
    %295 = arith.mulf %294, %293 : vector<22x128xf32>
    %cst_270 = arith.constant 8.99999984E-4 : f32
    %296 = vector.broadcast %cst_270 : f32 to vector<22x128xf32>
    %297 = arith.addf %295, %296 : vector<22x128xf32>
    %cst_271 = arith.constant 8.99999984E-4 : f32
    %298 = vector.broadcast %cst_271 : f32 to vector<22x128xf32>
    %299 = arith.addf %290, %298 : vector<22x128xf32>
    %300 = tpu.reciprocal %299 {approx = true} : vector<22x128xf32> -> vector<22x128xf32>
    %301 = arith.mulf %299, %300 : vector<22x128xf32>
    %cst_272 = arith.constant 2.000000e+00 : f32
    %302 = vector.broadcast %cst_272 : f32 to vector<22x128xf32>
    %303 = arith.subf %302, %301 : vector<22x128xf32>
    %304 = arith.mulf %300, %303 : vector<22x128xf32>
    %305 = arith.mulf %297, %304 : vector<22x128xf32>
    %cst_273 = arith.constant 2.000000e+00 : f32
    %306 = vector.broadcast %cst_273 : f32 to vector<22x128xf32>
    %307 = arith.mulf %306, %285 : vector<22x128xf32>
    %cst_274 = arith.constant 9.99999974E-5 : f32
    %308 = vector.broadcast %cst_274 : f32 to vector<22x128xf32>
    %309 = arith.addf %307, %308 : vector<22x128xf32>
    %310 = arith.addf %283, %284 : vector<22x128xf32>
    %cst_275 = arith.constant 9.99999974E-5 : f32
    %311 = vector.broadcast %cst_275 : f32 to vector<22x128xf32>
    %312 = arith.addf %310, %311 : vector<22x128xf32>
    %313 = tpu.reciprocal %312 {approx = true} : vector<22x128xf32> -> vector<22x128xf32>
    %314 = arith.mulf %312, %313 : vector<22x128xf32>
    %cst_276 = arith.constant 2.000000e+00 : f32
    %315 = vector.broadcast %cst_276 : f32 to vector<22x128xf32>
    %316 = arith.subf %315, %314 : vector<22x128xf32>
    %317 = arith.mulf %313, %316 : vector<22x128xf32>
    %318 = arith.mulf %309, %317 : vector<22x128xf32>
    %319 = arith.mulf %318, %305 : vector<22x128xf32>
    %320 = tpu.iota {dimensions = array<i32: 1>} : vector<22x128xi32>
    %c22_i32 = arith.constant 22 : i32
    %321 = vector.broadcast %c22_i32 : i32 to vector<22x128xi32>
    %322 = arith.cmpi slt, %320, %321 : vector<22x128xi32>
    %c0_277 = arith.constant 0 : index
    %c0_278 = arith.constant 0 : index
    %c0_279 = arith.constant 0 : index
    %c0_280 = arith.constant 0 : index
    %323 = vector.load %arg6[%c0_277, %c0_278, %c0_279, %c0_280] : memref<1x1x1x128xf32, #tpu.memory_space<vmem>>, vector<1x1x1x128xf32>
    %324 = vector.shape_cast %323 : vector<1x1x1x128xf32> to vector<1x128xf32>
    %cst_281 = arith.constant 0.000000e+00 : f32
    %325 = vector.broadcast %cst_281 : f32 to vector<22x128xf32>
    %326 = arith.select %322, %319, %325 : vector<22x128xi1>, vector<22x128xf32>
    %327 = vector.shape_cast %326 : vector<22x128xf32> to vector<1x22x128xf32>
    %cst_282 = arith.constant dense<0.000000e+00> : vector<1xf32>
    %328 = vector.multi_reduction <add>, %327, %cst_282 [1, 2] : vector<1x22x128xf32> to vector<1xf32>
    %329 = vector.shape_cast %328 : vector<1xf32> to vector<1x1x1xf32>
    %330 = vector.extract %329[0, 0, 0] : f32 from vector<1x1x1xf32>
    %331 = vector.broadcast %330 : f32 to vector<1x128xf32>
    %332 = arith.addf %324, %331 : vector<1x128xf32>
    %c0_283 = arith.constant 0 : index
    %c0_284 = arith.constant 0 : index
    %c0_285 = arith.constant 0 : index
    %c0_286 = arith.constant 0 : index
    %333 = vector.load %arg6[%c0_283, %c0_284, %c0_285, %c0_286] : memref<1x1x1x128xf32, #tpu.memory_space<vmem>>, vector<1x1x1x128xf32>
    %334 = vector.shape_cast %333 : vector<1x1x1x128xf32> to vector<1x128xf32>
    %335 = vector.shape_cast %332 : vector<1x128xf32> to vector<1x1x1x128xf32>
    tpu.vector_store %arg6[%c0_283, %c0_284, %c0_285, %c0_286], %335 {strides = array<i32>} : memref<1x1x1x128xf32, #tpu.memory_space<vmem>>, vector<1x1x1x128xf32>,
    %c0_i32_287 = arith.constant 0 : i32
    %336 = arith.cmpi eq, %arg2, %c0_i32_287 : i32
    %337 = arith.extui %336 : i1 to i32
    %c0_i32_288 = arith.constant 0 : i32
    %338 = arith.cmpi ne, %337, %c0_i32_288 : i32
    scf.if %338 {
      %c0_289 = arith.constant 0 : index
      %c0_290 = arith.constant 0 : index
      %c0_291 = arith.constant 0 : index
      %c0_292 = arith.constant 0 : index
      %339 = vector.load %arg6[%c0_289, %c0_290, %c0_291, %c0_292] : memref<1x1x1x128xf32, #tpu.memory_space<vmem>>, vector<1x1x1x128xf32>
      %340 = vector.shape_cast %339 : vector<1x1x1x128xf32> to vector<1x128xf32>
      %cst_293 = arith.constant 0.00206611562 : f32
      %341 = vector.broadcast %cst_293 : f32 to vector<1x128xf32>
      %342 = arith.mulf %340, %341 : vector<1x128xf32>
      %c0_294 = arith.constant 0 : index
      %c0_295 = arith.constant 0 : index
      %c0_296 = arith.constant 0 : index
      %c0_297 = arith.constant 0 : index
      %343 = vector.load %arg6[%c0_294, %c0_295, %c0_296, %c0_297] : memref<1x1x1x128xf32, #tpu.memory_space<vmem>>, vector<1x1x1x128xf32>
      %344 = vector.shape_cast %343 : vector<1x1x1x128xf32> to vector<1x128xf32>
      %345 = vector.shape_cast %342 : vector<1x128xf32> to vector<1x1x1x128xf32>
      tpu.vector_store %arg6[%c0_294, %c0_295, %c0_296, %c0_297], %345 {strides = array<i32>} : memref<1x1x1x128xf32, #tpu.memory_space<vmem>>, vector<1x1x1x128xf32>,
    } else {
    }
    return
  }
  func.func @transform_0(%arg0: i32, %arg1: i32, %arg2: i32) -> (i32, i32, i32, i32) {
    %c0_i32 = arith.constant 0 : i32
    %c0_i32_0 = arith.constant 0 : i32
    %c0_i32_1 = arith.constant 0 : i32
    return %arg0, %arg1, %c0_i32, %c0_i32_0 : i32, i32, i32, i32
  }
  func.func @transform_1(%arg0: i32, %arg1: i32, %arg2: i32) -> (i32, i32, i32, i32) {
    %c0_i32 = arith.constant 0 : i32
    %c0_i32_0 = arith.constant 0 : i32
    %c0_i32_1 = arith.constant 0 : i32
    return %arg0, %arg1, %c0_i32, %c0_i32_0 : i32, i32, i32, i32
  }
  func.func @transform_2(%arg0: i32, %arg1: i32, %arg2: i32) -> (i32, i32) {
    %c0_i32 = arith.constant 0 : i32
    %c0_i32_0 = arith.constant 0 : i32
    %c0_i32_1 = arith.constant 0 : i32
    return %c0_i32, %c0_i32_0 : i32, i32
  }
  func.func @transform_3(%arg0: i32, %arg1: i32, %arg2: i32) -> (i32, i32, i32, i32) {
    %c0_i32 = arith.constant 0 : i32
    %c0_i32_0 = arith.constant 0 : i32
    %c0_i32_1 = arith.constant 0 : i32
    return %arg0, %arg1, %c0_i32, %c0_i32_0 : i32, i32, i32, i32
  }
}

</mosaic_0001>

<llo_original>
// kernel: tpu_custom_call.1
$region0: #{tpu_custom_call.1}
  #allocation0 [shape = 'u32[]', space=smem, size = 0x4, offset = 0x4, fixed_abs, tag = 'smem constant byte address 0x4 - core index']
  #allocation1 [shape = 'u32[72,128]{1,0:T(1,128)}', space=vmem, size = 0x9000, scoped, tag = 'internal scratch']
  #allocation2 [shape = 'f32[32,138]{1,0:T(8,128)}', space=vmem, size = 0x8000, scoped, tag = 'scratch operand']
  #allocation3 [shape = 'f32[32,128]{1,0:T(8,128)}', space=vmem, size = 0x4000, scoped, tag = 'scratch operand']
  #allocation4 [shape = 'f32[22,128]{1,0:T(8,128)}', space=vmem, size = 0x3000, scoped, tag = 'scratch operand']
  #allocation5 [shape = 'f32[22,128]{1,0:T(8,128)}', space=vmem, size = 0x3000, scoped, tag = 'scratch operand']
  #allocation6 [shape = 'f32[22,128]{1,0:T(8,128)}', space=vmem, size = 0x3000, scoped, tag = 'scratch operand']
  #allocation7 [shape = 'f32[22,128]{1,0:T(8,128)}', space=vmem, size = 0x3000, scoped, tag = 'scratch operand']
  %s0 = inlined_call_operand.hbm [shape: f32[2,3,32,138], index: 0, kind: input, shape index: {}]
  %s1 = inlined_call_operand.hbm [shape: f32[2,3,32,138], index: 1, kind: input, shape index: {}]
  %s2 = inlined_call_operand.hbm [shape: f32[22,32], index: 2, kind: input, shape index: {}]
  %s3 = inlined_call_operand.hbm [shape: f32[2,3,1,128], index: 3, kind: output, shape index: {}]
  %s4 = sld [smem:[#allocation0]]
  $region65: #{tpu_custom_call.1} parent=0
    _
  %s6 = ssub.s32 1, %s4
  %s7 = scalar_select 0, %s6, %s4
  $region1: #{tpu_custom_call.1} parent=0
    #allocation8 [shape = 'u8[65536]{0}', space=vmem, size = 0x10000, scoped, tag = 'input window, operand 0']
    #allocation9 [shape = 's32[2]{0}', space=sflag, size = 0x8, scoped, tag = 'scoped memory for tpu_custom_call.1']
    #allocation10 [shape = 's32[2]{0}', space=sflag, size = 0x8, scoped, tag = 'scoped memory for tpu_custom_call.1']
    #allocation11 [shape = 'u8[65536]{0}', space=vmem, size = 0x10000, scoped, tag = 'input window, operand 1']
    #allocation12 [shape = 's32[2]{0}', space=sflag, size = 0x8, scoped, tag = 'scoped memory for tpu_custom_call.1']
    #allocation13 [shape = 'u8[12288]{0}', space=vmem, size = 0x3000, scoped, tag = 'input window, operand 2, single buffered']
    #allocation14 [shape = 'u8[1024]{0}', space=vmem, size = 0x400, scoped, tag = 'output window, operand 0']
    %8 = vsyncpa [#allocation9], 0
    %s9 = scalar_lea.sflag [#allocation9], 1
    %10 = vsyncpa %s9, 0
    %11 = vsyncpa [#allocation12], 0
    %s12 = scalar_lea.sflag [#allocation12], 1
    %13 = vsyncpa %s12, 0
    %14 = vsyncpa [#allocation10], 0
    %s15 = scalar_lea.sflag [#allocation10], 1
    %16 = vsyncpa %s15, 0
    loop: start=0, step=1, limit=8
    $region2: #{tpu_custom_call.1} parent=1 // loop_pre_header
      _
    $region3: #{tpu_custom_call.1} parent=1 // loop_header
      %s18 = sphi 0, %s22
      %p19 = scmp.ge.s32.totalorder %s18, 8
      %s25 = sphi 0, %s44
      %s26 = sphi 0, %s40
      %s27 = sphi 0, %s36
      %s28 = sphi 0, %s25
      %s29 = sphi 0, %s26
      %s30 = sphi 0, %s27
      %s31 = sphi 0, %s28
      %s32 = sphi 0, %s29
      %s33 = sphi 0, %s30
      %s49 = sphi 0, %s51
      %s52 = sphi 0, %s49
      %s53 = sphi 0, %s52
      %s69 = sphi 0, %s53
      %s77 = sphi 0, %s79
      %s80 = sphi 0, %s77
      %s81 = sphi 0, %s80
      %s97 = sphi 0, %s81
      %s101 = sphi 0, %s101
      %s103 = sphi 0, %s101
      %s104 = sphi 0, %s103
      %s118 = sphi 0, %s104
      %s126 = sphi 0, %s128
      %s129 = sphi 0, %s126
      %s130 = sphi 0, %s129
      %s146 = sphi 0, %s130
    $region4: #{tpu_custom_call.1} parent=1 // loop_header_branch
      %21 = sbr.rel (%p19) target = $region8
    $region5: #{tpu_custom_call.1} parent=1 // loop_body
      %s23 = ssub.s32 %s18, 1
      %s24 = ssub.s32 %s18, 2
      %s34 = sadd.s32 1, %s27
      %p35 = scmp.ge.s32.totalorder %s34, 1
      %s36 = scalar_select %p35, 0, %s34
      %s37 = sadd.s32 1, %s26
      %s38 = scalar_select %p35, %s37, %s26
      %p39 = scmp.ge.s32.totalorder %s38, 3
      %s40 = scalar_select %p39, 0, %s38
      %s41 = sadd.s32 1, %s25
      %s42 = scalar_select %p39, %s41, %s25
      %p43 = scmp.ge.s32.totalorder %s42, 2
      %s44 = scalar_select %p43, 0, %s42
      %s45 = ssub.s32 %s25, %s44
      %s46 = ssub.s32 %s26, %s40
      %s47 = sor.u32 %s45, %s46
      %p48 = scmp.eq.s32.totalorder %s47, 0
      %s50 = sadd.s32 %s49, 1
      %s51 = scalar_select %p48, %s49, %s50
      %p54 = pneg %p48
      %p55 = scmp.eq.s32.totalorder %s18, 5
      %p56 = por %p54, %p55
      %p57 = scmp.ne.s32.totalorder %s49, %s52
      %p58 = scmp.eq.s32.totalorder %s18, 0
      %p59 = por %p57, %p58
      %p60 = scmp.ne.s32.totalorder %s49, %s52
      %p61 = scmp.eq.s32.totalorder %s23, 5
      %p62 = por %p60, %p61
      %p63 = scmp.ne.s32.totalorder %s52, %s53
      %p64 = scmp.eq.s32.totalorder %s23, 0
      %p65 = por %p63, %p64
      %p66 = scmp.ne.s32.totalorder %s52, %s53
      %p67 = scmp.eq.s32.totalorder %s24, 5
      %p68 = por %p66, %p67
      %p70 = scmp.ne.s32.totalorder %s53, %s69
      %p71 = scmp.eq.s32.totalorder %s24, 0
      %p72 = por %p70, %p71
      %s73 = ssub.s32 %s25, %s44
      %s74 = ssub.s32 %s26, %s40
      %s75 = sor.u32 %s73, %s74
      %p76 = scmp.eq.s32.totalorder %s75, 0
      %s78 = sadd.s32 %s77, 1
      %s79 = scalar_select %p76, %s77, %s78
      %p82 = pneg %p76
      %p83 = scmp.eq.s32.totalorder %s18, 5
      %p84 = por %p82, %p83
      %p85 = scmp.ne.s32.totalorder %s77, %s80
      %p86 = scmp.eq.s32.totalorder %s18, 0
      %p87 = por %p85, %p86
      %p88 = scmp.ne.s32.totalorder %s77, %s80
      %p89 = scmp.eq.s32.totalorder %s23, 5
      %p90 = por %p88, %p89
      %p91 = scmp.ne.s32.totalorder %s80, %s81
      %p92 = scmp.eq.s32.totalorder %s23, 0
      %p93 = por %p91, %p92
      %p94 = scmp.ne.s32.totalorder %s80, %s81
      %p95 = scmp.eq.s32.totalorder %s24, 5
      %p96 = por %p94, %p95
      %p98 = scmp.ne.s32.totalorder %s81, %s97
      %p99 = scmp.eq.s32.totalorder %s24, 0
      %p100 = por %p98, %p99
      %s102 = sadd.s32 %s101, 1
      %p105 = scmp.eq.s32.totalorder %s18, 5
      %p106 = scmp.ne.s32.totalorder %s101, %s103
      %p107 = scmp.eq.s32.totalorder %s18, 0
      %p108 = por %p106, %p107
      %p109 = scmp.ne.s32.totalorder %s101, %s103
      %p110 = scmp.eq.s32.totalorder %s23, 5
      %p111 = por %p109, %p110
      %p112 = scmp.ne.s32.totalorder %s103, %s104
      %p113 = scmp.eq.s32.totalorder %s23, 0
      %p114 = por %p112, %p113
      %p115 = scmp.ne.s32.totalorder %s103, %s104
      %p116 = scmp.eq.s32.totalorder %s24, 5
      %p117 = por %p115, %p116
      %p119 = scmp.ne.s32.totalorder %s104, %s118
      %p120 = scmp.eq.s32.totalorder %s24, 0
      %p121 = por %p119, %p120
      %s122 = ssub.s32 %s25, %s44
      %s123 = ssub.s32 %s26, %s40
      %s124 = sor.u32 %s122, %s123
      %p125 = scmp.eq.s32.totalorder %s124, 0
      %s127 = sadd.s32 %s126, 1
      %s128 = scalar_select %p125, %s126, %s127
      %p131 = pneg %p125
      %p132 = scmp.eq.s32.totalorder %s18, 5
      %p133 = por %p131, %p132
      %p134 = scmp.ne.s32.totalorder %s126, %s129
      %p135 = scmp.eq.s32.totalorder %s18, 0
      %p136 = por %p134, %p135
      %p137 = scmp.ne.s32.totalorder %s126, %s129
      %p138 = scmp.eq.s32.totalorder %s23, 5
      %p139 = por %p137, %p138
      %p140 = scmp.ne.s32.totalorder %s129, %s130
      %p141 = scmp.eq.s32.totalorder %s23, 0
      %p142 = por %p140, %p141
      %p143 = scmp.ne.s32.totalorder %s129, %s130
      %p144 = scmp.eq.s32.totalorder %s24, 5
      %p145 = por %p143, %p144
      %p147 = scmp.ne.s32.totalorder %s130, %s146
      %p148 = scmp.eq.s32.totalorder %s24, 0
      %p149 = por %p147, %p148
      %p150 = scmp.le.s32.totalorder 1, %s18
      %p151 = scmp.lt.s32.totalorder %s18, 7
      %p152 = pnand %p150, %p151
      %p153 = pneg %p152
      // Predicated region
      $region9: #{tpu_custom_call.1} parent=5 // pred_check
        _
      $region10: #{tpu_custom_call.1} parent=5 // pred_check_branch
        %155 = sbr.rel (%p152) target = $region12
      $region11: #{tpu_custom_call.1} parent=5 // pred_region
        %s156 = ssub.s32 %s18, 1
        // Predicated region
        $region13: #{tpu_custom_call.1} parent=11 // pred_check
          %p157 = pneg %p114
        $region14: #{tpu_custom_call.1} parent=11 // pred_check_branch
          %159 = sbr.rel (%p157) target = $region16
        $region15: #{tpu_custom_call.1} parent=11 // pred_region
          %161 = vsyncadd [#allocation12], 0
          %s162 = sshll.u32 %s2, 4
          %s163 = int_to_ptr.hbm [resolvable:$true] %s162
          %s164 = sshll.u32 [#allocation13], 4
          %s165 = int_to_ptr.vmem [resolvable:$true] %s164
          %170 = dma.hbm_to_vmem [thread:$0]  %s163, 384, %s165, [#allocation12], 128, 128, 8
        $region16: #{tpu_custom_call.1} parent=11 // pred_fallthru
          _
      $region12: #{tpu_custom_call.1} parent=5 // pred_fallthru
        _
      %p171 = scmp.lt.s32.totalorder %s18, 6
      // Predicated region
      $region17: #{tpu_custom_call.1} parent=5 // pred_check
        %p172 = pneg %p171
      $region18: #{tpu_custom_call.1} parent=5 // pred_check_branch
        %174 = sbr.rel (%p172) target = $region20
      $region19: #{tpu_custom_call.1} parent=5 // pred_region
        // Predicated region
        $region21: #{tpu_custom_call.1} parent=19 // pred_check
          %p175 = pneg %p59
        $region22: #{tpu_custom_call.1} parent=19 // pred_check_branch
          %177 = sbr.rel (%p175) target = $region24
        $region23: #{tpu_custom_call.1} parent=19 // pred_region
          %s178 = sand.u32 %s49, 1
          %s179 = scalar_lea.sflag [#allocation9], %s178
          %s180 = sand.u32 %s49, 1
          %s181 = smul.addr %s180, 64
          %s182 = scalar_lea.vmem [#allocation8], %s181
          %184 = vsyncadd %s179, 0
          %s185 = smul.addr %s26, 8
          %s186 = smul.addr %s25, 24
          %s187 = sadd.s32 %s185, %s186
          %s188 = smul.addr %s187, 8
          %s189 = scalar_lea.hbm %s0, %s188
          %s190 = sshll.u32 %s189, 4
          %s191 = int_to_ptr.hbm [resolvable:$true] %s190
          %s192 = sshll.u32 %s182, 4
          %s193 = int_to_ptr.vmem [resolvable:$true] %s192
          %198 = dma.hbm_to_vmem [thread:$0]  %s191, 1024, %s193, %s179, 256, 256, 16
        $region24: #{tpu_custom_call.1} parent=19 // pred_fallthru
          _
        // Predicated region
        $region25: #{tpu_custom_call.1} parent=19 // pred_check
          %p199 = pneg %p87
        $region26: #{tpu_custom_call.1} parent=19 // pred_check_branch
          %201 = sbr.rel (%p199) target = $region28
        $region27: #{tpu_custom_call.1} parent=19 // pred_region
          %s202 = sand.u32 %s18, 1
          %s203 = scalar_lea.sflag [#allocation12], %s202
          %s204 = sand.u32 %s77, 1
          %s205 = smul.addr %s204, 64
          %s206 = scalar_lea.vmem [#allocation11], %s205
          %208 = vsyncadd %s203, 0
          %s209 = smul.addr %s26, 8
          %s210 = smul.addr %s25, 24
          %s211 = sadd.s32 %s209, %s210
          %s212 = smul.addr %s211, 8
          %s213 = scalar_lea.hbm %s1, %s212
          %s214 = sshll.u32 %s213, 4
          %s215 = int_to_ptr.hbm [resolvable:$true] %s214
          %s216 = sshll.u32 %s206, 4
          %s217 = int_to_ptr.vmem [resolvable:$true] %s216
          %222 = dma.hbm_to_vmem [thread:$0]  %s215, 1024, %s217, %s203, 256, 256, 16
        $region28: #{tpu_custom_call.1} parent=19 // pred_fallthru
          _
      $region20: #{tpu_custom_call.1} parent=5 // pred_fallthru
        _
      %p223 = scmp.le.s32.totalorder 1, %s18
      %p224 = scmp.lt.s32.totalorder %s18, 7
      %p225 = pnand %p223, %p224
      %p226 = pneg %p225
      // Predicated region
      $region29: #{tpu_custom_call.1} parent=5 // pred_check
        _
      $region30: #{tpu_custom_call.1} parent=5 // pred_check_branch
        %228 = sbr.rel (%p225) target = $region32
      $region31: #{tpu_custom_call.1} parent=5 // pred_region
        %s229 = ssub.s32 %s18, 1
        %s230 = sand.u32 %s52, 1
        %s231 = scalar_lea.sflag [#allocation9], %s230
        %s232 = sand.u32 %s52, 1
        %s233 = smul.addr %s232, 64
        %s234 = scalar_lea.vmem [#allocation8], %s233
        // Predicated region
        $region33: #{tpu_custom_call.1} parent=31 // pred_check
          %p235 = pneg %p65
        $region34: #{tpu_custom_call.1} parent=31 // pred_check_branch
          %237 = sbr.rel (%p235) target = $region36
        $region35: #{tpu_custom_call.1} parent=31 // pred_region
          %239 = dma.done %s231, 1024
        $region36: #{tpu_custom_call.1} parent=31 // pred_fallthru
          _
        %s240 = sand.u32 %s23, 1
        %s241 = scalar_lea.sflag [#allocation12], %s240
        %s242 = sand.u32 %s80, 1
        %s243 = smul.addr %s242, 64
        %s244 = scalar_lea.vmem [#allocation11], %s243
        // Predicated region
        $region37: #{tpu_custom_call.1} parent=31 // pred_check
          %p245 = pneg %p93
        $region38: #{tpu_custom_call.1} parent=31 // pred_check_branch
          %247 = sbr.rel (%p245) target = $region40
        $region39: #{tpu_custom_call.1} parent=31 // pred_region
          %249 = dma.done %s241, 1024
        $region40: #{tpu_custom_call.1} parent=31 // pred_fallthru
          _
        // Predicated region
        $region41: #{tpu_custom_call.1} parent=31 // pred_check
          %p250 = pneg %p114
        $region42: #{tpu_custom_call.1} parent=31 // pred_check_branch
          %252 = sbr.rel (%p250) target = $region44
        $region43: #{tpu_custom_call.1} parent=31 // pred_region
          %254 = dma.done [#allocation12], 384
        $region44: #{tpu_custom_call.1} parent=31 // pred_fallthru
          _
        %s255 = sand.u32 %s52, 1
        %s256 = scalar_lea.sflag [#allocation9], %s255
        %s257 = sand.u32 %s52, 1
        %s258 = smul.addr %s257, 64
        %s259 = scalar_lea.vmem [#allocation8], %s258
        %p260 = pneg %p65
        %p261 = pneg %p62
        %s262 = sand.u32 %s23, 1
        %s263 = scalar_lea.sflag [#allocation12], %s262
        %s264 = sand.u32 %s80, 1
        %s265 = smul.addr %s264, 64
        %s266 = scalar_lea.vmem [#allocation11], %s265
        %p267 = pneg %p93
        %p268 = pneg %p90
        %p269 = pneg %p114
        %p270 = pneg %p111
        %p271 = pneg %p142
        %p272 = pneg %p139
        %s273 = sand.u32 %s129, 1
        %s274 = scalar_lea.sflag [#allocation10], %s273
        %s275 = sand.u32 %s129, 1
        %s276 = scalar_lea.vmem [#allocation14], %s275
        %p277 = scmp.eq.s32.totalorder %s30, 0
        // Predicated region
        $region45: #{tpu_custom_call.1} parent=31 // pred_check
          %p278 = pneg %p277
        $region46: #{tpu_custom_call.1} parent=31 // pred_check_branch
          %280 = sbr.rel (%p278) target = $region48
        $region47: #{tpu_custom_call.1} parent=31 // pred_region
          %281 = vst [vmem:[%s276] sm:$0x1] 0.0
        $region48: #{tpu_custom_call.1} parent=31 // pred_fallthru
          _
        %v282 = vld [vmem:[#allocation13] sm:$0xff]
        %v283 = vld [vmem:[#allocation13 + $0x8] sm:$0xff]
        %v284 = vld [vmem:[#allocation13 + $0x10] sm:$0x3f]
        %v285 = vld [vmem:[%s234] sm:$0xff]
        %v286 = vld [vmem:[%s234 + $0x10] sm:$0xff]
        %v287 = vld [vmem:[%s234 + $0x20] sm:$0xff]
        %v288 = vld [vmem:[%s234 + $0x30] sm:$0xff]
        %v289 = vmul.f32 %v285, 0.0010283801
        %v290 = vmul.f32 %v286, 0.0010283801
        %v291 = vmul.f32 %v287, 0.0010283801
        %v292 = vmul.f32 %v288, 0.0010283801
        %v293 = vld [vmem:[%s234 + $0x8] sm:$0xff]
        %v294 = vld [vmem:[%s234 + $0x18] sm:$0xff]
        %v295 = vld [vmem:[%s234 + $0x28] sm:$0xff]
        %v296 = vld [vmem:[%s234 + $0x38] sm:$0xff]
        %v297 = vmul.f32 %v285, 0.007598758
        %v298 = vmul.f32 %v293, 0.007598758
        %v299 = vmul.f32 %v286, 0.007598758
        %v300 = vmul.f32 %v294, 0.007598758
        %v301 = vmul.f32 %v287, 0.007598758
        %v302 = vmul.f32 %v295, 0.007598758
        %v303 = vmul.f32 %v288, 0.007598758
        %v304 = vmul.f32 %v296, 0.007598758
        %313 = vrot.lane.b32.xlu0 %v297, 127
        %v314 = vpop.permute.xlu0 %313
        %315 = vrot.lane.b32.xlu0 %v298, 127
        %v316 = vpop.permute.xlu0 %315
        %317 = vrot.lane.b32.xlu0 %v299, 127
        %v318 = vpop.permute.xlu0 %317
        %319 = vrot.lane.b32.xlu0 %v300, 127
        %v320 = vpop.permute.xlu0 %319
        %321 = vrot.lane.b32.xlu0 %v301, 127
        %v322 = vpop.permute.xlu0 %321
        %323 = vrot.lane.b32.xlu0 %v302, 127
        %v324 = vpop.permute.xlu0 %323
        %325 = vrot.lane.b32.xlu0 %v303, 127
        %v326 = vpop.permute.xlu0 %325
        %327 = vrot.lane.b32.xlu0 %v304, 127
        %v328 = vpop.permute.xlu0 %327
        %vm329 = vcmask 1039360
        %v330 = vsel %vm329, %v314, %v316
        %v331 = vsel %vm329, %v318, %v320
        %v332 = vsel %vm329, %v322, %v324
        %v333 = vsel %vm329, %v326, %v328
        %v338 = vadd.f32 %v289, %v330
        %v339 = vadd.f32 %v290, %v331
        %v340 = vadd.f32 %v291, %v332
        %v341 = vadd.f32 %v292, %v333
        %v342 = vmul.f32 %v285, 0.036000773
        %v343 = vmul.f32 %v293, 0.036000773
        %v344 = vmul.f32 %v286, 0.036000773
        %v345 = vmul.f32 %v294, 0.036000773
        %v346 = vmul.f32 %v287, 0.036000773
        %v347 = vmul.f32 %v295, 0.036000773
        %v348 = vmul.f32 %v288, 0.036000773
        %v349 = vmul.f32 %v296, 0.036000773
        %358 = vrot.lane.b32.xlu0 %v342, 126
        %v359 = vpop.permute.xlu0 %358
        %360 = vrot.lane.b32.xlu0 %v343, 126
        %v361 = vpop.permute.xlu0 %360
        %362 = vrot.lane.b32.xlu0 %v344, 126
        %v363 = vpop.permute.xlu0 %362
        %364 = vrot.lane.b32.xlu0 %v345, 126
        %v365 = vpop.permute.xlu0 %364
        %366 = vrot.lane.b32.xlu0 %v346, 126
        %v367 = vpop.permute.xlu0 %366
        %368 = vrot.lane.b32.xlu0 %v347, 126
        %v369 = vpop.permute.xlu0 %368
        %370 = vrot.lane.b32.xlu0 %v348, 126
        %v371 = vpop.permute.xlu0 %370
        %372 = vrot.lane.b32.xlu0 %v349, 126
        %v373 = vpop.permute.xlu0 %372
        %vm374 = vcmask 1031168
        %v375 = vsel %vm374, %v359, %v361
        %v376 = vsel %vm374, %v363, %v365
        %v377 = vsel %vm374, %v367, %v369
        %v378 = vsel %vm374, %v371, %v373
        %v383 = vadd.f32 %v338, %v375
        %v384 = vadd.f32 %v339, %v376
        %v385 = vadd.f32 %v340, %v377
        %v386 = vadd.f32 %v341, %v378
        %v387 = vmul.f32 %v285, 0.10936069
        %v388 = vmul.f32 %v293, 0.10936069
        %v389 = vmul.f32 %v286, 0.10936069
        %v390 = vmul.f32 %v294, 0.10936069
        %v391 = vmul.f32 %v287, 0.10936069
        %v392 = vmul.f32 %v295, 0.10936069
        %v393 = vmul.f32 %v288, 0.10936069
        %v394 = vmul.f32 %v296, 0.10936069
        %403 = vrot.lane.b32.xlu0 %v387, 125
        %v404 = vpop.permute.xlu0 %403
        %405 = vrot.lane.b32.xlu0 %v388, 125
        %v406 = vpop.permute.xlu0 %405
        %407 = vrot.lane.b32.xlu0 %v389, 125
        %v408 = vpop.permute.xlu0 %407
        %409 = vrot.lane.b32.xlu0 %v390, 125
        %v410 = vpop.permute.xlu0 %409
        %411 = vrot.lane.b32.xlu0 %v391, 125
        %v412 = vpop.permute.xlu0 %411
        %413 = vrot.lane.b32.xlu0 %v392, 125
        %v414 = vpop.permute.xlu0 %413
        %415 = vrot.lane.b32.xlu0 %v393, 125
        %v416 = vpop.permute.xlu0 %415
        %417 = vrot.lane.b32.xlu0 %v394, 125
        %v418 = vpop.permute.xlu0 %417
        %vm419 = vcmask 1022976
        %v420 = vsel %vm419, %v404, %v406
        %v421 = vsel %vm419, %v408, %v410
        %v422 = vsel %vm419, %v412, %v414
        %v423 = vsel %vm419, %v416, %v418
        %v428 = vadd.f32 %v383, %v420
        %v429 = vadd.f32 %v384, %v421
        %v430 = vadd.f32 %v385, %v422
        %v431 = vadd.f32 %v386, %v423
        %v432 = vmul.f32 %v285, 0.21300554
        %v433 = vmul.f32 %v293, 0.21300554
        %v434 = vmul.f32 %v286, 0.21300554
        %v435 = vmul.f32 %v294, 0.21300554
        %v436 = vmul.f32 %v287, 0.21300554
        %v437 = vmul.f32 %v295, 0.21300554
        %v438 = vmul.f32 %v288, 0.21300554
        %v439 = vmul.f32 %v296, 0.21300554
        %448 = vrot.lane.b32.xlu0 %v432, 124
        %v449 = vpop.permute.xlu0 %448
        %450 = vrot.lane.b32.xlu0 %v433, 124
        %v451 = vpop.permute.xlu0 %450
        %452 = vrot.lane.b32.xlu0 %v434, 124
        %v453 = vpop.permute.xlu0 %452
        %454 = vrot.lane.b32.xlu0 %v435, 124
        %v455 = vpop.permute.xlu0 %454
        %456 = vrot.lane.b32.xlu0 %v436, 124
        %v457 = vpop.permute.xlu0 %456
        %458 = vrot.lane.b32.xlu0 %v437, 124
        %v459 = vpop.permute.xlu0 %458
        %460 = vrot.lane.b32.xlu0 %v438, 124
        %v461 = vpop.permute.xlu0 %460
        %462 = vrot.lane.b32.xlu0 %v439, 124
        %v463 = vpop.permute.xlu0 %462
        %vm464 = vcmask 1014784
        %v465 = vsel %vm464, %v449, %v451
        %v466 = vsel %vm464, %v453, %v455
        %v467 = vsel %vm464, %v457, %v459
        %v468 = vsel %vm464, %v461, %v463
        %v473 = vadd.f32 %v428, %v465
        %v474 = vadd.f32 %v429, %v466
        %v475 = vadd.f32 %v430, %v467
        %v476 = vadd.f32 %v431, %v468
        %v477 = vmul.f32 %v285, 0.26601171
        %v478 = vmul.f32 %v293, 0.26601171
        %v479 = vmul.f32 %v286, 0.26601171
        %v480 = vmul.f32 %v294, 0.26601171
        %v481 = vmul.f32 %v287, 0.26601171
        %v482 = vmul.f32 %v295, 0.26601171
        %v483 = vmul.f32 %v288, 0.26601171
        %v484 = vmul.f32 %v296, 0.26601171
        %493 = vrot.lane.b32.xlu0 %v477, 123
        %v494 = vpop.permute.xlu0 %493
        %495 = vrot.lane.b32.xlu0 %v478, 123
        %v496 = vpop.permute.xlu0 %495
        %497 = vrot.lane.b32.xlu0 %v479, 123
        %v498 = vpop.permute.xlu0 %497
        %499 = vrot.lane.b32.xlu0 %v480, 123
        %v500 = vpop.permute.xlu0 %499
        %501 = vrot.lane.b32.xlu0 %v481, 123
        %v502 = vpop.permute.xlu0 %501
        %503 = vrot.lane.b32.xlu0 %v482, 123
        %v504 = vpop.permute.xlu0 %503
        %505 = vrot.lane.b32.xlu0 %v483, 123
        %v506 = vpop.permute.xlu0 %505
        %507 = vrot.lane.b32.xlu0 %v484, 123
        %v508 = vpop.permute.xlu0 %507
        %vm509 = vcmask 1006592
        %v510 = vsel %vm509, %v494, %v496
        %v511 = vsel %vm509, %v498, %v500
        %v512 = vsel %vm509, %v502, %v504
        %v513 = vsel %vm509, %v506, %v508
        %v518 = vadd.f32 %v473, %v510
        %v519 = vadd.f32 %v474, %v511
        %v520 = vadd.f32 %v475, %v512
        %v521 = vadd.f32 %v476, %v513
        %522 = vrot.lane.b32.xlu0 %v432, 122
        %v523 = vpop.permute.xlu0 %522
        %524 = vrot.lane.b32.xlu0 %v433, 122
        %v525 = vpop.permute.xlu0 %524
        %526 = vrot.lane.b32.xlu0 %v434, 122
        %v527 = vpop.permute.xlu0 %526
        %528 = vrot.lane.b32.xlu0 %v435, 122
        %v529 = vpop.permute.xlu0 %528
        %530 = vrot.lane.b32.xlu0 %v436, 122
        %v531 = vpop.permute.xlu0 %530
        %532 = vrot.lane.b32.xlu0 %v437, 122
        %v533 = vpop.permute.xlu0 %532
        %534 = vrot.lane.b32.xlu0 %v438, 122
        %v535 = vpop.permute.xlu0 %534
        %536 = vrot.lane.b32.xlu0 %v439, 122
        %v537 = vpop.permute.xlu0 %536
        %vm538 = vcmask 998400
        %v539 = vsel %vm538, %v523, %v525
        %v540 = vsel %vm538, %v527, %v529
        %v541 = vsel %vm538, %v531, %v533
        %v542 = vsel %vm538, %v535, %v537
        %v547 = vadd.f32 %v518, %v539
        %v548 = vadd.f32 %v519, %v540
        %v549 = vadd.f32 %v520, %v541
        %v550 = vadd.f32 %v521, %v542
        %551 = vrot.lane.b32.xlu0 %v387, 121
        %v552 = vpop.permute.xlu0 %551
        %553 = vrot.lane.b32.xlu0 %v388, 121
        %v554 = vpop.permute.xlu0 %553
        %555 = vrot.lane.b32.xlu0 %v389, 121
        %v556 = vpop.permute.xlu0 %555
        %557 = vrot.lane.b32.xlu0 %v390, 121
        %v558 = vpop.permute.xlu0 %557
        %559 = vrot.lane.b32.xlu0 %v391, 121
        %v560 = vpop.permute.xlu0 %559
        %561 = vrot.lane.b32.xlu0 %v392, 121
        %v562 = vpop.permute.xlu0 %561
        %563 = vrot.lane.b32.xlu0 %v393, 121
        %v564 = vpop.permute.xlu0 %563
        %565 = vrot.lane.b32.xlu0 %v394, 121
        %v566 = vpop.permute.xlu0 %565
        %vm567 = vcmask 990208
        %v568 = vsel %vm567, %v552, %v554
        %v569 = vsel %vm567, %v556, %v558
        %v570 = vsel %vm567, %v560, %v562
        %v571 = vsel %vm567, %v564, %v566
        %v576 = vadd.f32 %v547, %v568
        %v577 = vadd.f32 %v548, %v569
        %v578 = vadd.f32 %v549, %v570
        %v579 = vadd.f32 %v550, %v571
        %580 = vrot.lane.b32.xlu0 %v342, 120
        %v581 = vpop.permute.xlu0 %580
        %582 = vrot.lane.b32.xlu0 %v343, 120
        %v583 = vpop.permute.xlu0 %582
        %584 = vrot.lane.b32.xlu0 %v344, 120
        %v585 = vpop.permute.xlu0 %584
        %586 = vrot.lane.b32.xlu0 %v345, 120
        %v587 = vpop.permute.xlu0 %586
        %588 = vrot.lane.b32.xlu0 %v346, 120
        %v589 = vpop.permute.xlu0 %588
        %590 = vrot.lane.b32.xlu0 %v347, 120
        %v591 = vpop.permute.xlu0 %590
        %592 = vrot.lane.b32.xlu0 %v348, 120
        %v593 = vpop.permute.xlu0 %592
        %594 = vrot.lane.b32.xlu0 %v349, 120
        %v595 = vpop.permute.xlu0 %594
        %vm596 = vcmask 982016
        %v597 = vsel %vm596, %v581, %v583
        %v598 = vsel %vm596, %v585, %v587
        %v599 = vsel %vm596, %v589, %v591
        %v600 = vsel %vm596, %v593, %v595
        %v605 = vadd.f32 %v576, %v597
        %v606 = vadd.f32 %v577, %v598
        %v607 = vadd.f32 %v578, %v599
        %v608 = vadd.f32 %v579, %v600
        %609 = vrot.lane.b32.xlu0 %v297, 119
        %v610 = vpop.permute.xlu0 %609
        %611 = vrot.lane.b32.xlu0 %v298, 119
        %v612 = vpop.permute.xlu0 %611
        %613 = vrot.lane.b32.xlu0 %v299, 119
        %v614 = vpop.permute.xlu0 %613
        %615 = vrot.lane.b32.xlu0 %v300, 119
        %v616 = vpop.permute.xlu0 %615
        %617 = vrot.lane.b32.xlu0 %v301, 119
        %v618 = vpop.permute.xlu0 %617
        %619 = vrot.lane.b32.xlu0 %v302, 119
        %v620 = vpop.permute.xlu0 %619
        %621 = vrot.lane.b32.xlu0 %v303, 119
        %v622 = vpop.permute.xlu0 %621
        %623 = vrot.lane.b32.xlu0 %v304, 119
        %v624 = vpop.permute.xlu0 %623
        %vm625 = vcmask 973824
        %v626 = vsel %vm625, %v610, %v612
        %v627 = vsel %vm625, %v614, %v616
        %v628 = vsel %vm625, %v618, %v620
        %v629 = vsel %vm625, %v622, %v624
        %v634 = vadd.f32 %v605, %v626
        %v635 = vadd.f32 %v606, %v627
        %v636 = vadd.f32 %v607, %v628
        %v637 = vadd.f32 %v608, %v629
        %v638 = vmul.f32 %v293, 0.0010283801
        %v639 = vmul.f32 %v294, 0.0010283801
        %v640 = vmul.f32 %v295, 0.0010283801
        %v641 = vmul.f32 %v296, 0.0010283801
        %650 = vrot.lane.b32.xlu0 %v289, 118
        %v651 = vpop.permute.xlu0 %650
        %652 = vrot.lane.b32.xlu0 %v638, 118
        %v653 = vpop.permute.xlu0 %652
        %654 = vrot.lane.b32.xlu0 %v290, 118
        %v655 = vpop.permute.xlu0 %654
        %656 = vrot.lane.b32.xlu0 %v639, 118
        %v657 = vpop.permute.xlu0 %656
        %658 = vrot.lane.b32.xlu0 %v291, 118
        %v659 = vpop.permute.xlu0 %658
        %660 = vrot.lane.b32.xlu0 %v640, 118
        %v661 = vpop.permute.xlu0 %660
        %662 = vrot.lane.b32.xlu0 %v292, 118
        %v663 = vpop.permute.xlu0 %662
        %664 = vrot.lane.b32.xlu0 %v641, 118
        %v665 = vpop.permute.xlu0 %664
        %vm666 = vcmask 965632
        %v667 = vsel %vm666, %v651, %v653
        %v668 = vsel %vm666, %v655, %v657
        %v669 = vsel %vm666, %v659, %v661
        %v670 = vsel %vm666, %v663, %v665
        %v675 = vadd.f32 %v634, %v667
        %v676 = vadd.f32 %v635, %v668
        %v677 = vadd.f32 %v636, %v669
        %v678 = vadd.f32 %v637, %v670
        %679 = vst [vmem:[#allocation3] sm:$0xff] %v675
        %680 = vst [vmem:[#allocation3 + $0x8] sm:$0xff] %v676
        %681 = vst [vmem:[#allocation3 + $0x10] sm:$0xff] %v677
        %682 = vst [vmem:[#allocation3 + $0x18] sm:$0xff] %v678
        %v683 = vld [vmem:[#allocation3] sm:$0xff]
        %v684 = vld [vmem:[#allocation3 + $0x8] sm:$0xff]
        %v685 = vld [vmem:[#allocation3 + $0x10] sm:$0xff]
        %v686 = vld [vmem:[#allocation3 + $0x18] sm:$0xff]
        %vm687 = vcmask 261120
        %v689 = vsel %vm687, %v282, 0
        %v692 = vsel %vm687, %v283, 0
        %v695 = vsel %vm687, %v284, 0
        %697 = vmatpush.msra.mxu0 0.0
        %698 = vmatpush.msra.mxu0 0.0
        %699 = vmatpush.msra.mxu0 0.0
        %700 = vmatpush.msra.mxu0 0.0
        %701 = vmatpush.msra.mxu0 0.0
        %702 = vmatpush.msra.mxu0 0.0
        %703 = vmatpush.msra.mxu0 0.0
        %704 = vmatpush.msra.mxu0 0.0
        %705 = vmatpush.msra.mxu0 0.0
        %706 = vmatpush.msra.mxu0 0.0
        %707 = vmatpush.msra.mxu0 0.0
        %708 = vmatpush.msra.mxu0 0.0
        %709 = vmatpush.msra.mxu0 %v686
        %710 = vmatpush.msra.mxu0 %v685
        %711 = vmatpush.msra.mxu0 %v684
        %712 = vmatpush.msra.mxu0 %v683
        %713 = vmatmul.f32.gmra.mxu0 %v689
        %v714 = vpop.f32.mrf.mxu0
        %v715 = vadd.f32 0.0, %v714
        %716 = vmatmul.f32.gmra.mxu0 %v692
        %v717 = vpop.f32.mrf.mxu0
        %v718 = vadd.f32 0.0, %v717
        %719 = vmatmul.f32.gmra.mxu0 %v695
        %v720 = vpop.f32.mrf.mxu0
        %v721 = vadd.f32 0.0, %v720
        %722 = vdwg.mxu0
        %723 = vst [vmem:[#allocation4] sm:$0xff] %v715
        %724 = vst [vmem:[#allocation4 + $0x8] sm:$0xff] %v718
        %725 = vst [vmem:[#allocation4 + $0x10] sm:$0x3f] %v721
        %v726 = vld [vmem:[%s244] sm:$0xff]
        %v727 = vld [vmem:[%s244 + $0x10] sm:$0xff]
        %v728 = vld [vmem:[%s244 + $0x20] sm:$0xff]
        %v729 = vld [vmem:[%s244 + $0x30] sm:$0xff]
        %v730 = vmul.f32 %v726, 0.0010283801
        %v731 = vmul.f32 %v727, 0.0010283801
        %v732 = vmul.f32 %v728, 0.0010283801
        %v733 = vmul.f32 %v729, 0.0010283801
        %v734 = vld [vmem:[%s244 + $0x8] sm:$0xff]
        %v735 = vld [vmem:[%s244 + $0x18] sm:$0xff]
        %v736 = vld [vmem:[%s244 + $0x28] sm:$0xff]
        %v737 = vld [vmem:[%s244 + $0x38] sm:$0xff]
        %v738 = vmul.f32 %v726, 0.007598758
        %v739 = vmul.f32 %v734, 0.007598758
        %v740 = vmul.f32 %v727, 0.007598758
        %v741 = vmul.f32 %v735, 0.007598758
        %v742 = vmul.f32 %v728, 0.007598758
        %v743 = vmul.f32 %v736, 0.007598758
        %v744 = vmul.f32 %v729, 0.007598758
        %v745 = vmul.f32 %v737, 0.007598758
        %754 = vrot.lane.b32.xlu0 %v738, 127
        %v755 = vpop.permute.xlu0 %754
        %756 = vrot.lane.b32.xlu0 %v739, 127
        %v757 = vpop.permute.xlu0 %756
        %758 = vrot.lane.b32.xlu0 %v740, 127
        %v759 = vpop.permute.xlu0 %758
        %760 = vrot.lane.b32.xlu0 %v741, 127
        %v761 = vpop.permute.xlu0 %760
        %762 = vrot.lane.b32.xlu0 %v742, 127
        %v763 = vpop.permute.xlu0 %762
        %764 = vrot.lane.b32.xlu0 %v743, 127
        %v765 = vpop.permute.xlu0 %764
        %766 = vrot.lane.b32.xlu0 %v744, 127
        %v767 = vpop.permute.xlu0 %766
        %768 = vrot.lane.b32.xlu0 %v745, 127
        %v769 = vpop.permute.xlu0 %768
        %v770 = vsel %vm329, %v755, %v757
        %v771 = vsel %vm329, %v759, %v761
        %v772 = vsel %vm329, %v763, %v765
        %v773 = vsel %vm329, %v767, %v769
        %v778 = vadd.f32 %v730, %v770
        %v779 = vadd.f32 %v731, %v771
        %v780 = vadd.f32 %v732, %v772
        %v781 = vadd.f32 %v733, %v773
        %v782 = vmul.f32 %v726, 0.036000773
        %v783 = vmul.f32 %v734, 0.036000773
        %v784 = vmul.f32 %v727, 0.036000773
        %v785 = vmul.f32 %v735, 0.036000773
        %v786 = vmul.f32 %v728, 0.036000773
        %v787 = vmul.f32 %v736, 0.036000773
        %v788 = vmul.f32 %v729, 0.036000773
        %v789 = vmul.f32 %v737, 0.036000773
        %798 = vrot.lane.b32.xlu0 %v782, 126
        %v799 = vpop.permute.xlu0 %798
        %800 = vrot.lane.b32.xlu0 %v783, 126
        %v801 = vpop.permute.xlu0 %800
        %802 = vrot.lane.b32.xlu0 %v784, 126
        %v803 = vpop.permute.xlu0 %802
        %804 = vrot.lane.b32.xlu0 %v785, 126
        %v805 = vpop.permute.xlu0 %804
        %806 = vrot.lane.b32.xlu0 %v786, 126
        %v807 = vpop.permute.xlu0 %806
        %808 = vrot.lane.b32.xlu0 %v787, 126
        %v809 = vpop.permute.xlu0 %808
        %810 = vrot.lane.b32.xlu0 %v788, 126
        %v811 = vpop.permute.xlu0 %810
        %812 = vrot.lane.b32.xlu0 %v789, 126
        %v813 = vpop.permute.xlu0 %812
        %v814 = vsel %vm374, %v799, %v801
        %v815 = vsel %vm374, %v803, %v805
        %v816 = vsel %vm374, %v807, %v809
        %v817 = vsel %vm374, %v811, %v813
        %v822 = vadd.f32 %v778, %v814
        %v823 = vadd.f32 %v779, %v815
        %v824 = vadd.f32 %v780, %v816
        %v825 = vadd.f32 %v781, %v817
        %v826 = vmul.f32 %v726, 0.10936069
        %v827 = vmul.f32 %v734, 0.10936069
        %v828 = vmul.f32 %v727, 0.10936069
        %v829 = vmul.f32 %v735, 0.10936069
        %v830 = vmul.f32 %v728, 0.10936069
        %v831 = vmul.f32 %v736, 0.10936069
        %v832 = vmul.f32 %v729, 0.10936069
        %v833 = vmul.f32 %v737, 0.10936069
        %842 = vrot.lane.b32.xlu0 %v826, 125
        %v843 = vpop.permute.xlu0 %842
        %844 = vrot.lane.b32.xlu0 %v827, 125
        %v845 = vpop.permute.xlu0 %844
        %846 = vrot.lane.b32.xlu0 %v828, 125
        %v847 = vpop.permute.xlu0 %846
        %848 = vrot.lane.b32.xlu0 %v829, 125
        %v849 = vpop.permute.xlu0 %848
        %850 = vrot.lane.b32.xlu0 %v830, 125
        %v851 = vpop.permute.xlu0 %850
        %852 = vrot.lane.b32.xlu0 %v831, 125
        %v853 = vpop.permute.xlu0 %852
        %854 = vrot.lane.b32.xlu0 %v832, 125
        %v855 = vpop.permute.xlu0 %854
        %856 = vrot.lane.b32.xlu0 %v833, 125
        %v857 = vpop.permute.xlu0 %856
        %v858 = vsel %vm419, %v843, %v845
        %v859 = vsel %vm419, %v847, %v849
        %v860 = vsel %vm419, %v851, %v853
        %v861 = vsel %vm419, %v855, %v857
        %v866 = vadd.f32 %v822, %v858
        %v867 = vadd.f32 %v823, %v859
        %v868 = vadd.f32 %v824, %v860
        %v869 = vadd.f32 %v825, %v861
        %v870 = vmul.f32 %v726, 0.21300554
        %v871 = vmul.f32 %v734, 0.21300554
        %v872 = vmul.f32 %v727, 0.21300554
        %v873 = vmul.f32 %v735, 0.21300554
        %v874 = vmul.f32 %v728, 0.21300554
        %v875 = vmul.f32 %v736, 0.21300554
        %v876 = vmul.f32 %v729, 0.21300554
        %v877 = vmul.f32 %v737, 0.21300554
        %886 = vrot.lane.b32.xlu0 %v870, 124
        %v887 = vpop.permute.xlu0 %886
        %888 = vrot.lane.b32.xlu0 %v871, 124
        %v889 = vpop.permute.xlu0 %888
        %890 = vrot.lane.b32.xlu0 %v872, 124
        %v891 = vpop.permute.xlu0 %890
        %892 = vrot.lane.b32.xlu0 %v873, 124
        %v893 = vpop.permute.xlu0 %892
        %894 = vrot.lane.b32.xlu0 %v874, 124
        %v895 = vpop.permute.xlu0 %894
        %896 = vrot.lane.b32.xlu0 %v875, 124
        %v897 = vpop.permute.xlu0 %896
        %898 = vrot.lane.b32.xlu0 %v876, 124
        %v899 = vpop.permute.xlu0 %898
        %900 = vrot.lane.b32.xlu0 %v877, 124
        %v901 = vpop.permute.xlu0 %900
        %v902 = vsel %vm464, %v887, %v889
        %v903 = vsel %vm464, %v891, %v893
        %v904 = vsel %vm464, %v895, %v897
        %v905 = vsel %vm464, %v899, %v901
        %v910 = vadd.f32 %v866, %v902
        %v911 = vadd.f32 %v867, %v903
        %v912 = vadd.f32 %v868, %v904
        %v913 = vadd.f32 %v869, %v905
        %v914 = vmul.f32 %v726, 0.26601171
        %v915 = vmul.f32 %v734, 0.26601171
        %v916 = vmul.f32 %v727, 0.26601171
        %v917 = vmul.f32 %v735, 0.26601171
        %v918 = vmul.f32 %v728, 0.26601171
        %v919 = vmul.f32 %v736, 0.26601171
        %v920 = vmul.f32 %v729, 0.26601171
        %v921 = vmul.f32 %v737, 0.26601171
        %930 = vrot.lane.b32.xlu0 %v914, 123
        %v931 = vpop.permute.xlu0 %930
        %932 = vrot.lane.b32.xlu0 %v915, 123
        %v933 = vpop.permute.xlu0 %932
        %934 = vrot.lane.b32.xlu0 %v916, 123
        %v935 = vpop.permute.xlu0 %934
        %936 = vrot.lane.b32.xlu0 %v917, 123
        %v937 = vpop.permute.xlu0 %936
        %938 = vrot.lane.b32.xlu0 %v918, 123
        %v939 = vpop.permute.xlu0 %938
        %940 = vrot.lane.b32.xlu0 %v919, 123
        %v941 = vpop.permute.xlu0 %940
        %942 = vrot.lane.b32.xlu0 %v920, 123
        %v943 = vpop.permute.xlu0 %942
        %944 = vrot.lane.b32.xlu0 %v921, 123
        %v945 = vpop.permute.xlu0 %944
        %v946 = vsel %vm509, %v931, %v933
        %v947 = vsel %vm509, %v935, %v937
        %v948 = vsel %vm509, %v939, %v941
        %v949 = vsel %vm509, %v943, %v945
        %v954 = vadd.f32 %v910, %v946
        %v955 = vadd.f32 %v911, %v947
        %v956 = vadd.f32 %v912, %v948
        %v957 = vadd.f32 %v913, %v949
        %958 = vrot.lane.b32.xlu0 %v870, 122
        %v959 = vpop.permute.xlu0 %958
        %960 = vrot.lane.b32.xlu0 %v871, 122
        %v961 = vpop.permute.xlu0 %960
        %962 = vrot.lane.b32.xlu0 %v872, 122
        %v963 = vpop.permute.xlu0 %962
        %964 = vrot.lane.b32.xlu0 %v873, 122
        %v965 = vpop.permute.xlu0 %964
        %966 = vrot.lane.b32.xlu0 %v874, 122
        %v967 = vpop.permute.xlu0 %966
        %968 = vrot.lane.b32.xlu0 %v875, 122
        %v969 = vpop.permute.xlu0 %968
        %970 = vrot.lane.b32.xlu0 %v876, 122
        %v971 = vpop.permute.xlu0 %970
        %972 = vrot.lane.b32.xlu0 %v877, 122
        %v973 = vpop.permute.xlu0 %972
        %v974 = vsel %vm538, %v959, %v961
        %v975 = vsel %vm538, %v963, %v965
        %v976 = vsel %vm538, %v967, %v969
        %v977 = vsel %vm538, %v971, %v973
        %v982 = vadd.f32 %v954, %v974
        %v983 = vadd.f32 %v955, %v975
        %v984 = vadd.f32 %v956, %v976
        %v985 = vadd.f32 %v957, %v977
        %986 = vrot.lane.b32.xlu0 %v826, 121
        %v987 = vpop.permute.xlu0 %986
        %988 = vrot.lane.b32.xlu0 %v827, 121
        %v989 = vpop.permute.xlu0 %988
        %990 = vrot.lane.b32.xlu0 %v828, 121
        %v991 = vpop.permute.xlu0 %990
        %992 = vrot.lane.b32.xlu0 %v829, 121
        %v993 = vpop.permute.xlu0 %992
        %994 = vrot.lane.b32.xlu0 %v830, 121
        %v995 = vpop.permute.xlu0 %994
        %996 = vrot.lane.b32.xlu0 %v831, 121
        %v997 = vpop.permute.xlu0 %996
        %998 = vrot.lane.b32.xlu0 %v832, 121
        %v999 = vpop.permute.xlu0 %998
        %1000 = vrot.lane.b32.xlu0 %v833, 121
        %v1001 = vpop.permute.xlu0 %1000
        %v1002 = vsel %vm567, %v987, %v989
        %v1003 = vsel %vm567, %v991, %v993
        %v1004 = vsel %vm567, %v995, %v997
        %v1005 = vsel %vm567, %v999, %v1001
        %v1010 = vadd.f32 %v982, %v1002
        %v1011 = vadd.f32 %v983, %v1003
        %v1012 = vadd.f32 %v984, %v1004
        %v1013 = vadd.f32 %v985, %v1005
        %1014 = vrot.lane.b32.xlu0 %v782, 120
        %v1015 = vpop.permute.xlu0 %1014
        %1016 = vrot.lane.b32.xlu0 %v783, 120
        %v1017 = vpop.permute.xlu0 %1016
        %1018 = vrot.lane.b32.xlu0 %v784, 120
        %v1019 = vpop.permute.xlu0 %1018
        %1020 = vrot.lane.b32.xlu0 %v785, 120
        %v1021 = vpop.permute.xlu0 %1020
        %1022 = vrot.lane.b32.xlu0 %v786, 120
        %v1023 = vpop.permute.xlu0 %1022
        %1024 = vrot.lane.b32.xlu0 %v787, 120
        %v1025 = vpop.permute.xlu0 %1024
        %1026 = vrot.lane.b32.xlu0 %v788, 120
        %v1027 = vpop.permute.xlu0 %1026
        %1028 = vrot.lane.b32.xlu0 %v789, 120
        %v1029 = vpop.permute.xlu0 %1028
        %v1030 = vsel %vm596, %v1015, %v1017
        %v1031 = vsel %vm596, %v1019, %v1021
        %v1032 = vsel %vm596, %v1023, %v1025
        %v1033 = vsel %vm596, %v1027, %v1029
        %v1038 = vadd.f32 %v1010, %v1030
        %v1039 = vadd.f32 %v1011, %v1031
        %v1040 = vadd.f32 %v1012, %v1032
        %v1041 = vadd.f32 %v1013, %v1033
        %1042 = vrot.lane.b32.xlu0 %v738, 119
        %v1043 = vpop.permute.xlu0 %1042
        %1044 = vrot.lane.b32.xlu0 %v739, 119
        %v1045 = vpop.permute.xlu0 %1044
        %1046 = vrot.lane.b32.xlu0 %v740, 119
        %v1047 = vpop.permute.xlu0 %1046
        %1048 = vrot.lane.b32.xlu0 %v741, 119
        %v1049 = vpop.permute.xlu0 %1048
        %1050 = vrot.lane.b32.xlu0 %v742, 119
        %v1051 = vpop.permute.xlu0 %1050
        %1052 = vrot.lane.b32.xlu0 %v743, 119
        %v1053 = vpop.permute.xlu0 %1052
        %1054 = vrot.lane.b32.xlu0 %v744, 119
        %v1055 = vpop.permute.xlu0 %1054
        %1056 = vrot.lane.b32.xlu0 %v745, 119
        %v1057 = vpop.permute.xlu0 %1056
        %v1058 = vsel %vm625, %v1043, %v1045
        %v1059 = vsel %vm625, %v1047, %v1049
        %v1060 = vsel %vm625, %v1051, %v1053
        %v1061 = vsel %vm625, %v1055, %v1057
        %v1066 = vadd.f32 %v1038, %v1058
        %v1067 = vadd.f32 %v1039, %v1059
        %v1068 = vadd.f32 %v1040, %v1060
        %v1069 = vadd.f32 %v1041, %v1061
        %v1070 = vmul.f32 %v734, 0.0010283801
        %v1071 = vmul.f32 %v735, 0.0010283801
        %v1072 = vmul.f32 %v736, 0.0010283801
        %v1073 = vmul.f32 %v737, 0.0010283801
        %1082 = vrot.lane.b32.xlu0 %v730, 118
        %v1083 = vpop.permute.xlu0 %1082
        %1084 = vrot.lane.b32.xlu0 %v1070, 118
        %v1085 = vpop.permute.xlu0 %1084
        %1086 = vrot.lane.b32.xlu0 %v731, 118
        %v1087 = vpop.permute.xlu0 %1086
        %1088 = vrot.lane.b32.xlu0 %v1071, 118
        %v1089 = vpop.permute.xlu0 %1088
        %1090 = vrot.lane.b32.xlu0 %v732, 118
        %v1091 = vpop.permute.xlu0 %1090
        %1092 = vrot.lane.b32.xlu0 %v1072, 118
        %v1093 = vpop.permute.xlu0 %1092
        %1094 = vrot.lane.b32.xlu0 %v733, 118
        %v1095 = vpop.permute.xlu0 %1094
        %1096 = vrot.lane.b32.xlu0 %v1073, 118
        %v1097 = vpop.permute.xlu0 %1096
        %v1098 = vsel %vm666, %v1083, %v1085
        %v1099 = vsel %vm666, %v1087, %v1089
        %v1100 = vsel %vm666, %v1091, %v1093
        %v1101 = vsel %vm666, %v1095, %v1097
        %v1106 = vadd.f32 %v1066, %v1098
        %v1107 = vadd.f32 %v1067, %v1099
        %v1108 = vadd.f32 %v1068, %v1100
        %v1109 = vadd.f32 %v1069, %v1101
        %1110 = vst [vmem:[#allocation3] sm:$0xff] %v1106
        %1111 = vst [vmem:[#allocation3 + $0x8] sm:$0xff] %v1107
        %1112 = vst [vmem:[#allocation3 + $0x10] sm:$0xff] %v1108
        %1113 = vst [vmem:[#allocation3 + $0x18] sm:$0xff] %v1109
        %v1114 = vld [vmem:[#allocation3] sm:$0xff]
        %v1115 = vld [vmem:[#allocation3 + $0x8] sm:$0xff]
        %v1116 = vld [vmem:[#allocation3 + $0x10] sm:$0xff]
        %v1117 = vld [vmem:[#allocation3 + $0x18] sm:$0xff]
        %1118 = vmatpush.msra.mxu0 0.0
        %1119 = vmatpush.msra.mxu0 0.0
        %1120 = vmatpush.msra.mxu0 0.0
        %1121 = vmatpush.msra.mxu0 0.0
        %1122 = vmatpush.msra.mxu0 0.0
        %1123 = vmatpush.msra.mxu0 0.0
        %1124 = vmatpush.msra.mxu0 0.0
        %1125 = vmatpush.msra.mxu0 0.0
        %1126 = vmatpush.msra.mxu0 0.0
        %1127 = vmatpush.msra.mxu0 0.0
        %1128 = vmatpush.msra.mxu0 0.0
        %1129 = vmatpush.msra.mxu0 0.0
        %1130 = vmatpush.msra.mxu0 %v1117
        %1131 = vmatpush.msra.mxu0 %v1116
        %1132 = vmatpush.msra.mxu0 %v1115
        %1133 = vmatpush.msra.mxu0 %v1114
        %1134 = vmatmul.f32.gmra.mxu0 %v689
        %v1135 = vpop.f32.mrf.mxu0
        %v1136 = vadd.f32 0.0, %v1135
        %1137 = vmatmul.f32.gmra.mxu0 %v692
        %v1138 = vpop.f32.mrf.mxu0
        %v1139 = vadd.f32 0.0, %v1138
        %1140 = vmatmul.f32.gmra.mxu0 %v695
        %v1141 = vpop.f32.mrf.mxu0
        %v1142 = vadd.f32 0.0, %v1141
        %1143 = vdwg.mxu0
        %1144 = vst [vmem:[#allocation5] sm:$0xff] %v1136
        %1145 = vst [vmem:[#allocation5 + $0x8] sm:$0xff] %v1139
        %1146 = vst [vmem:[#allocation5 + $0x10] sm:$0x3f] %v1142
        %v1147 = vld [vmem:[%s234] sm:$0xff]
        %v1148 = vld [vmem:[%s234 + $0x8] sm:$0xff]
        %v1149 = vld [vmem:[%s234 + $0x10] sm:$0xff]
        %v1150 = vld [vmem:[%s234 + $0x18] sm:$0xff]
        %v1151 = vld [vmem:[%s234 + $0x20] sm:$0xff]
        %v1152 = vld [vmem:[%s234 + $0x28] sm:$0xff]
        %v1153 = vld [vmem:[%s234 + $0x30] sm:$0xff]
        %v1154 = vld [vmem:[%s234 + $0x38] sm:$0xff]
        %v1155 = vmul.f32 %v1147, %v1147
        %v1156 = vmul.f32 %v1148, %v1148
        %v1157 = vmul.f32 %v1149, %v1149
        %v1158 = vmul.f32 %v1150, %v1150
        %v1159 = vmul.f32 %v1151, %v1151
        %v1160 = vmul.f32 %v1152, %v1152
        %v1161 = vmul.f32 %v1153, %v1153
        %v1162 = vmul.f32 %v1154, %v1154
        %1163 = vst [vmem:[#allocation2] sm:$0xff] %v1155
        %vm1164 = vcmask 80896
        %1165 = vst.msk [vmem:[#allocation2 + $0x8] sm:$0xff] %vm1164, %v1156
        %1166 = vst [vmem:[#allocation2 + $0x10] sm:$0xff] %v1157
        %1167 = vst.msk [vmem:[#allocation2 + $0x18] sm:$0xff] %vm1164, %v1158
        %1168 = vst [vmem:[#allocation2 + $0x20] sm:$0xff] %v1159
        %1169 = vst.msk [vmem:[#allocation2 + $0x28] sm:$0xff] %vm1164, %v1160
        %1170 = vst [vmem:[#allocation2 + $0x30] sm:$0xff] %v1161
        %1171 = vst.msk [vmem:[#allocation2 + $0x38] sm:$0xff] %vm1164, %v1162
        %v1172 = vld [vmem:[#allocation2] sm:$0xff]
        %v1173 = vld [vmem:[#allocation2 + $0x10] sm:$0xff]
        %v1174 = vld [vmem:[#allocation2 + $0x20] sm:$0xff]
        %v1175 = vld [vmem:[#allocation2 + $0x30] sm:$0xff]
        %v1176 = vmul.f32 %v1172, 0.0010283801
        %v1177 = vmul.f32 %v1173, 0.0010283801
        %v1178 = vmul.f32 %v1174, 0.0010283801
        %v1179 = vmul.f32 %v1175, 0.0010283801
        %v1180 = vld [vmem:[#allocation2 + $0x8] sm:$0xff]
        %v1181 = vld [vmem:[#allocation2 + $0x18] sm:$0xff]
        %v1182 = vld [vmem:[#allocation2 + $0x28] sm:$0xff]
        %v1183 = vld [vmem:[#allocation2 + $0x38] sm:$0xff]
        %v1184 = vmul.f32 %v1172, 0.007598758
        %v1185 = vmul.f32 %v1180, 0.007598758
        %v1186 = vmul.f32 %v1173, 0.007598758
        %v1187 = vmul.f32 %v1181, 0.007598758
        %v1188 = vmul.f32 %v1174, 0.007598758
        %v1189 = vmul.f32 %v1182, 0.007598758
        %v1190 = vmul.f32 %v1175, 0.007598758
        %v1191 = vmul.f32 %v1183, 0.007598758
        %1200 = vrot.lane.b32.xlu0 %v1184, 127
        %v1201 = vpop.permute.xlu0 %1200
        %1202 = vrot.lane.b32.xlu0 %v1185, 127
        %v1203 = vpop.permute.xlu0 %1202
        %1204 = vrot.lane.b32.xlu0 %v1186, 127
        %v1205 = vpop.permute.xlu0 %1204
        %1206 = vrot.lane.b32.xlu0 %v1187, 127
        %v1207 = vpop.permute.xlu0 %1206
        %1208 = vrot.lane.b32.xlu0 %v1188, 127
        %v1209 = vpop.permute.xlu0 %1208
        %1210 = vrot.lane.b32.xlu0 %v1189, 127
        %v1211 = vpop.permute.xlu0 %1210
        %1212 = vrot.lane.b32.xlu0 %v1190, 127
        %v1213 = vpop.permute.xlu0 %1212
        %1214 = vrot.lane.b32.xlu0 %v1191, 127
        %v1215 = vpop.permute.xlu0 %1214
        %v1216 = vsel %vm329, %v1201, %v1203
        %v1217 = vsel %vm329, %v1205, %v1207
        %v1218 = vsel %vm329, %v1209, %v1211
        %v1219 = vsel %vm329, %v1213, %v1215
        %v1224 = vadd.f32 %v1176, %v1216
        %v1225 = vadd.f32 %v1177, %v1217
        %v1226 = vadd.f32 %v1178, %v1218
        %v1227 = vadd.f32 %v1179, %v1219
        %v1228 = vmul.f32 %v1172, 0.036000773
        %v1229 = vmul.f32 %v1180, 0.036000773
        %v1230 = vmul.f32 %v1173, 0.036000773
        %v1231 = vmul.f32 %v1181, 0.036000773
        %v1232 = vmul.f32 %v1174, 0.036000773
        %v1233 = vmul.f32 %v1182, 0.036000773
        %v1234 = vmul.f32 %v1175, 0.036000773
        %v1235 = vmul.f32 %v1183, 0.036000773
        %1244 = vrot.lane.b32.xlu0 %v1228, 126
        %v1245 = vpop.permute.xlu0 %1244
        %1246 = vrot.lane.b32.xlu0 %v1229, 126
        %v1247 = vpop.permute.xlu0 %1246
        %1248 = vrot.lane.b32.xlu0 %v1230, 126
        %v1249 = vpop.permute.xlu0 %1248
        %1250 = vrot.lane.b32.xlu0 %v1231, 126
        %v1251 = vpop.permute.xlu0 %1250
        %1252 = vrot.lane.b32.xlu0 %v1232, 126
        %v1253 = vpop.permute.xlu0 %1252
        %1254 = vrot.lane.b32.xlu0 %v1233, 126
        %v1255 = vpop.permute.xlu0 %1254
        %1256 = vrot.lane.b32.xlu0 %v1234, 126
        %v1257 = vpop.permute.xlu0 %1256
        %1258 = vrot.lane.b32.xlu0 %v1235, 126
        %v1259 = vpop.permute.xlu0 %1258
        %v1260 = vsel %vm374, %v1245, %v1247
        %v1261 = vsel %vm374, %v1249, %v1251
        %v1262 = vsel %vm374, %v1253, %v1255
        %v1263 = vsel %vm374, %v1257, %v1259
        %v1268 = vadd.f32 %v1224, %v1260
        %v1269 = vadd.f32 %v1225, %v1261
        %v1270 = vadd.f32 %v1226, %v1262
        %v1271 = vadd.f32 %v1227, %v1263
        %v1272 = vmul.f32 %v1172, 0.10936069
        %v1273 = vmul.f32 %v1180, 0.10936069
        %v1274 = vmul.f32 %v1173, 0.10936069
        %v1275 = vmul.f32 %v1181, 0.10936069
        %v1276 = vmul.f32 %v1174, 0.10936069
        %v1277 = vmul.f32 %v1182, 0.10936069
        %v1278 = vmul.f32 %v1175, 0.10936069
        %v1279 = vmul.f32 %v1183, 0.10936069
        %1288 = vrot.lane.b32.xlu0 %v1272, 125
        %v1289 = vpop.permute.xlu0 %1288
        %1290 = vrot.lane.b32.xlu0 %v1273, 125
        %v1291 = vpop.permute.xlu0 %1290
        %1292 = vrot.lane.b32.xlu0 %v1274, 125
        %v1293 = vpop.permute.xlu0 %1292
        %1294 = vrot.lane.b32.xlu0 %v1275, 125
        %v1295 = vpop.permute.xlu0 %1294
        %1296 = vrot.lane.b32.xlu0 %v1276, 125
        %v1297 = vpop.permute.xlu0 %1296
        %1298 = vrot.lane.b32.xlu0 %v1277, 125
        %v1299 = vpop.permute.xlu0 %1298
        %1300 = vrot.lane.b32.xlu0 %v1278, 125
        %v1301 = vpop.permute.xlu0 %1300
        %1302 = vrot.lane.b32.xlu0 %v1279, 125
        %v1303 = vpop.permute.xlu0 %1302
        %v1304 = vsel %vm419, %v1289, %v1291
        %v1305 = vsel %vm419, %v1293, %v1295
        %v1306 = vsel %vm419, %v1297, %v1299
        %v1307 = vsel %vm419, %v1301, %v1303
        %v1312 = vadd.f32 %v1268, %v1304
        %v1313 = vadd.f32 %v1269, %v1305
        %v1314 = vadd.f32 %v1270, %v1306
        %v1315 = vadd.f32 %v1271, %v1307
        %v1316 = vmul.f32 %v1172, 0.21300554
        %v1317 = vmul.f32 %v1180, 0.21300554
        %v1318 = vmul.f32 %v1173, 0.21300554
        %v1319 = vmul.f32 %v1181, 0.21300554
        %v1320 = vmul.f32 %v1174, 0.21300554
        %v1321 = vmul.f32 %v1182, 0.21300554
        %v1322 = vmul.f32 %v1175, 0.21300554
        %v1323 = vmul.f32 %v1183, 0.21300554
        %1332 = vrot.lane.b32.xlu0 %v1316, 124
        %v1333 = vpop.permute.xlu0 %1332
        %1334 = vrot.lane.b32.xlu0 %v1317, 124
        %v1335 = vpop.permute.xlu0 %1334
        %1336 = vrot.lane.b32.xlu0 %v1318, 124
        %v1337 = vpop.permute.xlu0 %1336
        %1338 = vrot.lane.b32.xlu0 %v1319, 124
        %v1339 = vpop.permute.xlu0 %1338
        %1340 = vrot.lane.b32.xlu0 %v1320, 124
        %v1341 = vpop.permute.xlu0 %1340
        %1342 = vrot.lane.b32.xlu0 %v1321, 124
        %v1343 = vpop.permute.xlu0 %1342
        %1344 = vrot.lane.b32.xlu0 %v1322, 124
        %v1345 = vpop.permute.xlu0 %1344
        %1346 = vrot.lane.b32.xlu0 %v1323, 124
        %v1347 = vpop.permute.xlu0 %1346
        %v1348 = vsel %vm464, %v1333, %v1335
        %v1349 = vsel %vm464, %v1337, %v1339
        %v1350 = vsel %vm464, %v1341, %v1343
        %v1351 = vsel %vm464, %v1345, %v1347
        %v1356 = vadd.f32 %v1312, %v1348
        %v1357 = vadd.f32 %v1313, %v1349
        %v1358 = vadd.f32 %v1314, %v1350
        %v1359 = vadd.f32 %v1315, %v1351
        %v1360 = vmul.f32 %v1172, 0.26601171
        %v1361 = vmul.f32 %v1180, 0.26601171
        %v1362 = vmul.f32 %v1173, 0.26601171
        %v1363 = vmul.f32 %v1181, 0.26601171
        %v1364 = vmul.f32 %v1174, 0.26601171
        %v1365 = vmul.f32 %v1182, 0.26601171
        %v1366 = vmul.f32 %v1175, 0.26601171
        %v1367 = vmul.f32 %v1183, 0.26601171
        %1376 = vrot.lane.b32.xlu0 %v1360, 123
        %v1377 = vpop.permute.xlu0 %1376
        %1378 = vrot.lane.b32.xlu0 %v1361, 123
        %v1379 = vpop.permute.xlu0 %1378
        %1380 = vrot.lane.b32.xlu0 %v1362, 123
        %v1381 = vpop.permute.xlu0 %1380
        %1382 = vrot.lane.b32.xlu0 %v1363, 123
        %v1383 = vpop.permute.xlu0 %1382
        %1384 = vrot.lane.b32.xlu0 %v1364, 123
        %v1385 = vpop.permute.xlu0 %1384
        %1386 = vrot.lane.b32.xlu0 %v1365, 123
        %v1387 = vpop.permute.xlu0 %1386
        %1388 = vrot.lane.b32.xlu0 %v1366, 123
        %v1389 = vpop.permute.xlu0 %1388
        %1390 = vrot.lane.b32.xlu0 %v1367, 123
        %v1391 = vpop.permute.xlu0 %1390
        %v1392 = vsel %vm509, %v1377, %v1379
        %v1393 = vsel %vm509, %v1381, %v1383
        %v1394 = vsel %vm509, %v1385, %v1387
        %v1395 = vsel %vm509, %v1389, %v1391
        %v1400 = vadd.f32 %v1356, %v1392
        %v1401 = vadd.f32 %v1357, %v1393
        %v1402 = vadd.f32 %v1358, %v1394
        %v1403 = vadd.f32 %v1359, %v1395
        %1404 = vrot.lane.b32.xlu0 %v1316, 122
        %v1405 = vpop.permute.xlu0 %1404
        %1406 = vrot.lane.b32.xlu0 %v1317, 122
        %v1407 = vpop.permute.xlu0 %1406
        %1408 = vrot.lane.b32.xlu0 %v1318, 122
        %v1409 = vpop.permute.xlu0 %1408
        %1410 = vrot.lane.b32.xlu0 %v1319, 122
        %v1411 = vpop.permute.xlu0 %1410
        %1412 = vrot.lane.b32.xlu0 %v1320, 122
        %v1413 = vpop.permute.xlu0 %1412
        %1414 = vrot.lane.b32.xlu0 %v1321, 122
        %v1415 = vpop.permute.xlu0 %1414
        %1416 = vrot.lane.b32.xlu0 %v1322, 122
        %v1417 = vpop.permute.xlu0 %1416
        %1418 = vrot.lane.b32.xlu0 %v1323, 122
        %v1419 = vpop.permute.xlu0 %1418
        %v1420 = vsel %vm538, %v1405, %v1407
        %v1421 = vsel %vm538, %v1409, %v1411
        %v1422 = vsel %vm538, %v1413, %v1415
        %v1423 = vsel %vm538, %v1417, %v1419
        %v1428 = vadd.f32 %v1400, %v1420
        %v1429 = vadd.f32 %v1401, %v1421
        %v1430 = vadd.f32 %v1402, %v1422
        %v1431 = vadd.f32 %v1403, %v1423
        %1432 = vrot.lane.b32.xlu0 %v1272, 121
        %v1433 = vpop.permute.xlu0 %1432
        %1434 = vrot.lane.b32.xlu0 %v1273, 121
        %v1435 = vpop.permute.xlu0 %1434
        %1436 = vrot.lane.b32.xlu0 %v1274, 121
        %v1437 = vpop.permute.xlu0 %1436
        %1438 = vrot.lane.b32.xlu0 %v1275, 121
        %v1439 = vpop.permute.xlu0 %1438
        %1440 = vrot.lane.b32.xlu0 %v1276, 121
        %v1441 = vpop.permute.xlu0 %1440
        %1442 = vrot.lane.b32.xlu0 %v1277, 121
        %v1443 = vpop.permute.xlu0 %1442
        %1444 = vrot.lane.b32.xlu0 %v1278, 121
        %v1445 = vpop.permute.xlu0 %1444
        %1446 = vrot.lane.b32.xlu0 %v1279, 121
        %v1447 = vpop.permute.xlu0 %1446
        %v1448 = vsel %vm567, %v1433, %v1435
        %v1449 = vsel %vm567, %v1437, %v1439
        %v1450 = vsel %vm567, %v1441, %v1443
        %v1451 = vsel %vm567, %v1445, %v1447
        %v1456 = vadd.f32 %v1428, %v1448
        %v1457 = vadd.f32 %v1429, %v1449
        %v1458 = vadd.f32 %v1430, %v1450
        %v1459 = vadd.f32 %v1431, %v1451
        %1460 = vrot.lane.b32.xlu0 %v1228, 120
        %v1461 = vpop.permute.xlu0 %1460
        %1462 = vrot.lane.b32.xlu0 %v1229, 120
        %v1463 = vpop.permute.xlu0 %1462
        %1464 = vrot.lane.b32.xlu0 %v1230, 120
        %v1465 = vpop.permute.xlu0 %1464
        %1466 = vrot.lane.b32.xlu0 %v1231, 120
        %v1467 = vpop.permute.xlu0 %1466
        %1468 = vrot.lane.b32.xlu0 %v1232, 120
        %v1469 = vpop.permute.xlu0 %1468
        %1470 = vrot.lane.b32.xlu0 %v1233, 120
        %v1471 = vpop.permute.xlu0 %1470
        %1472 = vrot.lane.b32.xlu0 %v1234, 120
        %v1473 = vpop.permute.xlu0 %1472
        %1474 = vrot.lane.b32.xlu0 %v1235, 120
        %v1475 = vpop.permute.xlu0 %1474
        %v1476 = vsel %vm596, %v1461, %v1463
        %v1477 = vsel %vm596, %v1465, %v1467
        %v1478 = vsel %vm596, %v1469, %v1471
        %v1479 = vsel %vm596, %v1473, %v1475
        %v1484 = vadd.f32 %v1456, %v1476
        %v1485 = vadd.f32 %v1457, %v1477
        %v1486 = vadd.f32 %v1458, %v1478
        %v1487 = vadd.f32 %v1459, %v1479
        %1488 = vrot.lane.b32.xlu0 %v1184, 119
        %v1489 = vpop.permute.xlu0 %1488
        %1490 = vrot.lane.b32.xlu0 %v1185, 119
        %v1491 = vpop.permute.xlu0 %1490
        %1492 = vrot.lane.b32.xlu0 %v1186, 119
        %v1493 = vpop.permute.xlu0 %1492
        %1494 = vrot.lane.b32.xlu0 %v1187, 119
        %v1495 = vpop.permute.xlu0 %1494
        %1496 = vrot.lane.b32.xlu0 %v1188, 119
        %v1497 = vpop.permute.xlu0 %1496
        %1498 = vrot.lane.b32.xlu0 %v1189, 119
        %v1499 = vpop.permute.xlu0 %1498
        %1500 = vrot.lane.b32.xlu0 %v1190, 119
        %v1501 = vpop.permute.xlu0 %1500
        %1502 = vrot.lane.b32.xlu0 %v1191, 119
        %v1503 = vpop.permute.xlu0 %1502
        %v1504 = vsel %vm625, %v1489, %v1491
        %v1505 = vsel %vm625, %v1493, %v1495
        %v1506 = vsel %vm625, %v1497, %v1499
        %v1507 = vsel %vm625, %v1501, %v1503
        %v1512 = vadd.f32 %v1484, %v1504
        %v1513 = vadd.f32 %v1485, %v1505
        %v1514 = vadd.f32 %v1486, %v1506
        %v1515 = vadd.f32 %v1487, %v1507
        %v1516 = vmul.f32 %v1180, 0.0010283801
        %v1517 = vmul.f32 %v1181, 0.0010283801
        %v1518 = vmul.f32 %v1182, 0.0010283801
        %v1519 = vmul.f32 %v1183, 0.0010283801
        %1528 = vrot.lane.b32.xlu0 %v1176, 118
        %v1529 = vpop.permute.xlu0 %1528
        %1530 = vrot.lane.b32.xlu0 %v1516, 118
        %v1531 = vpop.permute.xlu0 %1530
        %1532 = vrot.lane.b32.xlu0 %v1177, 118
        %v1533 = vpop.permute.xlu0 %1532
        %1534 = vrot.lane.b32.xlu0 %v1517, 118
        %v1535 = vpop.permute.xlu0 %1534
        %1536 = vrot.lane.b32.xlu0 %v1178, 118
        %v1537 = vpop.permute.xlu0 %1536
        %1538 = vrot.lane.b32.xlu0 %v1518, 118
        %v1539 = vpop.permute.xlu0 %1538
        %1540 = vrot.lane.b32.xlu0 %v1179, 118
        %v1541 = vpop.permute.xlu0 %1540
        %1542 = vrot.lane.b32.xlu0 %v1519, 118
        %v1543 = vpop.permute.xlu0 %1542
        %v1544 = vsel %vm666, %v1529, %v1531
        %v1545 = vsel %vm666, %v1533, %v1535
        %v1546 = vsel %vm666, %v1537, %v1539
        %v1547 = vsel %vm666, %v1541, %v1543
        %v1552 = vadd.f32 %v1512, %v1544
        %v1553 = vadd.f32 %v1513, %v1545
        %v1554 = vadd.f32 %v1514, %v1546
        %v1555 = vadd.f32 %v1515, %v1547
        %1556 = vst [vmem:[#allocation3] sm:$0xff] %v1552
        %1557 = vst [vmem:[#allocation3 + $0x8] sm:$0xff] %v1553
        %1558 = vst [vmem:[#allocation3 + $0x10] sm:$0xff] %v1554
        %1559 = vst [vmem:[#allocation3 + $0x18] sm:$0xff] %v1555
        %v1560 = vld [vmem:[#allocation3] sm:$0xff]
        %v1561 = vld [vmem:[#allocation3 + $0x8] sm:$0xff]
        %v1562 = vld [vmem:[#allocation3 + $0x10] sm:$0xff]
        %v1563 = vld [vmem:[#allocation3 + $0x18] sm:$0xff]
        %1564 = vmatpush.msra.mxu0 0.0
        %1565 = vmatpush.msra.mxu0 0.0
        %1566 = vmatpush.msra.mxu0 0.0
        %1567 = vmatpush.msra.mxu0 0.0
        %1568 = vmatpush.msra.mxu0 0.0
        %1569 = vmatpush.msra.mxu0 0.0
        %1570 = vmatpush.msra.mxu0 0.0
        %1571 = vmatpush.msra.mxu0 0.0
        %1572 = vmatpush.msra.mxu0 0.0
        %1573 = vmatpush.msra.mxu0 0.0
        %1574 = vmatpush.msra.mxu0 0.0
        %1575 = vmatpush.msra.mxu0 0.0
        %1576 = vmatpush.msra.mxu0 %v1563
        %1577 = vmatpush.msra.mxu0 %v1562
        %1578 = vmatpush.msra.mxu0 %v1561
        %1579 = vmatpush.msra.mxu0 %v1560
        %1580 = vmatmul.f32.gmra.mxu0 %v689
        %v1581 = vpop.f32.mrf.mxu0
        %v1582 = vadd.f32 0.0, %v1581
        %1583 = vmatmul.f32.gmra.mxu0 %v692
        %v1584 = vpop.f32.mrf.mxu0
        %v1585 = vadd.f32 0.0, %v1584
        %1586 = vmatmul.f32.gmra.mxu0 %v695
        %v1587 = vpop.f32.mrf.mxu0
        %v1588 = vadd.f32 0.0, %v1587
        %1589 = vdwg.mxu0
        %1590 = vst [vmem:[#allocation6] sm:$0xff] %v1582
        %1591 = vst [vmem:[#allocation6 + $0x8] sm:$0xff] %v1585
        %1592 = vst [vmem:[#allocation6 + $0x10] sm:$0x3f] %v1588
        %v1593 = vld [vmem:[%s244] sm:$0xff]
        %v1594 = vld [vmem:[%s244 + $0x8] sm:$0xff]
        %v1595 = vld [vmem:[%s244 + $0x10] sm:$0xff]
        %v1596 = vld [vmem:[%s244 + $0x18] sm:$0xff]
        %v1597 = vld [vmem:[%s244 + $0x20] sm:$0xff]
        %v1598 = vld [vmem:[%s244 + $0x28] sm:$0xff]
        %v1599 = vld [vmem:[%s244 + $0x30] sm:$0xff]
        %v1600 = vld [vmem:[%s244 + $0x38] sm:$0xff]
        %v1601 = vmul.f32 %v1593, %v1593
        %v1602 = vmul.f32 %v1594, %v1594
        %v1603 = vmul.f32 %v1595, %v1595
        %v1604 = vmul.f32 %v1596, %v1596
        %v1605 = vmul.f32 %v1597, %v1597
        %v1606 = vmul.f32 %v1598, %v1598
        %v1607 = vmul.f32 %v1599, %v1599
        %v1608 = vmul.f32 %v1600, %v1600
        %1609 = vst [vmem:[#allocation2] sm:$0xff] %v1601
        %1610 = vst.msk [vmem:[#allocation2 + $0x8] sm:$0xff] %vm1164, %v1602
        %1611 = vst [vmem:[#allocation2 + $0x10] sm:$0xff] %v1603
        %1612 = vst.msk [vmem:[#allocation2 + $0x18] sm:$0xff] %vm1164, %v1604
        %1613 = vst [vmem:[#allocation2 + $0x20] sm:$0xff] %v1605
        %1614 = vst.msk [vmem:[#allocation2 + $0x28] sm:$0xff] %vm1164, %v1606
        %1615 = vst [vmem:[#allocation2 + $0x30] sm:$0xff] %v1607
        %1616 = vst.msk [vmem:[#allocation2 + $0x38] sm:$0xff] %vm1164, %v1608
        %v1617 = vld [vmem:[#allocation2] sm:$0xff]
        %v1618 = vld [vmem:[#allocation2 + $0x10] sm:$0xff]
        %v1619 = vld [vmem:[#allocation2 + $0x20] sm:$0xff]
        %v1620 = vld [vmem:[#allocation2 + $0x30] sm:$0xff]
        %v1621 = vmul.f32 %v1617, 0.0010283801
        %v1622 = vmul.f32 %v1618, 0.0010283801
        %v1623 = vmul.f32 %v1619, 0.0010283801
        %v1624 = vmul.f32 %v1620, 0.0010283801
        %v1625 = vld [vmem:[#allocation2 + $0x8] sm:$0xff]
        %v1626 = vld [vmem:[#allocation2 + $0x18] sm:$0xff]
        %v1627 = vld [vmem:[#allocation2 + $0x28] sm:$0xff]
        %v1628 = vld [vmem:[#allocation2 + $0x38] sm:$0xff]
        %v1629 = vmul.f32 %v1617, 0.007598758
        %v1630 = vmul.f32 %v1625, 0.007598758
        %v1631 = vmul.f32 %v1618, 0.007598758
        %v1632 = vmul.f32 %v1626, 0.007598758
        %v1633 = vmul.f32 %v1619, 0.007598758
        %v1634 = vmul.f32 %v1627, 0.007598758
        %v1635 = vmul.f32 %v1620, 0.007598758
        %v1636 = vmul.f32 %v1628, 0.007598758
        %1645 = vrot.lane.b32.xlu0 %v1629, 127
        %v1646 = vpop.permute.xlu0 %1645
        %1647 = vrot.lane.b32.xlu0 %v1630, 127
        %v1648 = vpop.permute.xlu0 %1647
        %1649 = vrot.lane.b32.xlu0 %v1631, 127
        %v1650 = vpop.permute.xlu0 %1649
        %1651 = vrot.lane.b32.xlu0 %v1632, 127
        %v1652 = vpop.permute.xlu0 %1651
        %1653 = vrot.lane.b32.xlu0 %v1633, 127
        %v1654 = vpop.permute.xlu0 %1653
        %1655 = vrot.lane.b32.xlu0 %v1634, 127
        %v1656 = vpop.permute.xlu0 %1655
        %1657 = vrot.lane.b32.xlu0 %v1635, 127
        %v1658 = vpop.permute.xlu0 %1657
        %1659 = vrot.lane.b32.xlu0 %v1636, 127
        %v1660 = vpop.permute.xlu0 %1659
        %v1661 = vsel %vm329, %v1646, %v1648
        %v1662 = vsel %vm329, %v1650, %v1652
        %v1663 = vsel %vm329, %v1654, %v1656
        %v1664 = vsel %vm329, %v1658, %v1660
        %v1669 = vadd.f32 %v1621, %v1661
        %v1670 = vadd.f32 %v1622, %v1662
        %v1671 = vadd.f32 %v1623, %v1663
        %v1672 = vadd.f32 %v1624, %v1664
        %v1673 = vmul.f32 %v1617, 0.036000773
        %v1674 = vmul.f32 %v1625, 0.036000773
        %v1675 = vmul.f32 %v1618, 0.036000773
        %v1676 = vmul.f32 %v1626, 0.036000773
        %v1677 = vmul.f32 %v1619, 0.036000773
        %v1678 = vmul.f32 %v1627, 0.036000773
        %v1679 = vmul.f32 %v1620, 0.036000773
        %v1680 = vmul.f32 %v1628, 0.036000773
        %1689 = vrot.lane.b32.xlu0 %v1673, 126
        %v1690 = vpop.permute.xlu0 %1689
        %1691 = vrot.lane.b32.xlu0 %v1674, 126
        %v1692 = vpop.permute.xlu0 %1691
        %1693 = vrot.lane.b32.xlu0 %v1675, 126
        %v1694 = vpop.permute.xlu0 %1693
        %1695 = vrot.lane.b32.xlu0 %v1676, 126
        %v1696 = vpop.permute.xlu0 %1695
        %1697 = vrot.lane.b32.xlu0 %v1677, 126
        %v1698 = vpop.permute.xlu0 %1697
        %1699 = vrot.lane.b32.xlu0 %v1678, 126
        %v1700 = vpop.permute.xlu0 %1699
        %1701 = vrot.lane.b32.xlu0 %v1679, 126
        %v1702 = vpop.permute.xlu0 %1701
        %1703 = vrot.lane.b32.xlu0 %v1680, 126
        %v1704 = vpop.permute.xlu0 %1703
        %v1705 = vsel %vm374, %v1690, %v1692
        %v1706 = vsel %vm374, %v1694, %v1696
        %v1707 = vsel %vm374, %v1698, %v1700
        %v1708 = vsel %vm374, %v1702, %v1704
        %v1713 = vadd.f32 %v1669, %v1705
        %v1714 = vadd.f32 %v1670, %v1706
        %v1715 = vadd.f32 %v1671, %v1707
        %v1716 = vadd.f32 %v1672, %v1708
        %v1717 = vmul.f32 %v1617, 0.10936069
        %v1718 = vmul.f32 %v1625, 0.10936069
        %v1719 = vmul.f32 %v1618, 0.10936069
        %v1720 = vmul.f32 %v1626, 0.10936069
        %v1721 = vmul.f32 %v1619, 0.10936069
        %v1722 = vmul.f32 %v1627, 0.10936069
        %v1723 = vmul.f32 %v1620, 0.10936069
        %v1724 = vmul.f32 %v1628, 0.10936069
        %1733 = vrot.lane.b32.xlu0 %v1717, 125
        %v1734 = vpop.permute.xlu0 %1733
        %1735 = vrot.lane.b32.xlu0 %v1718, 125
        %v1736 = vpop.permute.xlu0 %1735
        %1737 = vrot.lane.b32.xlu0 %v1719, 125
        %v1738 = vpop.permute.xlu0 %1737
        %1739 = vrot.lane.b32.xlu0 %v1720, 125
        %v1740 = vpop.permute.xlu0 %1739
        %1741 = vrot.lane.b32.xlu0 %v1721, 125
        %v1742 = vpop.permute.xlu0 %1741
        %1743 = vrot.lane.b32.xlu0 %v1722, 125
        %v1744 = vpop.permute.xlu0 %1743
        %1745 = vrot.lane.b32.xlu0 %v1723, 125
        %v1746 = vpop.permute.xlu0 %1745
        %1747 = vrot.lane.b32.xlu0 %v1724, 125
        %v1748 = vpop.permute.xlu0 %1747
        %v1749 = vsel %vm419, %v1734, %v1736
        %v1750 = vsel %vm419, %v1738, %v1740
        %v1751 = vsel %vm419, %v1742, %v1744
        %v1752 = vsel %vm419, %v1746, %v1748
        %v1757 = vadd.f32 %v1713, %v1749
        %v1758 = vadd.f32 %v1714, %v1750
        %v1759 = vadd.f32 %v1715, %v1751
        %v1760 = vadd.f32 %v1716, %v1752
        %v1761 = vmul.f32 %v1617, 0.21300554
        %v1762 = vmul.f32 %v1625, 0.21300554
        %v1763 = vmul.f32 %v1618, 0.21300554
        %v1764 = vmul.f32 %v1626, 0.21300554
        %v1765 = vmul.f32 %v1619, 0.21300554
        %v1766 = vmul.f32 %v1627, 0.21300554
        %v1767 = vmul.f32 %v1620, 0.21300554
        %v1768 = vmul.f32 %v1628, 0.21300554
        %1777 = vrot.lane.b32.xlu0 %v1761, 124
        %v1778 = vpop.permute.xlu0 %1777
        %1779 = vrot.lane.b32.xlu0 %v1762, 124
        %v1780 = vpop.permute.xlu0 %1779
        %1781 = vrot.lane.b32.xlu0 %v1763, 124
        %v1782 = vpop.permute.xlu0 %1781
        %1783 = vrot.lane.b32.xlu0 %v1764, 124
        %v1784 = vpop.permute.xlu0 %1783
        %1785 = vrot.lane.b32.xlu0 %v1765, 124
        %v1786 = vpop.permute.xlu0 %1785
        %1787 = vrot.lane.b32.xlu0 %v1766, 124
        %v1788 = vpop.permute.xlu0 %1787
        %1789 = vrot.lane.b32.xlu0 %v1767, 124
        %v1790 = vpop.permute.xlu0 %1789
        %1791 = vrot.lane.b32.xlu0 %v1768, 124
        %v1792 = vpop.permute.xlu0 %1791
        %v1793 = vsel %vm464, %v1778, %v1780
        %v1794 = vsel %vm464, %v1782, %v1784
        %v1795 = vsel %vm464, %v1786, %v1788
        %v1796 = vsel %vm464, %v1790, %v1792
        %v1801 = vadd.f32 %v1757, %v1793
        %v1802 = vadd.f32 %v1758, %v1794
        %v1803 = vadd.f32 %v1759, %v1795
        %v1804 = vadd.f32 %v1760, %v1796
        %v1805 = vmul.f32 %v1617, 0.26601171
        %v1806 = vmul.f32 %v1625, 0.26601171
        %v1807 = vmul.f32 %v1618, 0.26601171
        %v1808 = vmul.f32 %v1626, 0.26601171
        %v1809 = vmul.f32 %v1619, 0.26601171
        %v1810 = vmul.f32 %v1627, 0.26601171
        %v1811 = vmul.f32 %v1620, 0.26601171
        %v1812 = vmul.f32 %v1628, 0.26601171
        %1821 = vrot.lane.b32.xlu0 %v1805, 123
        %v1822 = vpop.permute.xlu0 %1821
        %1823 = vrot.lane.b32.xlu0 %v1806, 123
        %v1824 = vpop.permute.xlu0 %1823
        %1825 = vrot.lane.b32.xlu0 %v1807, 123
        %v1826 = vpop.permute.xlu0 %1825
        %1827 = vrot.lane.b32.xlu0 %v1808, 123
        %v1828 = vpop.permute.xlu0 %1827
        %1829 = vrot.lane.b32.xlu0 %v1809, 123
        %v1830 = vpop.permute.xlu0 %1829
        %1831 = vrot.lane.b32.xlu0 %v1810, 123
        %v1832 = vpop.permute.xlu0 %1831
        %1833 = vrot.lane.b32.xlu0 %v1811, 123
        %v1834 = vpop.permute.xlu0 %1833
        %1835 = vrot.lane.b32.xlu0 %v1812, 123
        %v1836 = vpop.permute.xlu0 %1835
        %v1837 = vsel %vm509, %v1822, %v1824
        %v1838 = vsel %vm509, %v1826, %v1828
        %v1839 = vsel %vm509, %v1830, %v1832
        %v1840 = vsel %vm509, %v1834, %v1836
        %v1845 = vadd.f32 %v1801, %v1837
        %v1846 = vadd.f32 %v1802, %v1838
        %v1847 = vadd.f32 %v1803, %v1839
        %v1848 = vadd.f32 %v1804, %v1840
        %1849 = vrot.lane.b32.xlu0 %v1761, 122
        %v1850 = vpop.permute.xlu0 %1849
        %1851 = vrot.lane.b32.xlu0 %v1762, 122
        %v1852 = vpop.permute.xlu0 %1851
        %1853 = vrot.lane.b32.xlu0 %v1763, 122
        %v1854 = vpop.permute.xlu0 %1853
        %1855 = vrot.lane.b32.xlu0 %v1764, 122
        %v1856 = vpop.permute.xlu0 %1855
        %1857 = vrot.lane.b32.xlu0 %v1765, 122
        %v1858 = vpop.permute.xlu0 %1857
        %1859 = vrot.lane.b32.xlu0 %v1766, 122
        %v1860 = vpop.permute.xlu0 %1859
        %1861 = vrot.lane.b32.xlu0 %v1767, 122
        %v1862 = vpop.permute.xlu0 %1861
        %1863 = vrot.lane.b32.xlu0 %v1768, 122
        %v1864 = vpop.permute.xlu0 %1863
        %v1865 = vsel %vm538, %v1850, %v1852
        %v1866 = vsel %vm538, %v1854, %v1856
        %v1867 = vsel %vm538, %v1858, %v1860
        %v1868 = vsel %vm538, %v1862, %v1864
        %v1873 = vadd.f32 %v1845, %v1865
        %v1874 = vadd.f32 %v1846, %v1866
        %v1875 = vadd.f32 %v1847, %v1867
        %v1876 = vadd.f32 %v1848, %v1868
        %1877 = vrot.lane.b32.xlu0 %v1717, 121
        %v1878 = vpop.permute.xlu0 %1877
        %1879 = vrot.lane.b32.xlu0 %v1718, 121
        %v1880 = vpop.permute.xlu0 %1879
        %1881 = vrot.lane.b32.xlu0 %v1719, 121
        %v1882 = vpop.permute.xlu0 %1881
        %1883 = vrot.lane.b32.xlu0 %v1720, 121
        %v1884 = vpop.permute.xlu0 %1883
        %1885 = vrot.lane.b32.xlu0 %v1721, 121
        %v1886 = vpop.permute.xlu0 %1885
        %1887 = vrot.lane.b32.xlu0 %v1722, 121
        %v1888 = vpop.permute.xlu0 %1887
        %1889 = vrot.lane.b32.xlu0 %v1723, 121
        %v1890 = vpop.permute.xlu0 %1889
        %1891 = vrot.lane.b32.xlu0 %v1724, 121
        %v1892 = vpop.permute.xlu0 %1891
        %v1893 = vsel %vm567, %v1878, %v1880
        %v1894 = vsel %vm567, %v1882, %v1884
        %v1895 = vsel %vm567, %v1886, %v1888
        %v1896 = vsel %vm567, %v1890, %v1892
        %v1901 = vadd.f32 %v1873, %v1893
        %v1902 = vadd.f32 %v1874, %v1894
        %v1903 = vadd.f32 %v1875, %v1895
        %v1904 = vadd.f32 %v1876, %v1896
        %1905 = vrot.lane.b32.xlu0 %v1673, 120
        %v1906 = vpop.permute.xlu0 %1905
        %1907 = vrot.lane.b32.xlu0 %v1674, 120
        %v1908 = vpop.permute.xlu0 %1907
        %1909 = vrot.lane.b32.xlu0 %v1675, 120
        %v1910 = vpop.permute.xlu0 %1909
        %1911 = vrot.lane.b32.xlu0 %v1676, 120
        %v1912 = vpop.permute.xlu0 %1911
        %1913 = vrot.lane.b32.xlu0 %v1677, 120
        %v1914 = vpop.permute.xlu0 %1913
        %1915 = vrot.lane.b32.xlu0 %v1678, 120
        %v1916 = vpop.permute.xlu0 %1915
        %1917 = vrot.lane.b32.xlu0 %v1679, 120
        %v1918 = vpop.permute.xlu0 %1917
        %1919 = vrot.lane.b32.xlu0 %v1680, 120
        %v1920 = vpop.permute.xlu0 %1919
        %v1921 = vsel %vm596, %v1906, %v1908
        %v1922 = vsel %vm596, %v1910, %v1912
        %v1923 = vsel %vm596, %v1914, %v1916
        %v1924 = vsel %vm596, %v1918, %v1920
        %v1929 = vadd.f32 %v1901, %v1921
        %v1930 = vadd.f32 %v1902, %v1922
        %v1931 = vadd.f32 %v1903, %v1923
        %v1932 = vadd.f32 %v1904, %v1924
        %1933 = vrot.lane.b32.xlu0 %v1629, 119
        %v1934 = vpop.permute.xlu0 %1933
        %1935 = vrot.lane.b32.xlu0 %v1630, 119
        %v1936 = vpop.permute.xlu0 %1935
        %1937 = vrot.lane.b32.xlu0 %v1631, 119
        %v1938 = vpop.permute.xlu0 %1937
        %1939 = vrot.lane.b32.xlu0 %v1632, 119
        %v1940 = vpop.permute.xlu0 %1939
        %1941 = vrot.lane.b32.xlu0 %v1633, 119
        %v1942 = vpop.permute.xlu0 %1941
        %1943 = vrot.lane.b32.xlu0 %v1634, 119
        %v1944 = vpop.permute.xlu0 %1943
        %1945 = vrot.lane.b32.xlu0 %v1635, 119
        %v1946 = vpop.permute.xlu0 %1945
        %1947 = vrot.lane.b32.xlu0 %v1636, 119
        %v1948 = vpop.permute.xlu0 %1947
        %v1949 = vsel %vm625, %v1934, %v1936
        %v1950 = vsel %vm625, %v1938, %v1940
        %v1951 = vsel %vm625, %v1942, %v1944
        %v1952 = vsel %vm625, %v1946, %v1948
        %v1957 = vadd.f32 %v1929, %v1949
        %v1958 = vadd.f32 %v1930, %v1950
        %v1959 = vadd.f32 %v1931, %v1951
        %v1960 = vadd.f32 %v1932, %v1952
        %v1961 = vmul.f32 %v1625, 0.0010283801
        %v1962 = vmul.f32 %v1626, 0.0010283801
        %v1963 = vmul.f32 %v1627, 0.0010283801
        %v1964 = vmul.f32 %v1628, 0.0010283801
        %1973 = vrot.lane.b32.xlu0 %v1621, 118
        %v1974 = vpop.permute.xlu0 %1973
        %1975 = vrot.lane.b32.xlu0 %v1961, 118
        %v1976 = vpop.permute.xlu0 %1975
        %1977 = vrot.lane.b32.xlu0 %v1622, 118
        %v1978 = vpop.permute.xlu0 %1977
        %1979 = vrot.lane.b32.xlu0 %v1962, 118
        %v1980 = vpop.permute.xlu0 %1979
        %1981 = vrot.lane.b32.xlu0 %v1623, 118
        %v1982 = vpop.permute.xlu0 %1981
        %1983 = vrot.lane.b32.xlu0 %v1963, 118
        %v1984 = vpop.permute.xlu0 %1983
        %1985 = vrot.lane.b32.xlu0 %v1624, 118
        %v1986 = vpop.permute.xlu0 %1985
        %1987 = vrot.lane.b32.xlu0 %v1964, 118
        %v1988 = vpop.permute.xlu0 %1987
        %v1989 = vsel %vm666, %v1974, %v1976
        %v1990 = vsel %vm666, %v1978, %v1980
        %v1991 = vsel %vm666, %v1982, %v1984
        %v1992 = vsel %vm666, %v1986, %v1988
        %v1997 = vadd.f32 %v1957, %v1989
        %v1998 = vadd.f32 %v1958, %v1990
        %v1999 = vadd.f32 %v1959, %v1991
        %v2000 = vadd.f32 %v1960, %v1992
        %2001 = vst [vmem:[#allocation3] sm:$0xff] %v1997
        %2002 = vst [vmem:[#allocation3 + $0x8] sm:$0xff] %v1998
        %2003 = vst [vmem:[#allocation3 + $0x10] sm:$0xff] %v1999
        %2004 = vst [vmem:[#allocation3 + $0x18] sm:$0xff] %v2000
        %v2005 = vld [vmem:[#allocation6] sm:$0xff]
        %v2006 = vld [vmem:[#allocation6 + $0x8] sm:$0xff]
        %v2007 = vld [vmem:[#allocation6 + $0x10] sm:$0x3f]
        %v2008 = vld [vmem:[#allocation3] sm:$0xff]
        %v2009 = vld [vmem:[#allocation3 + $0x8] sm:$0xff]
        %v2010 = vld [vmem:[#allocation3 + $0x10] sm:$0xff]
        %v2011 = vld [vmem:[#allocation3 + $0x18] sm:$0xff]
        %2012 = vmatpush.msra.mxu0 0.0
        %2013 = vmatpush.msra.mxu0 0.0
        %2014 = vmatpush.msra.mxu0 0.0
        %2015 = vmatpush.msra.mxu0 0.0
        %2016 = vmatpush.msra.mxu0 0.0
        %2017 = vmatpush.msra.mxu0 0.0
        %2018 = vmatpush.msra.mxu0 0.0
        %2019 = vmatpush.msra.mxu0 0.0
        %2020 = vmatpush.msra.mxu0 0.0
        %2021 = vmatpush.msra.mxu0 0.0
        %2022 = vmatpush.msra.mxu0 0.0
        %2023 = vmatpush.msra.mxu0 0.0
        %2024 = vmatpush.msra.mxu0 %v2011
        %2025 = vmatpush.msra.mxu0 %v2010
        %2026 = vmatpush.msra.mxu0 %v2009
        %2027 = vmatpush.msra.mxu0 %v2008
        %2028 = vmatmul.f32.gmra.mxu0 %v689
        %v2029 = vpop.f32.mrf.mxu0
        %v2030 = vadd.f32 0.0, %v2029
        %2031 = vmatmul.f32.gmra.mxu0 %v692
        %v2032 = vpop.f32.mrf.mxu0
        %v2033 = vadd.f32 0.0, %v2032
        %2034 = vmatmul.f32.gmra.mxu0 %v695
        %v2035 = vpop.f32.mrf.mxu0
        %v2036 = vadd.f32 0.0, %v2035
        %2037 = vdwg.mxu0
        %v2038 = vadd.f32 %v2005, %v2030
        %v2039 = vadd.f32 %v2006, %v2033
        %v2040 = vadd.f32 %v2007, %v2036
        %2041 = vst [vmem:[#allocation6] sm:$0xff] %v2038
        %2042 = vst [vmem:[#allocation6 + $0x8] sm:$0xff] %v2039
        %2043 = vst [vmem:[#allocation6 + $0x10] sm:$0x3f] %v2040
        %v2044 = vld [vmem:[%s234] sm:$0xff]
        %v2045 = vld [vmem:[%s234 + $0x8] sm:$0xff]
        %v2046 = vld [vmem:[%s234 + $0x10] sm:$0xff]
        %v2047 = vld [vmem:[%s234 + $0x18] sm:$0xff]
        %v2048 = vld [vmem:[%s234 + $0x20] sm:$0xff]
        %v2049 = vld [vmem:[%s234 + $0x28] sm:$0xff]
        %v2050 = vld [vmem:[%s234 + $0x30] sm:$0xff]
        %v2051 = vld [vmem:[%s234 + $0x38] sm:$0xff]
        %v2052 = vld [vmem:[%s244] sm:$0xff]
        %v2053 = vld [vmem:[%s244 + $0x8] sm:$0xff]
        %v2054 = vld [vmem:[%s244 + $0x10] sm:$0xff]
        %v2055 = vld [vmem:[%s244 + $0x18] sm:$0xff]
        %v2056 = vld [vmem:[%s244 + $0x20] sm:$0xff]
        %v2057 = vld [vmem:[%s244 + $0x28] sm:$0xff]
        %v2058 = vld [vmem:[%s244 + $0x30] sm:$0xff]
        %v2059 = vld [vmem:[%s244 + $0x38] sm:$0xff]
        %v2060 = vmul.f32 %v2044, %v2052
        %v2061 = vmul.f32 %v2045, %v2053
        %v2062 = vmul.f32 %v2046, %v2054
        %v2063 = vmul.f32 %v2047, %v2055
        %v2064 = vmul.f32 %v2048, %v2056
        %v2065 = vmul.f32 %v2049, %v2057
        %v2066 = vmul.f32 %v2050, %v2058
        %v2067 = vmul.f32 %v2051, %v2059
        %2068 = vst [vmem:[#allocation2] sm:$0xff] %v2060
        %2069 = vst.msk [vmem:[#allocation2 + $0x8] sm:$0xff] %vm1164, %v2061
        %2070 = vst [vmem:[#allocation2 + $0x10] sm:$0xff] %v2062
        %2071 = vst.msk [vmem:[#allocation2 + $0x18] sm:$0xff] %vm1164, %v2063
        %2072 = vst [vmem:[#allocation2 + $0x20] sm:$0xff] %v2064
        %2073 = vst.msk [vmem:[#allocation2 + $0x28] sm:$0xff] %vm1164, %v2065
        %2074 = vst [vmem:[#allocation2 + $0x30] sm:$0xff] %v2066
        %2075 = vst.msk [vmem:[#allocation2 + $0x38] sm:$0xff] %vm1164, %v2067
        %v2076 = vld [vmem:[#allocation2] sm:$0xff]
        %v2077 = vld [vmem:[#allocation2 + $0x10] sm:$0xff]
        %v2078 = vld [vmem:[#allocation2 + $0x20] sm:$0xff]
        %v2079 = vld [vmem:[#allocation2 + $0x30] sm:$0xff]
        %v2080 = vmul.f32 %v2076, 0.0010283801
        %v2081 = vmul.f32 %v2077, 0.0010283801
        %v2082 = vmul.f32 %v2078, 0.0010283801
        %v2083 = vmul.f32 %v2079, 0.0010283801
        %v2084 = vld [vmem:[#allocation2 + $0x8] sm:$0xff]
        %v2085 = vld [vmem:[#allocation2 + $0x18] sm:$0xff]
        %v2086 = vld [vmem:[#allocation2 + $0x28] sm:$0xff]
        %v2087 = vld [vmem:[#allocation2 + $0x38] sm:$0xff]
        %v2088 = vmul.f32 %v2076, 0.007598758
        %v2089 = vmul.f32 %v2084, 0.007598758
        %v2090 = vmul.f32 %v2077, 0.007598758
        %v2091 = vmul.f32 %v2085, 0.007598758
        %v2092 = vmul.f32 %v2078, 0.007598758
        %v2093 = vmul.f32 %v2086, 0.007598758
        %v2094 = vmul.f32 %v2079, 0.007598758
        %v2095 = vmul.f32 %v2087, 0.007598758
        %2104 = vrot.lane.b32.xlu0 %v2088, 127
        %v2105 = vpop.permute.xlu0 %2104
        %2106 = vrot.lane.b32.xlu0 %v2089, 127
        %v2107 = vpop.permute.xlu0 %2106
        %2108 = vrot.lane.b32.xlu0 %v2090, 127
        %v2109 = vpop.permute.xlu0 %2108
        %2110 = vrot.lane.b32.xlu0 %v2091, 127
        %v2111 = vpop.permute.xlu0 %2110
        %2112 = vrot.lane.b32.xlu0 %v2092, 127
        %v2113 = vpop.permute.xlu0 %2112
        %2114 = vrot.lane.b32.xlu0 %v2093, 127
        %v2115 = vpop.permute.xlu0 %2114
        %2116 = vrot.lane.b32.xlu0 %v2094, 127
        %v2117 = vpop.permute.xlu0 %2116
        %2118 = vrot.lane.b32.xlu0 %v2095, 127
        %v2119 = vpop.permute.xlu0 %2118
        %v2120 = vsel %vm329, %v2105, %v2107
        %v2121 = vsel %vm329, %v2109, %v2111
        %v2122 = vsel %vm329, %v2113, %v2115
        %v2123 = vsel %vm329, %v2117, %v2119
        %v2128 = vadd.f32 %v2080, %v2120
        %v2129 = vadd.f32 %v2081, %v2121
        %v2130 = vadd.f32 %v2082, %v2122
        %v2131 = vadd.f32 %v2083, %v2123
        %v2132 = vmul.f32 %v2076, 0.036000773
        %v2133 = vmul.f32 %v2084, 0.036000773
        %v2134 = vmul.f32 %v2077, 0.036000773
        %v2135 = vmul.f32 %v2085, 0.036000773
        %v2136 = vmul.f32 %v2078, 0.036000773
        %v2137 = vmul.f32 %v2086, 0.036000773
        %v2138 = vmul.f32 %v2079, 0.036000773
        %v2139 = vmul.f32 %v2087, 0.036000773
        %2148 = vrot.lane.b32.xlu0 %v2132, 126
        %v2149 = vpop.permute.xlu0 %2148
        %2150 = vrot.lane.b32.xlu0 %v2133, 126
        %v2151 = vpop.permute.xlu0 %2150
        %2152 = vrot.lane.b32.xlu0 %v2134, 126
        %v2153 = vpop.permute.xlu0 %2152
        %2154 = vrot.lane.b32.xlu0 %v2135, 126
        %v2155 = vpop.permute.xlu0 %2154
        %2156 = vrot.lane.b32.xlu0 %v2136, 126
        %v2157 = vpop.permute.xlu0 %2156
        %2158 = vrot.lane.b32.xlu0 %v2137, 126
        %v2159 = vpop.permute.xlu0 %2158
        %2160 = vrot.lane.b32.xlu0 %v2138, 126
        %v2161 = vpop.permute.xlu0 %2160
        %2162 = vrot.lane.b32.xlu0 %v2139, 126
        %v2163 = vpop.permute.xlu0 %2162
        %v2164 = vsel %vm374, %v2149, %v2151
        %v2165 = vsel %vm374, %v2153, %v2155
        %v2166 = vsel %vm374, %v2157, %v2159
        %v2167 = vsel %vm374, %v2161, %v2163
        %v2172 = vadd.f32 %v2128, %v2164
        %v2173 = vadd.f32 %v2129, %v2165
        %v2174 = vadd.f32 %v2130, %v2166
        %v2175 = vadd.f32 %v2131, %v2167
        %v2176 = vmul.f32 %v2076, 0.10936069
        %v2177 = vmul.f32 %v2084, 0.10936069
        %v2178 = vmul.f32 %v2077, 0.10936069
        %v2179 = vmul.f32 %v2085, 0.10936069
        %v2180 = vmul.f32 %v2078, 0.10936069
        %v2181 = vmul.f32 %v2086, 0.10936069
        %v2182 = vmul.f32 %v2079, 0.10936069
        %v2183 = vmul.f32 %v2087, 0.10936069
        %2192 = vrot.lane.b32.xlu0 %v2176, 125
        %v2193 = vpop.permute.xlu0 %2192
        %2194 = vrot.lane.b32.xlu0 %v2177, 125
        %v2195 = vpop.permute.xlu0 %2194
        %2196 = vrot.lane.b32.xlu0 %v2178, 125
        %v2197 = vpop.permute.xlu0 %2196
        %2198 = vrot.lane.b32.xlu0 %v2179, 125
        %v2199 = vpop.permute.xlu0 %2198
        %2200 = vrot.lane.b32.xlu0 %v2180, 125
        %v2201 = vpop.permute.xlu0 %2200
        %2202 = vrot.lane.b32.xlu0 %v2181, 125
        %v2203 = vpop.permute.xlu0 %2202
        %2204 = vrot.lane.b32.xlu0 %v2182, 125
        %v2205 = vpop.permute.xlu0 %2204
        %2206 = vrot.lane.b32.xlu0 %v2183, 125
        %v2207 = vpop.permute.xlu0 %2206
        %v2208 = vsel %vm419, %v2193, %v2195
        %v2209 = vsel %vm419, %v2197, %v2199
        %v2210 = vsel %vm419, %v2201, %v2203
        %v2211 = vsel %vm419, %v2205, %v2207
        %v2216 = vadd.f32 %v2172, %v2208
        %v2217 = vadd.f32 %v2173, %v2209
        %v2218 = vadd.f32 %v2174, %v2210
        %v2219 = vadd.f32 %v2175, %v2211
        %v2220 = vmul.f32 %v2076, 0.21300554
        %v2221 = vmul.f32 %v2084, 0.21300554
        %v2222 = vmul.f32 %v2077, 0.21300554
        %v2223 = vmul.f32 %v2085, 0.21300554
        %v2224 = vmul.f32 %v2078, 0.21300554
        %v2225 = vmul.f32 %v2086, 0.21300554
        %v2226 = vmul.f32 %v2079, 0.21300554
        %v2227 = vmul.f32 %v2087, 0.21300554
        %2236 = vrot.lane.b32.xlu0 %v2220, 124
        %v2237 = vpop.permute.xlu0 %2236
        %2238 = vrot.lane.b32.xlu0 %v2221, 124
        %v2239 = vpop.permute.xlu0 %2238
        %2240 = vrot.lane.b32.xlu0 %v2222, 124
        %v2241 = vpop.permute.xlu0 %2240
        %2242 = vrot.lane.b32.xlu0 %v2223, 124
        %v2243 = vpop.permute.xlu0 %2242
        %2244 = vrot.lane.b32.xlu0 %v2224, 124
        %v2245 = vpop.permute.xlu0 %2244
        %2246 = vrot.lane.b32.xlu0 %v2225, 124
        %v2247 = vpop.permute.xlu0 %2246
        %2248 = vrot.lane.b32.xlu0 %v2226, 124
        %v2249 = vpop.permute.xlu0 %2248
        %2250 = vrot.lane.b32.xlu0 %v2227, 124
        %v2251 = vpop.permute.xlu0 %2250
        %v2252 = vsel %vm464, %v2237, %v2239
        %v2253 = vsel %vm464, %v2241, %v2243
        %v2254 = vsel %vm464, %v2245, %v2247
        %v2255 = vsel %vm464, %v2249, %v2251
        %v2260 = vadd.f32 %v2216, %v2252
        %v2261 = vadd.f32 %v2217, %v2253
        %v2262 = vadd.f32 %v2218, %v2254
        %v2263 = vadd.f32 %v2219, %v2255
        %v2264 = vmul.f32 %v2076, 0.26601171
        %v2265 = vmul.f32 %v2084, 0.26601171
        %v2266 = vmul.f32 %v2077, 0.26601171
        %v2267 = vmul.f32 %v2085, 0.26601171
        %v2268 = vmul.f32 %v2078, 0.26601171
        %v2269 = vmul.f32 %v2086, 0.26601171
        %v2270 = vmul.f32 %v2079, 0.26601171
        %v2271 = vmul.f32 %v2087, 0.26601171
        %2280 = vrot.lane.b32.xlu0 %v2264, 123
        %v2281 = vpop.permute.xlu0 %2280
        %2282 = vrot.lane.b32.xlu0 %v2265, 123
        %v2283 = vpop.permute.xlu0 %2282
        %2284 = vrot.lane.b32.xlu0 %v2266, 123
        %v2285 = vpop.permute.xlu0 %2284
        %2286 = vrot.lane.b32.xlu0 %v2267, 123
        %v2287 = vpop.permute.xlu0 %2286
        %2288 = vrot.lane.b32.xlu0 %v2268, 123
        %v2289 = vpop.permute.xlu0 %2288
        %2290 = vrot.lane.b32.xlu0 %v2269, 123
        %v2291 = vpop.permute.xlu0 %2290
        %2292 = vrot.lane.b32.xlu0 %v2270, 123
        %v2293 = vpop.permute.xlu0 %2292
        %2294 = vrot.lane.b32.xlu0 %v2271, 123
        %v2295 = vpop.permute.xlu0 %2294
        %v2296 = vsel %vm509, %v2281, %v2283
        %v2297 = vsel %vm509, %v2285, %v2287
        %v2298 = vsel %vm509, %v2289, %v2291
        %v2299 = vsel %vm509, %v2293, %v2295
        %v2304 = vadd.f32 %v2260, %v2296
        %v2305 = vadd.f32 %v2261, %v2297
        %v2306 = vadd.f32 %v2262, %v2298
        %v2307 = vadd.f32 %v2263, %v2299
        %2308 = vrot.lane.b32.xlu0 %v2220, 122
        %v2309 = vpop.permute.xlu0 %2308
        %2310 = vrot.lane.b32.xlu0 %v2221, 122
        %v2311 = vpop.permute.xlu0 %2310
        %2312 = vrot.lane.b32.xlu0 %v2222, 122
        %v2313 = vpop.permute.xlu0 %2312
        %2314 = vrot.lane.b32.xlu0 %v2223, 122
        %v2315 = vpop.permute.xlu0 %2314
        %2316 = vrot.lane.b32.xlu0 %v2224, 122
        %v2317 = vpop.permute.xlu0 %2316
        %2318 = vrot.lane.b32.xlu0 %v2225, 122
        %v2319 = vpop.permute.xlu0 %2318
        %2320 = vrot.lane.b32.xlu0 %v2226, 122
        %v2321 = vpop.permute.xlu0 %2320
        %2322 = vrot.lane.b32.xlu0 %v2227, 122
        %v2323 = vpop.permute.xlu0 %2322
        %v2324 = vsel %vm538, %v2309, %v2311
        %v2325 = vsel %vm538, %v2313, %v2315
        %v2326 = vsel %vm538, %v2317, %v2319
        %v2327 = vsel %vm538, %v2321, %v2323
        %v2332 = vadd.f32 %v2304, %v2324
        %v2333 = vadd.f32 %v2305, %v2325
        %v2334 = vadd.f32 %v2306, %v2326
        %v2335 = vadd.f32 %v2307, %v2327
        %2336 = vrot.lane.b32.xlu0 %v2176, 121
        %v2337 = vpop.permute.xlu0 %2336
        %2338 = vrot.lane.b32.xlu0 %v2177, 121
        %v2339 = vpop.permute.xlu0 %2338
        %2340 = vrot.lane.b32.xlu0 %v2178, 121
        %v2341 = vpop.permute.xlu0 %2340
        %2342 = vrot.lane.b32.xlu0 %v2179, 121
        %v2343 = vpop.permute.xlu0 %2342
        %2344 = vrot.lane.b32.xlu0 %v2180, 121
        %v2345 = vpop.permute.xlu0 %2344
        %2346 = vrot.lane.b32.xlu0 %v2181, 121
        %v2347 = vpop.permute.xlu0 %2346
        %2348 = vrot.lane.b32.xlu0 %v2182, 121
        %v2349 = vpop.permute.xlu0 %2348
        %2350 = vrot.lane.b32.xlu0 %v2183, 121
        %v2351 = vpop.permute.xlu0 %2350
        %v2352 = vsel %vm567, %v2337, %v2339
        %v2353 = vsel %vm567, %v2341, %v2343
        %v2354 = vsel %vm567, %v2345, %v2347
        %v2355 = vsel %vm567, %v2349, %v2351
        %v2360 = vadd.f32 %v2332, %v2352
        %v2361 = vadd.f32 %v2333, %v2353
        %v2362 = vadd.f32 %v2334, %v2354
        %v2363 = vadd.f32 %v2335, %v2355
        %2364 = vrot.lane.b32.xlu0 %v2132, 120
        %v2365 = vpop.permute.xlu0 %2364
        %2366 = vrot.lane.b32.xlu0 %v2133, 120
        %v2367 = vpop.permute.xlu0 %2366
        %2368 = vrot.lane.b32.xlu0 %v2134, 120
        %v2369 = vpop.permute.xlu0 %2368
        %2370 = vrot.lane.b32.xlu0 %v2135, 120
        %v2371 = vpop.permute.xlu0 %2370
        %2372 = vrot.lane.b32.xlu0 %v2136, 120
        %v2373 = vpop.permute.xlu0 %2372
        %2374 = vrot.lane.b32.xlu0 %v2137, 120
        %v2375 = vpop.permute.xlu0 %2374
        %2376 = vrot.lane.b32.xlu0 %v2138, 120
        %v2377 = vpop.permute.xlu0 %2376
        %2378 = vrot.lane.b32.xlu0 %v2139, 120
        %v2379 = vpop.permute.xlu0 %2378
        %v2380 = vsel %vm596, %v2365, %v2367
        %v2381 = vsel %vm596, %v2369, %v2371
        %v2382 = vsel %vm596, %v2373, %v2375
        %v2383 = vsel %vm596, %v2377, %v2379
        %v2388 = vadd.f32 %v2360, %v2380
        %v2389 = vadd.f32 %v2361, %v2381
        %v2390 = vadd.f32 %v2362, %v2382
        %v2391 = vadd.f32 %v2363, %v2383
        %2392 = vrot.lane.b32.xlu0 %v2088, 119
        %v2393 = vpop.permute.xlu0 %2392
        %2394 = vrot.lane.b32.xlu0 %v2089, 119
        %v2395 = vpop.permute.xlu0 %2394
        %2396 = vrot.lane.b32.xlu0 %v2090, 119
        %v2397 = vpop.permute.xlu0 %2396
        %2398 = vrot.lane.b32.xlu0 %v2091, 119
        %v2399 = vpop.permute.xlu0 %2398
        %2400 = vrot.lane.b32.xlu0 %v2092, 119
        %v2401 = vpop.permute.xlu0 %2400
        %2402 = vrot.lane.b32.xlu0 %v2093, 119
        %v2403 = vpop.permute.xlu0 %2402
        %2404 = vrot.lane.b32.xlu0 %v2094, 119
        %v2405 = vpop.permute.xlu0 %2404
        %2406 = vrot.lane.b32.xlu0 %v2095, 119
        %v2407 = vpop.permute.xlu0 %2406
        %v2408 = vsel %vm625, %v2393, %v2395
        %v2409 = vsel %vm625, %v2397, %v2399
        %v2410 = vsel %vm625, %v2401, %v2403
        %v2411 = vsel %vm625, %v2405, %v2407
        %v2416 = vadd.f32 %v2388, %v2408
        %v2417 = vadd.f32 %v2389, %v2409
        %v2418 = vadd.f32 %v2390, %v2410
        %v2419 = vadd.f32 %v2391, %v2411
        %v2420 = vmul.f32 %v2084, 0.0010283801
        %v2421 = vmul.f32 %v2085, 0.0010283801
        %v2422 = vmul.f32 %v2086, 0.0010283801
        %v2423 = vmul.f32 %v2087, 0.0010283801
        %2432 = vrot.lane.b32.xlu0 %v2080, 118
        %v2433 = vpop.permute.xlu0 %2432
        %2434 = vrot.lane.b32.xlu0 %v2420, 118
        %v2435 = vpop.permute.xlu0 %2434
        %2436 = vrot.lane.b32.xlu0 %v2081, 118
        %v2437 = vpop.permute.xlu0 %2436
        %2438 = vrot.lane.b32.xlu0 %v2421, 118
        %v2439 = vpop.permute.xlu0 %2438
        %2440 = vrot.lane.b32.xlu0 %v2082, 118
        %v2441 = vpop.permute.xlu0 %2440
        %2442 = vrot.lane.b32.xlu0 %v2422, 118
        %v2443 = vpop.permute.xlu0 %2442
        %2444 = vrot.lane.b32.xlu0 %v2083, 118
        %v2445 = vpop.permute.xlu0 %2444
        %2446 = vrot.lane.b32.xlu0 %v2423, 118
        %v2447 = vpop.permute.xlu0 %2446
        %v2448 = vsel %vm666, %v2433, %v2435
        %v2449 = vsel %vm666, %v2437, %v2439
        %v2450 = vsel %vm666, %v2441, %v2443
        %v2451 = vsel %vm666, %v2445, %v2447
        %v2456 = vadd.f32 %v2416, %v2448
        %v2457 = vadd.f32 %v2417, %v2449
        %v2458 = vadd.f32 %v2418, %v2450
        %v2459 = vadd.f32 %v2419, %v2451
        %2460 = vst [vmem:[#allocation3] sm:$0xff] %v2456
        %2461 = vst [vmem:[#allocation3 + $0x8] sm:$0xff] %v2457
        %2462 = vst [vmem:[#allocation3 + $0x10] sm:$0xff] %v2458
        %2463 = vst [vmem:[#allocation3 + $0x18] sm:$0xff] %v2459
        %v2464 = vld [vmem:[#allocation3] sm:$0xff]
        %v2465 = vld [vmem:[#allocation3 + $0x8] sm:$0xff]
        %v2466 = vld [vmem:[#allocation3 + $0x10] sm:$0xff]
        %v2467 = vld [vmem:[#allocation3 + $0x18] sm:$0xff]
        %2468 = vmatpush.msra.mxu0 0.0
        %2469 = vmatpush.msra.mxu0 0.0
        %2470 = vmatpush.msra.mxu0 0.0
        %2471 = vmatpush.msra.mxu0 0.0
        %2472 = vmatpush.msra.mxu0 0.0
        %2473 = vmatpush.msra.mxu0 0.0
        %2474 = vmatpush.msra.mxu0 0.0
        %2475 = vmatpush.msra.mxu0 0.0
        %2476 = vmatpush.msra.mxu0 0.0
        %2477 = vmatpush.msra.mxu0 0.0
        %2478 = vmatpush.msra.mxu0 0.0
        %2479 = vmatpush.msra.mxu0 0.0
        %2480 = vmatpush.msra.mxu0 %v2467
        %2481 = vmatpush.msra.mxu0 %v2466
        %2482 = vmatpush.msra.mxu0 %v2465
        %2483 = vmatpush.msra.mxu0 %v2464
        %2484 = vmatmul.f32.gmra.mxu0 %v689
        %v2485 = vpop.f32.mrf.mxu0
        %v2486 = vadd.f32 0.0, %v2485
        %2487 = vmatmul.f32.gmra.mxu0 %v692
        %v2488 = vpop.f32.mrf.mxu0
        %v2489 = vadd.f32 0.0, %v2488
        %2490 = vmatmul.f32.gmra.mxu0 %v695
        %v2491 = vpop.f32.mrf.mxu0
        %v2492 = vadd.f32 0.0, %v2491
        %2493 = vdwg.mxu0
        %2494 = vst [vmem:[#allocation7] sm:$0xff] %v2486
        %2495 = vst [vmem:[#allocation7 + $0x8] sm:$0xff] %v2489
        %2496 = vst [vmem:[#allocation7 + $0x10] sm:$0x3f] %v2492
        %v2497 = vld [vmem:[#allocation4] sm:$0xff]
        %v2498 = vld [vmem:[#allocation4 + $0x8] sm:$0xff]
        %v2499 = vld [vmem:[#allocation4 + $0x10] sm:$0x3f]
        %v2500 = vld [vmem:[#allocation5] sm:$0xff]
        %v2501 = vld [vmem:[#allocation5 + $0x8] sm:$0xff]
        %v2502 = vld [vmem:[#allocation5 + $0x10] sm:$0x3f]
        %v2503 = vadd.f32 %v2497, 0.5
        %v2504 = vadd.f32 %v2498, 0.5
        %v2505 = vadd.f32 %v2499, 0.5
        %v2506 = vadd.f32 %v2500, 0.5
        %v2507 = vadd.f32 %v2501, 0.5
        %v2508 = vadd.f32 %v2502, 0.5
        %v2509 = vmul.f32 %v2503, %v2503
        %v2510 = vmul.f32 %v2504, %v2504
        %v2511 = vmul.f32 %v2505, %v2505
        %v2512 = vmul.f32 %v2506, %v2506
        %v2513 = vmul.f32 %v2507, %v2507
        %v2514 = vmul.f32 %v2508, %v2508
        %v2515 = vmul.f32 %v2503, %v2506
        %v2516 = vmul.f32 %v2504, %v2507
        %v2517 = vmul.f32 %v2505, %v2508
        %v2518 = vld [vmem:[#allocation6] sm:$0xff]
        %v2519 = vld [vmem:[#allocation6 + $0x8] sm:$0xff]
        %v2520 = vld [vmem:[#allocation6 + $0x10] sm:$0x3f]
        %v2521 = vmul.f32 %v2497, %v2497
        %v2522 = vmul.f32 %v2498, %v2498
        %v2523 = vmul.f32 %v2499, %v2499
        %v2524 = vsub.f32 %v2518, %v2521
        %v2525 = vsub.f32 %v2519, %v2522
        %v2526 = vsub.f32 %v2520, %v2523
        %v2527 = vmul.f32 %v2500, %v2500
        %v2528 = vmul.f32 %v2501, %v2501
        %v2529 = vmul.f32 %v2502, %v2502
        %v2530 = vsub.f32 %v2524, %v2527
        %v2531 = vsub.f32 %v2525, %v2528
        %v2532 = vsub.f32 %v2526, %v2529
        %v2533 = vld [vmem:[#allocation7] sm:$0xff]
        %v2534 = vld [vmem:[#allocation7 + $0x8] sm:$0xff]
        %v2535 = vld [vmem:[#allocation7 + $0x10] sm:$0x3f]
        %v2536 = vmul.f32 %v2497, %v2500
        %v2537 = vmul.f32 %v2498, %v2501
        %v2538 = vmul.f32 %v2499, %v2502
        %v2539 = vsub.f32 %v2533, %v2536
        %v2540 = vsub.f32 %v2534, %v2537
        %v2541 = vsub.f32 %v2535, %v2538
        %v2542 = vmul.f32 %v2539, 2.0
        %v2543 = vmul.f32 %v2540, 2.0
        %v2544 = vmul.f32 %v2541, 2.0
        %v2545 = vadd.f32 %v2542, 0.0009
        %v2546 = vadd.f32 %v2543, 0.0009
        %v2547 = vadd.f32 %v2544, 0.0009
        %v2548 = vadd.f32 %v2530, 0.0009
        %v2549 = vadd.f32 %v2531, 0.0009
        %v2550 = vadd.f32 %v2532, 0.0009
        %v2551 = vrcp.pop %v2548
        %v2552 = vrcp.pop %v2549
        %v2553 = vrcp.pop %v2550
        %v2554 = vmul.f32 %v2548, %v2551
        %v2555 = vmul.f32 %v2549, %v2552
        %v2556 = vmul.f32 %v2550, %v2553
        %v2557 = vsub.f32 2.0, %v2554
        %v2558 = vsub.f32 2.0, %v2555
        %v2559 = vsub.f32 2.0, %v2556
        %v2560 = vmul.f32 %v2551, %v2557
        %v2561 = vmul.f32 %v2552, %v2558
        %v2562 = vmul.f32 %v2553, %v2559
        %v2563 = vmul.f32 %v2545, %v2560
        %v2564 = vmul.f32 %v2546, %v2561
        %v2565 = vmul.f32 %v2547, %v2562
        %v2566 = vmul.f32 %v2515, 2.0
        %v2567 = vmul.f32 %v2516, 2.0
        %v2568 = vmul.f32 %v2517, 2.0
        %v2569 = vadd.f32 %v2566, 0.0001
        %v2570 = vadd.f32 %v2567, 0.0001
        %v2571 = vadd.f32 %v2568, 0.0001
        %v2572 = vadd.f32 %v2509, %v2512
        %v2573 = vadd.f32 %v2510, %v2513
        %v2574 = vadd.f32 %v2511, %v2514
        %v2575 = vadd.f32 %v2572, 0.0001
        %v2576 = vadd.f32 %v2573, 0.0001
        %v2577 = vadd.f32 %v2574, 0.0001
        %v2578 = vrcp.pop %v2575
        %v2579 = vrcp.pop %v2576
        %v2580 = vrcp.pop %v2577
        %v2581 = vmul.f32 %v2575, %v2578
        %v2582 = vmul.f32 %v2576, %v2579
        %v2583 = vmul.f32 %v2577, %v2580
        %v2584 = vsub.f32 2.0, %v2581
        %v2585 = vsub.f32 2.0, %v2582
        %v2586 = vsub.f32 2.0, %v2583
        %v2587 = vmul.f32 %v2578, %v2584
        %v2588 = vmul.f32 %v2579, %v2585
        %v2589 = vmul.f32 %v2580, %v2586
        %v2590 = vmul.f32 %v2569, %v2587
        %v2591 = vmul.f32 %v2570, %v2588
        %v2592 = vmul.f32 %v2571, %v2589
        %v2593 = vmul.f32 %v2590, %v2563
        %v2594 = vmul.f32 %v2591, %v2564
        %v2595 = vmul.f32 %v2592, %v2565
        %v2596 = vlaneseq
        %v2597 = vand.u32 %v2596, 127
        %vm2598 = vcmp.lt.s32.totalorder %v2597, 22
        %v2599 = vld [vmem:[%s276] sm:$0x1]
        %v2600 = vsel %vm2598, %v2593, 0.0
        %v2601 = vsel %vm2598, %v2594, 0.0
        %v2602 = vsel %vm2598, %v2595, 0.0
        %v2603 = vadd.f32 %v2600, %v2601
        %vm2604 = vcmask 1045504
        %v2605 = vsel %vm2604, %v2602, 0.0
        %v2606 = vadd.f32 %v2603, %v2605
        %2607 = vadd.xlane.f32.xlu0 %v2606
        %v2608 = vpop.xlane.xlu0 %2607
        %v2609 = vrot.slane %v2608, 4
        %v2610 = vadd.f32 %v2608, %v2609
        %v2611 = vrot.slane %v2610, 2
        %v2612 = vadd.f32 %v2610, %v2611
        %v2613 = vrot.slane %v2612, 1
        %v2614 = vadd.f32 %v2612, %v2613
        %s2615 = vtos %v2614
        %v2616 = vstv %s2615
        %v2617 = vadd.f32 %v2599, %v2616
        %2618 = vst [vmem:[%s276] sm:$0x1] %v2617
        // Predicated region
        $region49: #{tpu_custom_call.1} parent=31 // pred_check
          %p2619 = pneg %p277
        $region50: #{tpu_custom_call.1} parent=31 // pred_check_branch
          %2621 = sbr.rel (%p2619) target = $region52
        $region51: #{tpu_custom_call.1} parent=31 // pred_region
          %v2622 = vld [vmem:[%s276] sm:$0x1]
          %v2623 = vmul.f32 %v2622, 0.0020661156
          %2624 = vst [vmem:[%s276] sm:$0x1] %v2623
        $region52: #{tpu_custom_call.1} parent=31 // pred_fallthru
          _
        %s2625 = sand.u32 %s129, 1
        %s2626 = scalar_lea.sflag [#allocation10], %s2625
        %s2627 = sand.u32 %s129, 1
        %s2628 = scalar_lea.vmem [#allocation14], %s2627
        // Predicated region
        $region53: #{tpu_custom_call.1} parent=31 // pred_check
          %p2629 = pneg %p139
        $region54: #{tpu_custom_call.1} parent=31 // pred_check_branch
          %2631 = sbr.rel (%p2629) target = $region56
        $region55: #{tpu_custom_call.1} parent=31 // pred_region
          %2633 = vsyncadd %s2626, 0
          %s2634 = smul.addr %s28, 3
          %s2635 = sadd.s32 %s29, %s2634
          %s2636 = scalar_lea.hbm %s3, %s2635
          %s2638 = sshll.u32 %s2628, 4
          %s2639 = int_to_ptr.vmem [resolvable:$true] %s2638
          %s2640 = sshll.u32 %s2636, 4
          %s2641 = int_to_ptr.hbm [resolvable:$true] %s2640
          %2643 = dma.vmem_to_hbm [thread:$0]  %s2639, 16, %s2641, %s2626
        $region56: #{tpu_custom_call.1} parent=31 // pred_fallthru
          _
      $region32: #{tpu_custom_call.1} parent=5 // pred_fallthru
        _
      %p2644 = scmp.le.s32.totalorder 2, %s18
      // Predicated region
      $region57: #{tpu_custom_call.1} parent=5 // pred_check
        %p2645 = pneg %p2644
      $region58: #{tpu_custom_call.1} parent=5 // pred_check_branch
        %2647 = sbr.rel (%p2645) target = $region60
      $region59: #{tpu_custom_call.1} parent=5 // pred_region
        %s2648 = ssub.s32 %s18, 2
        // Predicated region
        $region61: #{tpu_custom_call.1} parent=59 // pred_check
          %p2649 = pneg %p145
        $region62: #{tpu_custom_call.1} parent=59 // pred_check_branch
          %2651 = sbr.rel (%p2649) target = $region64
        $region63: #{tpu_custom_call.1} parent=59 // pred_region
          %s2652 = sand.u32 %s130, 1
          %s2653 = scalar_lea.sflag [#allocation10], %s2652
          %s2654 = sand.u32 %s130, 1
          %s2655 = scalar_lea.vmem [#allocation14], %s2654
          %2657 = dma.done %s2653, 16
        $region64: #{tpu_custom_call.1} parent=59 // pred_fallthru
          _
      $region60: #{tpu_custom_call.1} parent=5 // pred_fallthru
        _
    $region6: #{tpu_custom_call.1} parent=1 // loop_footer
      %s22 = sadd.s32 1, %s18
    $region7: #{tpu_custom_call.1} parent=1 // loop_footer_branch
      %17 = sbr.rel target = $region3
    $region8: #{tpu_custom_call.1} parent=1 // loop_exit
      _
    %2658 = vsyncpa [#allocation9], 1
    %s2659 = scalar_lea.sflag [#allocation9], 1
    %2660 = vsyncpa %s2659, 1
    %2661 = vsyncpa [#allocation12], 1
    %s2662 = scalar_lea.sflag [#allocation12], 1
    %2663 = vsyncpa %s2662, 1
    %2664 = vsyncpa [#allocation10], 1
    %s2665 = scalar_lea.sflag [#allocation10], 1
    %2666 = vsyncpa %s2665, 1

</llo_original>
